<compile_context>
chip_gen: v6e
topology: v6e:2x2x1
jax: 0.10.0
libtpu: 0.0.40
codegen_flags: <defaults>
</compile_context>

<pallas_src>
import functools

import jax
import jax.numpy as jnp
from jax.experimental import pallas as pl
from jax.experimental.pallas import tpu as pltpu

LN_EPS = 1e-5  # PyTorch nn.LayerNorm default


def _layer_norm(x, gamma, beta):
    # x: [..., d]; gamma/beta broadcastable to [..., d]; all f32.
    mean = jnp.mean(x, axis=-1, keepdims=True)
    var = jnp.mean((x - mean) ** 2, axis=-1, keepdims=True)
    inv = jax.lax.rsqrt(var + LN_EPS)
    return (x - mean) * inv * gamma + beta


# --------------------------- fused ISAB kernel ---------------------------
def _multihead_attention(Qp, Kp, Vp, *, num_heads, dim_V):
    """Qp: [TB, n_q, dim_V]; Kp, Vp: [TB, n_k, dim_V] -> [TB, n_q, dim_V] (f32).

    Includes the per-head residual (Q_ + A.bmm(V_)) from the PyTorch code.
    MXU operands are bf16 (f32 accumulation); softmax math is f32.
    """
    hd = dim_V // num_heads
    scale = 1.0 / (dim_V ** 0.5)  # PyTorch scales by sqrt(dim_V), not sqrt(head_dim)
    Qb = Qp.astype(jnp.bfloat16)
    Kb = Kp.astype(jnp.bfloat16)
    Vb = Vp.astype(jnp.bfloat16)
    outs = []
    for h in range(num_heads):
        sl = slice(h * hd, (h + 1) * hd)
        s = jnp.einsum("bqd,bkd->bqk", Qb[:, :, sl], Kb[:, :, sl],
                       preferred_element_type=jnp.float32) * scale
        s = s - jnp.max(s, axis=-1, keepdims=True)
        e = jnp.exp(s)
        a = e * pl.reciprocal(jnp.sum(e, axis=-1, keepdims=True), approx=True)
        pv = jnp.einsum("bqk,bkd->bqd", a.astype(jnp.bfloat16), Vb[:, :, sl],
                        preferred_element_type=jnp.float32)
        outs.append(Qp[:, :, sl] + pv)
    return jnp.concatenate(outs, axis=-1)  # [TB, n_q, dim_V]


def _mab_tail(H, wo_bf16, vec, *, layer_norm, activation):
    """LN0 -> fc_o (+act) residual -> LN1.  H: [rows, dim_V] f32.

    vec rows: 0=bo, 1=g0, 2=b0, 3=g1, 4=b1 (all [1, dim_V] f32).
    """
    bo, g0, b0, g1, b1 = vec[0:1], vec[1:2], vec[2:3], vec[3:4], vec[4:5]
    if layer_norm:
        H = _layer_norm(H, g0, b0)
    O = jnp.dot(H.astype(jnp.bfloat16), wo_bf16,
                preferred_element_type=jnp.float32) + bo
    if activation == "relu":
        O = jnp.maximum(O, 0.0)
    H = H + O
    if layer_norm:
        H = _layer_norm(H, g1, b1)
    return H


def isab_kernel(x_ref, qp0_ref, wx_ref, bx_ref, wo0_ref,
                wkv1_ref, bkv1_ref, wo1_ref, vec_ref,
                out_ref, *, num_heads, layer_norm, activation):
    """Fused ISAB for one block of TB batch elements: out = MAB1(X, MAB0(I, X))."""
    TB, N, dim_in = x_ref.shape
    n_ind, dim_V = qp0_ref.shape

    x2d = x_ref[...].reshape(TB * N, dim_in)          # [TB*N, dim_in] f32
    x2d_b = x2d.astype(jnp.bfloat16)

    vec = vec_ref[...]                                # [10, dim_V] f32
    vec0, vec1 = vec[0:5], vec[5:10]

    # ---- fused x-side projections: one MXU pass producing [K0 | V0 | Q1] ----
    xp = jnp.dot(x2d_b, wx_ref[...],
                 preferred_element_type=jnp.float32) + bx_ref[...]   # [TB*N, 3*dim_V]
    Kp0 = xp[:, :dim_V].reshape(TB, N, dim_V)
    Vp0 = xp[:, dim_V:2 * dim_V].reshape(TB, N, dim_V)
    Qp1 = xp[:, 2 * dim_V:].reshape(TB, N, dim_V)

    # ---- MAB0: Q = inducing points (projection hoisted to wrapper), K = X ----
    Qp0 = jnp.broadcast_to(qp0_ref[...], (TB, n_ind, dim_V))  # hoisted once per step
    H0 = _multihead_attention(Qp0, Kp0, Vp0, num_heads=num_heads, dim_V=dim_V)
    H0 = _mab_tail(H0.reshape(TB * n_ind, dim_V), wo0_ref[...], vec0,
                   layer_norm=layer_norm, activation=activation)     # [TB*n_ind, dim_V]

    # ---- MAB1: Q = X (already projected above), K = H0 (never leaves VMEM) ----
    KV1 = jnp.dot(H0.astype(jnp.bfloat16), wkv1_ref[...],
                  preferred_element_type=jnp.float32) + bkv1_ref[...]  # [TB*n_ind, 2*dim_V]
    Kp1 = KV1[:, :dim_V].reshape(TB, n_ind, dim_V)
    Vp1 = KV1[:, dim_V:].reshape(TB, n_ind, dim_V)

    H1 = _multihead_attention(Qp1, Kp1, Vp1, num_heads=num_heads, dim_V=dim_V)
    H1 = _mab_tail(H1.reshape(TB * N, dim_V), wo1_ref[...], vec1,
                   layer_norm=layer_norm, activation=activation)       # [TB*N, dim_V]

    out_ref[...] = H1.reshape(TB, N, dim_V)


# --------------------------- wrapper / packing ---------------------------
def _pack_params(params):
    """Pack ISAB params into the 8 kernel operands (besides X)."""
    m0, m1 = params["mab0"], params["mab1"]
    # Batch-invariant inducing-point projection, hoisted out of the kernel.
    qp0 = params["I"][0] @ m0["wq"] + m0["bq"]                      # [n_ind, dim_V] f32
    # Fused x-side weights: [Wk0 | Wv0 | Wq1] (all take dim_in-wide input).
    wx = jnp.concatenate([m0["wk"], m0["wv"], m1["wq"]], axis=1).astype(jnp.bfloat16)
    bx = jnp.concatenate([m0["bk"], m0["bv"], m1["bq"]], axis=1)    # [1, 3*dim_V] f32
    wkv1 = jnp.concatenate([m1["wk"], m1["wv"]], axis=1).astype(jnp.bfloat16)
    bkv1 = jnp.concatenate([m1["bk"], m1["bv"]], axis=1)            # [1, 2*dim_V] f32
    wo0 = m0["wo"].astype(jnp.bfloat16)
    wo1 = m1["wo"].astype(jnp.bfloat16)
    vec = jnp.concatenate([m0["bo"], m0["g0"], m0["b0"], m0["g1"], m0["b1"],
                           m1["bo"], m1["g0"], m1["b0"], m1["g1"], m1["b1"]],
                          axis=0)                                   # [10, dim_V] f32
    return qp0, wx, bx, wo0, wkv1, bkv1, wo1, vec


def _rep_spec(arr):
    zeros = (0,) * arr.ndim
    return pl.BlockSpec(arr.shape, lambda b, _z=zeros: _z)   # replicated, VMEM-resident


def _choose_block_b(B, N, target_rows=1024):
    """Largest block_b dividing B with block_b*N close to target_rows.

    grid=1 is acceptable (v5e/v6e are single-TC; the grid is a serial loop).
    On dual-TC v7x, pass block_b explicitly (e.g. B//2) for >=2 parallel steps.
    Note: for prime B this degrades toward block_b=1; pad B upstream if so.
    """
    bb = max(1, min(B, target_rows // max(N, 1)))
    while B % bb:
        bb -= 1
    return bb


def isab_forward(X, params, *, num_heads, layer_norm=True, activation="relu",
                 block_b=None):
    """Fused ISAB forward: single pallas_call over blocks of batch elements."""
    B, N, dim_in = X.shape
    _, n_ind, dim_V = params["I"].shape
    assert dim_V % num_heads == 0

    if block_b is None:
        block_b = _choose_block_b(B, N)
    assert B % block_b == 0

    qp0, wx, bx, wo0, wkv1, bkv1, wo1, vec = _pack_params(params)

    kernel = functools.partial(isab_kernel, num_heads=num_heads,
                               layer_norm=layer_norm, activation=activation)

    in_specs = [
        pl.BlockSpec((block_b, N, dim_in), lambda b: (b, 0, 0)),   # X
        _rep_spec(qp0), _rep_spec(wx), _rep_spec(bx), _rep_spec(wo0),
        _rep_spec(wkv1), _rep_spec(bkv1), _rep_spec(wo1), _rep_spec(vec),
    ]
    out_specs = pl.BlockSpec((block_b, N, dim_V), lambda b: (b, 0, 0))

    # Per-step live VMEM at these shapes is a few hundred KB -- far below the
    # default scoped limit on v5e/v6e/v7x, so vmem_limit_bytes is left default.
    return pl.pallas_call(
        kernel,
        out_shape=jax.ShapeDtypeStruct((B, N, dim_V), jnp.float32),
        grid=(B // block_b,),
        in_specs=in_specs,
        out_specs=out_specs,
        compiler_params=pltpu.CompilerParams(dimension_semantics=("parallel",)),
    )(X, qp0, wx, bx, wo0, wkv1, bkv1, wo1, vec)


# ---------------- deterministic parameter construction ----------------
def _linear_params(key, d_in, d_out):
    kw, kb = jax.random.split(key)
    bound = 1.0 / (d_in ** 0.5)  # matches PyTorch Linear default init range
    w = jax.random.uniform(kw, (d_in, d_out), jnp.float32, -bound, bound)
    b = jax.random.uniform(kb, (1, d_out), jnp.float32, -bound, bound)
    return w, b


def make_mab_params(key, dim_Q, dim_K, dim_V):
    ks = jax.random.split(key, 4)
    wq, bq = _linear_params(ks[0], dim_Q, dim_V)
    wk, bk = _linear_params(ks[1], dim_K, dim_V)
    wv, bv = _linear_params(ks[2], dim_K, dim_V)
    wo, bo = _linear_params(ks[3], dim_V, dim_V)
    ones = jnp.ones((1, dim_V), jnp.float32)
    zeros = jnp.zeros((1, dim_V), jnp.float32)
    return dict(wq=wq, bq=bq, wk=wk, bk=bk, wv=wv, bv=bv, wo=wo, bo=bo,
                g0=ones, b0=zeros, g1=ones, b1=zeros)


def make_isab_params(key, dim_in, dim_out, n_inducing_point):
    k_i, k0, k1 = jax.random.split(key, 3)
    # xavier_uniform_ on [1, n_ind, dim_out]
    limit = (6.0 / (n_inducing_point + dim_out)) ** 0.5
    I = jax.random.uniform(k_i, (1, n_inducing_point, dim_out),
                           jnp.float32, -limit, limit)
    return dict(I=I,
                mab0=make_mab_params(k0, dim_out, dim_in, dim_out),
                mab1=make_mab_params(k1, dim_in, dim_out, dim_out))


# ---------------- pure-JAX reference (mirrors the PyTorch forward) ----------------
def _mab_ref(Q, K, p, num_heads, layer_norm, activation):
    dim_V = p["wq"].shape[1]
    Qp = Q @ p["wq"] + p["bq"][0]
    Kp = K @ p["wk"] + p["bk"][0]
    Vp = K @ p["wv"] + p["bv"][0]
    Q_ = jnp.concatenate(jnp.split(Qp, num_heads, axis=2), axis=0)
    K_ = jnp.concatenate(jnp.split(Kp, num_heads, axis=2), axis=0)
    V_ = jnp.concatenate(jnp.split(Vp, num_heads, axis=2), axis=0)
    A = jax.nn.softmax(jnp.einsum("bqd,bkd->bqk", Q_, K_) / dim_V ** 0.5, axis=2)
    H = jnp.concatenate(jnp.split(Q_ + jnp.einsum("bqk,bkd->bqd", A, V_),
                                  num_heads, axis=0), axis=2)
    if layer_norm:
        H = _layer_norm(H, p["g0"][0], p["b0"][0])
    O = H @ p["wo"] + p["bo"][0]
    if activation == "relu":
        O = jnp.maximum(O, 0.0)
    H = H + O
    if layer_norm:
        H = _layer_norm(H, p["g1"][0], p["b1"][0])
    return H


def isab_ref(X, params, num_heads, layer_norm=True, activation="relu"):
    B = X.shape[0]
    I_rep = jnp.broadcast_to(params["I"], (B,) + params["I"].shape[1:])
    H = _mab_ref(I_rep, X, params["mab0"], num_heads, layer_norm, activation)
    return _mab_ref(X, H, params["mab1"], num_heads, layer_norm, activation)


if __name__ == "__main__":
    # Small, deterministic example.
    B, N = 4, 16
    dim_in, dim_out = 16, 32
    num_heads, n_inducing_point = 4, 8

    key = jax.random.PRNGKey(0)
    k_x, k_p = jax.random.split(key)
    X = jax.random.normal(k_x, (B, N, dim_in), jnp.float32)
    params = make_isab_params(k_p, dim_in, dim_out, n_inducing_point)

    ref = isab_ref(X, params, num_heads, layer_norm=True, activation="relu")

    # Run 1: default block heuristic (whole batch per step -> grid=1).
    fwd = jax.jit(functools.partial(isab_forward, num_heads=num_heads,
                                    layer_norm=True, activation="relu"))
    out = jax.block_until_ready(fwd(X, params))
    assert out.shape == (B, N, dim_out)
    # Tolerance covers bf16 MXU operands + EUP approx reciprocal (vs f32 ref).
    assert jnp.allclose(out, ref, atol=5e-2, rtol=5e-2), \
        f"max abs err {float(jnp.max(jnp.abs(out - ref)))}"

    # Run 2: explicit block_b=2 (grid=2) to exercise the blocked index maps
    # (and the >=2-step configuration one would use on dual-TC v7x).
    fwd2 = jax.jit(functools.partial(isab_forward, num_heads=num_heads,
                                     layer_norm=True, activation="relu",
                                     block_b=2))
    out2 = jax.block_until_ready(fwd2(X, params))
    assert jnp.allclose(out2, ref, atol=5e-2, rtol=5e-2), \
        f"max abs err {float(jnp.max(jnp.abs(out2 - ref)))}"

    print("KERNEL_OK")
</pallas_src>

<mosaic_0001>
module attributes {stable_mosaic.version = 11 : i64} {
  func.func @isab_kernel(%arg0: i32, %arg1: memref<4x16x16xf32, #tpu.memory_space<vmem>>, %arg2: memref<8x32xf32, #tpu.memory_space<vmem>>, %arg3: memref<16x96xbf16, #tpu.memory_space<vmem>>, %arg4: memref<1x96xf32, #tpu.memory_space<vmem>>, %arg5: memref<32x32xbf16, #tpu.memory_space<vmem>>, %arg6: memref<32x64xbf16, #tpu.memory_space<vmem>>, %arg7: memref<1x64xf32, #tpu.memory_space<vmem>>, %arg8: memref<32x32xbf16, #tpu.memory_space<vmem>>, %arg9: memref<10x32xf32, #tpu.memory_space<vmem>>, %arg10: memref<4x16x32xf32, #tpu.memory_space<vmem>>) attributes {dimension_semantics = [#tpu.dimension_semantics<parallel>], iteration_bounds = array<i64: 1>, scalar_prefetch = 0 : i64, scratch_operands = 0 : i64, tpu.core_type = #tpu.core_type<tc>, window_params = [{transform_indices = @transform_0, window_bounds = array<i64: 4, 16, 16>}, {pipeline_mode = #tpu.pipeline_mode<synchronous>, transform_indices = @transform_1, window_bounds = array<i64: 8, 32>}, {pipeline_mode = #tpu.pipeline_mode<synchronous>, transform_indices = @transform_2, window_bounds = array<i64: 16, 96>}, {pipeline_mode = #tpu.pipeline_mode<synchronous>, transform_indices = @transform_3, window_bounds = array<i64: 1, 96>}, {pipeline_mode = #tpu.pipeline_mode<synchronous>, transform_indices = @transform_4, window_bounds = array<i64: 32, 32>}, {pipeline_mode = #tpu.pipeline_mode<synchronous>, transform_indices = @transform_5, window_bounds = array<i64: 32, 64>}, {pipeline_mode = #tpu.pipeline_mode<synchronous>, transform_indices = @transform_6, window_bounds = array<i64: 1, 64>}, {pipeline_mode = #tpu.pipeline_mode<synchronous>, transform_indices = @transform_7, window_bounds = array<i64: 32, 32>}, {pipeline_mode = #tpu.pipeline_mode<synchronous>, transform_indices = @transform_8, window_bounds = array<i64: 10, 32>}, {transform_indices = @transform_9, window_bounds = array<i64: 4, 16, 32>}]} {
    %c0 = arith.constant 0 : index
    %c0_0 = arith.constant 0 : index
    %c0_1 = arith.constant 0 : index
    %0 = vector.load %arg1[%c0, %c0_0, %c0_1] : memref<4x16x16xf32, #tpu.memory_space<vmem>>, vector<4x16x16xf32>
    %1 = vector.shape_cast %0 : vector<4x16x16xf32> to vector<64x16xf32>
    %2 = arith.truncf %1 : vector<64x16xf32> to vector<64x16xbf16>
    %c0_2 = arith.constant 0 : index
    %c0_3 = arith.constant 0 : index
    %3 = vector.load %arg9[%c0_2, %c0_3] : memref<10x32xf32, #tpu.memory_space<vmem>>, vector<10x32xf32>
    %4 = vector.extract_strided_slice %3 {offsets = [0, 0], sizes = [5, 32], strides = [1, 1]} : vector<10x32xf32> to vector<5x32xf32>
    %5 = vector.extract_strided_slice %3 {offsets = [5, 0], sizes = [5, 32], strides = [1, 1]} : vector<10x32xf32> to vector<5x32xf32>
    %c0_4 = arith.constant 0 : index
    %c0_5 = arith.constant 0 : index
    %6 = vector.load %arg3[%c0_4, %c0_5] : memref<16x96xbf16, #tpu.memory_space<vmem>>, vector<16x96xbf16>
    %cst = arith.constant dense<0.000000e+00> : vector<64x96xf32>
    %7 = tpu.matmul %2, %6, %cst {dimension_numbers = #tpu.dot_dimension_numbers<[1], [0], [0], [1], [0, 0, 1, 1], [], []>} : vector<64x16xbf16>, vector<16x96xbf16>, vector<64x96xf32> -> vector<64x96xf32>
    %c0_6 = arith.constant 0 : index
    %c0_7 = arith.constant 0 : index
    %8 = vector.load %arg4[%c0_6, %c0_7] : memref<1x96xf32, #tpu.memory_space<vmem>>, vector<1x96xf32>
    %9 = vector.broadcast %8 : vector<1x96xf32> to vector<64x96xf32>
    %10 = arith.addf %7, %9 : vector<64x96xf32>
    %11 = vector.extract_strided_slice %10 {offsets = [0, 0], sizes = [64, 32], strides = [1, 1]} : vector<64x96xf32> to vector<64x32xf32>
    %12 = vector.shape_cast %11 : vector<64x32xf32> to vector<4x16x32xf32>
    %13 = vector.extract_strided_slice %10 {offsets = [0, 32], sizes = [64, 32], strides = [1, 1]} : vector<64x96xf32> to vector<64x32xf32>
    %14 = vector.shape_cast %13 : vector<64x32xf32> to vector<4x16x32xf32>
    %15 = vector.extract_strided_slice %10 {offsets = [0, 64], sizes = [64, 32], strides = [1, 1]} : vector<64x96xf32> to vector<64x32xf32>
    %16 = vector.shape_cast %15 : vector<64x32xf32> to vector<4x16x32xf32>
    %c0_8 = arith.constant 0 : index
    %c0_9 = arith.constant 0 : index
    %17 = vector.load %arg2[%c0_8, %c0_9] : memref<8x32xf32, #tpu.memory_space<vmem>>, vector<8x32xf32>
    %18 = vector.shape_cast %17 : vector<8x32xf32> to vector<1x8x32xf32>
    %19 = vector.broadcast %18 : vector<1x8x32xf32> to vector<4x8x32xf32>
    %20 = arith.truncf %19 : vector<4x8x32xf32> to vector<4x8x32xbf16>
    %21 = arith.truncf %12 : vector<4x16x32xf32> to vector<4x16x32xbf16>
    %22 = arith.truncf %14 : vector<4x16x32xf32> to vector<4x16x32xbf16>
    %23 = vector.extract_strided_slice %20 {offsets = [0, 0, 0], sizes = [4, 8, 8], strides = [1, 1, 1]} : vector<4x8x32xbf16> to vector<4x8x8xbf16>
    %24 = vector.extract_strided_slice %21 {offsets = [0, 0, 0], sizes = [4, 16, 8], strides = [1, 1, 1]} : vector<4x16x32xbf16> to vector<4x16x8xbf16>
    "tpu.trace_start"() <{level = 10 : i32, message = "bqd,bkd->bqk"}> : () -> ()
    %cst_10 = arith.constant dense<0.000000e+00> : vector<4x8x16xf32>
    %25 = tpu.matmul %23, %24, %cst_10 {dimension_numbers = #tpu.dot_dimension_numbers<[2], [2], [1], [1], [0, 0, 0, 1, 1, 1], [0], [0]>} : vector<4x8x8xbf16>, vector<4x16x8xbf16>, vector<4x8x16xf32> -> vector<4x8x16xf32>
    "tpu.trace_stop"() : () -> ()
    %cst_11 = arith.constant 0.176776692 : f32
    %26 = vector.broadcast %cst_11 : f32 to vector<4x8x16xf32>
    %27 = arith.mulf %25, %26 : vector<4x8x16xf32>
    %cst_12 = arith.constant dense<0xFF800000> : vector<4x8xf32>
    %28 = vector.multi_reduction <maximumf>, %27, %cst_12 [2] : vector<4x8x16xf32> to vector<4x8xf32>
    %29 = vector.shape_cast %28 : vector<4x8xf32> to vector<4x8x1xf32>
    %30 = vector.broadcast %29 : vector<4x8x1xf32> to vector<4x8x16xf32>
    %31 = arith.subf %27, %30 : vector<4x8x16xf32>
    %32 = math.exp %31 : vector<4x8x16xf32>
    %cst_13 = arith.constant dense<0.000000e+00> : vector<4x8xf32>
    %33 = vector.multi_reduction <add>, %32, %cst_13 [2] : vector<4x8x16xf32> to vector<4x8xf32>
    %34 = vector.shape_cast %33 : vector<4x8xf32> to vector<4x8x1xf32>
    %35 = tpu.reciprocal %34 {approx = true} : vector<4x8x1xf32> -> vector<4x8x1xf32>
    %36 = vector.broadcast %35 : vector<4x8x1xf32> to vector<4x8x16xf32>
    %37 = arith.mulf %32, %36 : vector<4x8x16xf32>
    %38 = arith.truncf %37 : vector<4x8x16xf32> to vector<4x8x16xbf16>
    %39 = vector.extract_strided_slice %22 {offsets = [0, 0, 0], sizes = [4, 16, 8], strides = [1, 1, 1]} : vector<4x16x32xbf16> to vector<4x16x8xbf16>
    "tpu.trace_start"() <{level = 10 : i32, message = "bqk,bkd->bqd"}> : () -> ()
    %cst_14 = arith.constant dense<0.000000e+00> : vector<4x8x8xf32>
    %40 = tpu.matmul %38, %39, %cst_14 {dimension_numbers = #tpu.dot_dimension_numbers<[2], [1], [1], [2], [0, 0, 0, 1, 1, 2], [0], [0]>} : vector<4x8x16xbf16>, vector<4x16x8xbf16>, vector<4x8x8xf32> -> vector<4x8x8xf32>
    "tpu.trace_stop"() : () -> ()
    %41 = vector.extract_strided_slice %19 {offsets = [0, 0, 0], sizes = [4, 8, 8], strides = [1, 1, 1]} : vector<4x8x32xf32> to vector<4x8x8xf32>
    %42 = arith.addf %41, %40 : vector<4x8x8xf32>
    %43 = vector.extract_strided_slice %20 {offsets = [0, 0, 8], sizes = [4, 8, 8], strides = [1, 1, 1]} : vector<4x8x32xbf16> to vector<4x8x8xbf16>
    %44 = vector.extract_strided_slice %21 {offsets = [0, 0, 8], sizes = [4, 16, 8], strides = [1, 1, 1]} : vector<4x16x32xbf16> to vector<4x16x8xbf16>
    "tpu.trace_start"() <{level = 10 : i32, message = "bqd,bkd->bqk"}> : () -> ()
    %cst_15 = arith.constant dense<0.000000e+00> : vector<4x8x16xf32>
    %45 = tpu.matmul %43, %44, %cst_15 {dimension_numbers = #tpu.dot_dimension_numbers<[2], [2], [1], [1], [0, 0, 0, 1, 1, 1], [0], [0]>} : vector<4x8x8xbf16>, vector<4x16x8xbf16>, vector<4x8x16xf32> -> vector<4x8x16xf32>
    "tpu.trace_stop"() : () -> ()
    %cst_16 = arith.constant 0.176776692 : f32
    %46 = vector.broadcast %cst_16 : f32 to vector<4x8x16xf32>
    %47 = arith.mulf %45, %46 : vector<4x8x16xf32>
    %cst_17 = arith.constant dense<0xFF800000> : vector<4x8xf32>
    %48 = vector.multi_reduction <maximumf>, %47, %cst_17 [2] : vector<4x8x16xf32> to vector<4x8xf32>
    %49 = vector.shape_cast %48 : vector<4x8xf32> to vector<4x8x1xf32>
    %50 = vector.broadcast %49 : vector<4x8x1xf32> to vector<4x8x16xf32>
    %51 = arith.subf %47, %50 : vector<4x8x16xf32>
    %52 = math.exp %51 : vector<4x8x16xf32>
    %cst_18 = arith.constant dense<0.000000e+00> : vector<4x8xf32>
    %53 = vector.multi_reduction <add>, %52, %cst_18 [2] : vector<4x8x16xf32> to vector<4x8xf32>
    %54 = vector.shape_cast %53 : vector<4x8xf32> to vector<4x8x1xf32>
    %55 = tpu.reciprocal %54 {approx = true} : vector<4x8x1xf32> -> vector<4x8x1xf32>
    %56 = vector.broadcast %55 : vector<4x8x1xf32> to vector<4x8x16xf32>
    %57 = arith.mulf %52, %56 : vector<4x8x16xf32>
    %58 = arith.truncf %57 : vector<4x8x16xf32> to vector<4x8x16xbf16>
    %59 = vector.extract_strided_slice %22 {offsets = [0, 0, 8], sizes = [4, 16, 8], strides = [1, 1, 1]} : vector<4x16x32xbf16> to vector<4x16x8xbf16>
    "tpu.trace_start"() <{level = 10 : i32, message = "bqk,bkd->bqd"}> : () -> ()
    %cst_19 = arith.constant dense<0.000000e+00> : vector<4x8x8xf32>
    %60 = tpu.matmul %58, %59, %cst_19 {dimension_numbers = #tpu.dot_dimension_numbers<[2], [1], [1], [2], [0, 0, 0, 1, 1, 2], [0], [0]>} : vector<4x8x16xbf16>, vector<4x16x8xbf16>, vector<4x8x8xf32> -> vector<4x8x8xf32>
    "tpu.trace_stop"() : () -> ()
    %61 = vector.extract_strided_slice %19 {offsets = [0, 0, 8], sizes = [4, 8, 8], strides = [1, 1, 1]} : vector<4x8x32xf32> to vector<4x8x8xf32>
    %62 = arith.addf %61, %60 : vector<4x8x8xf32>
    %63 = vector.extract_strided_slice %20 {offsets = [0, 0, 16], sizes = [4, 8, 8], strides = [1, 1, 1]} : vector<4x8x32xbf16> to vector<4x8x8xbf16>
    %64 = vector.extract_strided_slice %21 {offsets = [0, 0, 16], sizes = [4, 16, 8], strides = [1, 1, 1]} : vector<4x16x32xbf16> to vector<4x16x8xbf16>
    "tpu.trace_start"() <{level = 10 : i32, message = "bqd,bkd->bqk"}> : () -> ()
    %cst_20 = arith.constant dense<0.000000e+00> : vector<4x8x16xf32>
    %65 = tpu.matmul %63, %64, %cst_20 {dimension_numbers = #tpu.dot_dimension_numbers<[2], [2], [1], [1], [0, 0, 0, 1, 1, 1], [0], [0]>} : vector<4x8x8xbf16>, vector<4x16x8xbf16>, vector<4x8x16xf32> -> vector<4x8x16xf32>
    "tpu.trace_stop"() : () -> ()
    %cst_21 = arith.constant 0.176776692 : f32
    %66 = vector.broadcast %cst_21 : f32 to vector<4x8x16xf32>
    %67 = arith.mulf %65, %66 : vector<4x8x16xf32>
    %cst_22 = arith.constant dense<0xFF800000> : vector<4x8xf32>
    %68 = vector.multi_reduction <maximumf>, %67, %cst_22 [2] : vector<4x8x16xf32> to vector<4x8xf32>
    %69 = vector.shape_cast %68 : vector<4x8xf32> to vector<4x8x1xf32>
    %70 = vector.broadcast %69 : vector<4x8x1xf32> to vector<4x8x16xf32>
    %71 = arith.subf %67, %70 : vector<4x8x16xf32>
    %72 = math.exp %71 : vector<4x8x16xf32>
    %cst_23 = arith.constant dense<0.000000e+00> : vector<4x8xf32>
    %73 = vector.multi_reduction <add>, %72, %cst_23 [2] : vector<4x8x16xf32> to vector<4x8xf32>
    %74 = vector.shape_cast %73 : vector<4x8xf32> to vector<4x8x1xf32>
    %75 = tpu.reciprocal %74 {approx = true} : vector<4x8x1xf32> -> vector<4x8x1xf32>
    %76 = vector.broadcast %75 : vector<4x8x1xf32> to vector<4x8x16xf32>
    %77 = arith.mulf %72, %76 : vector<4x8x16xf32>
    %78 = arith.truncf %77 : vector<4x8x16xf32> to vector<4x8x16xbf16>
    %79 = vector.extract_strided_slice %22 {offsets = [0, 0, 16], sizes = [4, 16, 8], strides = [1, 1, 1]} : vector<4x16x32xbf16> to vector<4x16x8xbf16>
    "tpu.trace_start"() <{level = 10 : i32, message = "bqk,bkd->bqd"}> : () -> ()
    %cst_24 = arith.constant dense<0.000000e+00> : vector<4x8x8xf32>
    %80 = tpu.matmul %78, %79, %cst_24 {dimension_numbers = #tpu.dot_dimension_numbers<[2], [1], [1], [2], [0, 0, 0, 1, 1, 2], [0], [0]>} : vector<4x8x16xbf16>, vector<4x16x8xbf16>, vector<4x8x8xf32> -> vector<4x8x8xf32>
    "tpu.trace_stop"() : () -> ()
    %81 = vector.extract_strided_slice %19 {offsets = [0, 0, 16], sizes = [4, 8, 8], strides = [1, 1, 1]} : vector<4x8x32xf32> to vector<4x8x8xf32>
    %82 = arith.addf %81, %80 : vector<4x8x8xf32>
    %83 = vector.extract_strided_slice %20 {offsets = [0, 0, 24], sizes = [4, 8, 8], strides = [1, 1, 1]} : vector<4x8x32xbf16> to vector<4x8x8xbf16>
    %84 = vector.extract_strided_slice %21 {offsets = [0, 0, 24], sizes = [4, 16, 8], strides = [1, 1, 1]} : vector<4x16x32xbf16> to vector<4x16x8xbf16>
    "tpu.trace_start"() <{level = 10 : i32, message = "bqd,bkd->bqk"}> : () -> ()
    %cst_25 = arith.constant dense<0.000000e+00> : vector<4x8x16xf32>
    %85 = tpu.matmul %83, %84, %cst_25 {dimension_numbers = #tpu.dot_dimension_numbers<[2], [2], [1], [1], [0, 0, 0, 1, 1, 1], [0], [0]>} : vector<4x8x8xbf16>, vector<4x16x8xbf16>, vector<4x8x16xf32> -> vector<4x8x16xf32>
    "tpu.trace_stop"() : () -> ()
    %cst_26 = arith.constant 0.176776692 : f32
    %86 = vector.broadcast %cst_26 : f32 to vector<4x8x16xf32>
    %87 = arith.mulf %85, %86 : vector<4x8x16xf32>
    %cst_27 = arith.constant dense<0xFF800000> : vector<4x8xf32>
    %88 = vector.multi_reduction <maximumf>, %87, %cst_27 [2] : vector<4x8x16xf32> to vector<4x8xf32>
    %89 = vector.shape_cast %88 : vector<4x8xf32> to vector<4x8x1xf32>
    %90 = vector.broadcast %89 : vector<4x8x1xf32> to vector<4x8x16xf32>
    %91 = arith.subf %87, %90 : vector<4x8x16xf32>
    %92 = math.exp %91 : vector<4x8x16xf32>
    %cst_28 = arith.constant dense<0.000000e+00> : vector<4x8xf32>
    %93 = vector.multi_reduction <add>, %92, %cst_28 [2] : vector<4x8x16xf32> to vector<4x8xf32>
    %94 = vector.shape_cast %93 : vector<4x8xf32> to vector<4x8x1xf32>
    %95 = tpu.reciprocal %94 {approx = true} : vector<4x8x1xf32> -> vector<4x8x1xf32>
    %96 = vector.broadcast %95 : vector<4x8x1xf32> to vector<4x8x16xf32>
    %97 = arith.mulf %92, %96 : vector<4x8x16xf32>
    %98 = arith.truncf %97 : vector<4x8x16xf32> to vector<4x8x16xbf16>
    %99 = vector.extract_strided_slice %22 {offsets = [0, 0, 24], sizes = [4, 16, 8], strides = [1, 1, 1]} : vector<4x16x32xbf16> to vector<4x16x8xbf16>
    "tpu.trace_start"() <{level = 10 : i32, message = "bqk,bkd->bqd"}> : () -> ()
    %cst_29 = arith.constant dense<0.000000e+00> : vector<4x8x8xf32>
    %100 = tpu.matmul %98, %99, %cst_29 {dimension_numbers = #tpu.dot_dimension_numbers<[2], [1], [1], [2], [0, 0, 0, 1, 1, 2], [0], [0]>} : vector<4x8x16xbf16>, vector<4x16x8xbf16>, vector<4x8x8xf32> -> vector<4x8x8xf32>
    "tpu.trace_stop"() : () -> ()
    %101 = vector.extract_strided_slice %19 {offsets = [0, 0, 24], sizes = [4, 8, 8], strides = [1, 1, 1]} : vector<4x8x32xf32> to vector<4x8x8xf32>
    %102 = arith.addf %101, %100 : vector<4x8x8xf32>
    %103 = tpu.concatenate %42, %62, %82, %102 in 2 : vector<4x8x8xf32>, vector<4x8x8xf32>, vector<4x8x8xf32>, vector<4x8x8xf32> -> vector<4x8x32xf32>
    %104 = vector.shape_cast %103 : vector<4x8x32xf32> to vector<32x32xf32>
    %c0_30 = arith.constant 0 : index
    %c0_31 = arith.constant 0 : index
    %105 = vector.load %arg5[%c0_30, %c0_31] : memref<32x32xbf16, #tpu.memory_space<vmem>>, vector<32x32xbf16>
    %106 = vector.extract_strided_slice %4 {offsets = [0, 0], sizes = [1, 32], strides = [1, 1]} : vector<5x32xf32> to vector<1x32xf32>
    %107 = vector.extract_strided_slice %4 {offsets = [1, 0], sizes = [1, 32], strides = [1, 1]} : vector<5x32xf32> to vector<1x32xf32>
    %108 = vector.extract_strided_slice %4 {offsets = [2, 0], sizes = [1, 32], strides = [1, 1]} : vector<5x32xf32> to vector<1x32xf32>
    %109 = vector.extract_strided_slice %4 {offsets = [3, 0], sizes = [1, 32], strides = [1, 1]} : vector<5x32xf32> to vector<1x32xf32>
    %110 = vector.extract_strided_slice %4 {offsets = [4, 0], sizes = [1, 32], strides = [1, 1]} : vector<5x32xf32> to vector<1x32xf32>
    %cst_32 = arith.constant dense<0.000000e+00> : vector<32xf32>
    %111 = vector.multi_reduction <add>, %104, %cst_32 [1] : vector<32x32xf32> to vector<32xf32>
    %112 = vector.shape_cast %111 : vector<32xf32> to vector<32x1xf32>
    %cst_33 = arith.constant 3.200000e+01 : f32
    %113 = vector.broadcast %cst_33 : f32 to vector<32x1xf32>
    %114 = arith.divf %112, %113 : vector<32x1xf32>
    %115 = vector.broadcast %114 : vector<32x1xf32> to vector<32x32xf32>
    %116 = arith.subf %104, %115 : vector<32x32xf32>
    %117 = arith.mulf %116, %116 : vector<32x32xf32>
    %cst_34 = arith.constant dense<0.000000e+00> : vector<32xf32>
    %118 = vector.multi_reduction <add>, %117, %cst_34 [1] : vector<32x32xf32> to vector<32xf32>
    %119 = vector.shape_cast %118 : vector<32xf32> to vector<32x1xf32>
    %cst_35 = arith.constant 3.200000e+01 : f32
    %120 = vector.broadcast %cst_35 : f32 to vector<32x1xf32>
    %121 = arith.divf %119, %120 : vector<32x1xf32>
    %cst_36 = arith.constant 9.99999974E-6 : f32
    %122 = vector.broadcast %cst_36 : f32 to vector<32x1xf32>
    %123 = arith.addf %121, %122 : vector<32x1xf32>
    %124 = math.rsqrt %123 : vector<32x1xf32>
    %125 = vector.broadcast %114 : vector<32x1xf32> to vector<32x32xf32>
    %126 = arith.subf %104, %125 : vector<32x32xf32>
    %127 = vector.broadcast %124 : vector<32x1xf32> to vector<32x32xf32>
    %128 = arith.mulf %126, %127 : vector<32x32xf32>
    %129 = vector.broadcast %107 : vector<1x32xf32> to vector<32x32xf32>
    %130 = arith.mulf %128, %129 : vector<32x32xf32>
    %131 = vector.broadcast %108 : vector<1x32xf32> to vector<32x32xf32>
    %132 = arith.addf %130, %131 : vector<32x32xf32>
    %133 = arith.truncf %132 : vector<32x32xf32> to vector<32x32xbf16>
    %cst_37 = arith.constant dense<0.000000e+00> : vector<32x32xf32>
    %134 = tpu.matmul %133, %105, %cst_37 {dimension_numbers = #tpu.dot_dimension_numbers<[1], [0], [0], [1], [0, 0, 1, 1], [], []>} : vector<32x32xbf16>, vector<32x32xbf16>, vector<32x32xf32> -> vector<32x32xf32>
    %135 = vector.broadcast %106 : vector<1x32xf32> to vector<32x32xf32>
    %136 = arith.addf %134, %135 : vector<32x32xf32>
    %cst_38 = arith.constant 0.000000e+00 : f32
    %137 = vector.broadcast %cst_38 : f32 to vector<32x32xf32>
    %138 = arith.maximumf %136, %137 : vector<32x32xf32>
    %139 = arith.addf %132, %138 : vector<32x32xf32>
    %cst_39 = arith.constant dense<0.000000e+00> : vector<32xf32>
    %140 = vector.multi_reduction <add>, %139, %cst_39 [1] : vector<32x32xf32> to vector<32xf32>
    %141 = vector.shape_cast %140 : vector<32xf32> to vector<32x1xf32>
    %cst_40 = arith.constant 3.200000e+01 : f32
    %142 = vector.broadcast %cst_40 : f32 to vector<32x1xf32>
    %143 = arith.divf %141, %142 : vector<32x1xf32>
    %144 = vector.broadcast %143 : vector<32x1xf32> to vector<32x32xf32>
    %145 = arith.subf %139, %144 : vector<32x32xf32>
    %146 = arith.mulf %145, %145 : vector<32x32xf32>
    %cst_41 = arith.constant dense<0.000000e+00> : vector<32xf32>
    %147 = vector.multi_reduction <add>, %146, %cst_41 [1] : vector<32x32xf32> to vector<32xf32>
    %148 = vector.shape_cast %147 : vector<32xf32> to vector<32x1xf32>
    %cst_42 = arith.constant 3.200000e+01 : f32
    %149 = vector.broadcast %cst_42 : f32 to vector<32x1xf32>
    %150 = arith.divf %148, %149 : vector<32x1xf32>
    %cst_43 = arith.constant 9.99999974E-6 : f32
    %151 = vector.broadcast %cst_43 : f32 to vector<32x1xf32>
    %152 = arith.addf %150, %151 : vector<32x1xf32>
    %153 = math.rsqrt %152 : vector<32x1xf32>
    %154 = vector.broadcast %143 : vector<32x1xf32> to vector<32x32xf32>
    %155 = arith.subf %139, %154 : vector<32x32xf32>
    %156 = vector.broadcast %153 : vector<32x1xf32> to vector<32x32xf32>
    %157 = arith.mulf %155, %156 : vector<32x32xf32>
    %158 = vector.broadcast %109 : vector<1x32xf32> to vector<32x32xf32>
    %159 = arith.mulf %157, %158 : vector<32x32xf32>
    %160 = vector.broadcast %110 : vector<1x32xf32> to vector<32x32xf32>
    %161 = arith.addf %159, %160 : vector<32x32xf32>
    %162 = arith.truncf %161 : vector<32x32xf32> to vector<32x32xbf16>
    %c0_44 = arith.constant 0 : index
    %c0_45 = arith.constant 0 : index
    %163 = vector.load %arg6[%c0_44, %c0_45] : memref<32x64xbf16, #tpu.memory_space<vmem>>, vector<32x64xbf16>
    %cst_46 = arith.constant dense<0.000000e+00> : vector<32x64xf32>
    %164 = tpu.matmul %162, %163, %cst_46 {dimension_numbers = #tpu.dot_dimension_numbers<[1], [0], [0], [1], [0, 0, 1, 1], [], []>} : vector<32x32xbf16>, vector<32x64xbf16>, vector<32x64xf32> -> vector<32x64xf32>
    %c0_47 = arith.constant 0 : index
    %c0_48 = arith.constant 0 : index
    %165 = vector.load %arg7[%c0_47, %c0_48] : memref<1x64xf32, #tpu.memory_space<vmem>>, vector<1x64xf32>
    %166 = vector.broadcast %165 : vector<1x64xf32> to vector<32x64xf32>
    %167 = arith.addf %164, %166 : vector<32x64xf32>
    %168 = vector.extract_strided_slice %167 {offsets = [0, 0], sizes = [32, 32], strides = [1, 1]} : vector<32x64xf32> to vector<32x32xf32>
    %169 = vector.shape_cast %168 : vector<32x32xf32> to vector<4x8x32xf32>
    %170 = vector.extract_strided_slice %167 {offsets = [0, 32], sizes = [32, 32], strides = [1, 1]} : vector<32x64xf32> to vector<32x32xf32>
    %171 = vector.shape_cast %170 : vector<32x32xf32> to vector<4x8x32xf32>
    %172 = arith.truncf %16 : vector<4x16x32xf32> to vector<4x16x32xbf16>
    %173 = arith.truncf %169 : vector<4x8x32xf32> to vector<4x8x32xbf16>
    %174 = arith.truncf %171 : vector<4x8x32xf32> to vector<4x8x32xbf16>
    %175 = vector.extract_strided_slice %172 {offsets = [0, 0, 0], sizes = [4, 16, 8], strides = [1, 1, 1]} : vector<4x16x32xbf16> to vector<4x16x8xbf16>
    %176 = vector.extract_strided_slice %173 {offsets = [0, 0, 0], sizes = [4, 8, 8], strides = [1, 1, 1]} : vector<4x8x32xbf16> to vector<4x8x8xbf16>
    "tpu.trace_start"() <{level = 10 : i32, message = "bqd,bkd->bqk"}> : () -> ()
    %cst_49 = arith.constant dense<0.000000e+00> : vector<4x16x8xf32>
    %177 = tpu.matmul %175, %176, %cst_49 {dimension_numbers = #tpu.dot_dimension_numbers<[2], [2], [1], [1], [0, 0, 0, 1, 1, 1], [0], [0]>} : vector<4x16x8xbf16>, vector<4x8x8xbf16>, vector<4x16x8xf32> -> vector<4x16x8xf32>
    "tpu.trace_stop"() : () -> ()
    %cst_50 = arith.constant 0.176776692 : f32
    %178 = vector.broadcast %cst_50 : f32 to vector<4x16x8xf32>
    %179 = arith.mulf %177, %178 : vector<4x16x8xf32>
    %cst_51 = arith.constant dense<0xFF800000> : vector<4x16xf32>
    %180 = vector.multi_reduction <maximumf>, %179, %cst_51 [2] : vector<4x16x8xf32> to vector<4x16xf32>
    %181 = vector.shape_cast %180 : vector<4x16xf32> to vector<4x16x1xf32>
    %182 = vector.broadcast %181 : vector<4x16x1xf32> to vector<4x16x8xf32>
    %183 = arith.subf %179, %182 : vector<4x16x8xf32>
    %184 = math.exp %183 : vector<4x16x8xf32>
    %cst_52 = arith.constant dense<0.000000e+00> : vector<4x16xf32>
    %185 = vector.multi_reduction <add>, %184, %cst_52 [2] : vector<4x16x8xf32> to vector<4x16xf32>
    %186 = vector.shape_cast %185 : vector<4x16xf32> to vector<4x16x1xf32>
    %187 = tpu.reciprocal %186 {approx = true} : vector<4x16x1xf32> -> vector<4x16x1xf32>
    %188 = vector.broadcast %187 : vector<4x16x1xf32> to vector<4x16x8xf32>
    %189 = arith.mulf %184, %188 : vector<4x16x8xf32>
    %190 = arith.truncf %189 : vector<4x16x8xf32> to vector<4x16x8xbf16>
    %191 = vector.extract_strided_slice %174 {offsets = [0, 0, 0], sizes = [4, 8, 8], strides = [1, 1, 1]} : vector<4x8x32xbf16> to vector<4x8x8xbf16>
    "tpu.trace_start"() <{level = 10 : i32, message = "bqk,bkd->bqd"}> : () -> ()
    %cst_53 = arith.constant dense<0.000000e+00> : vector<4x16x8xf32>
    %192 = tpu.matmul %190, %191, %cst_53 {dimension_numbers = #tpu.dot_dimension_numbers<[2], [1], [1], [2], [0, 0, 0, 1, 1, 2], [0], [0]>} : vector<4x16x8xbf16>, vector<4x8x8xbf16>, vector<4x16x8xf32> -> vector<4x16x8xf32>
    "tpu.trace_stop"() : () -> ()
    %193 = vector.extract_strided_slice %16 {offsets = [0, 0, 0], sizes = [4, 16, 8], strides = [1, 1, 1]} : vector<4x16x32xf32> to vector<4x16x8xf32>
    %194 = arith.addf %193, %192 : vector<4x16x8xf32>
    %195 = vector.extract_strided_slice %172 {offsets = [0, 0, 8], sizes = [4, 16, 8], strides = [1, 1, 1]} : vector<4x16x32xbf16> to vector<4x16x8xbf16>
    %196 = vector.extract_strided_slice %173 {offsets = [0, 0, 8], sizes = [4, 8, 8], strides = [1, 1, 1]} : vector<4x8x32xbf16> to vector<4x8x8xbf16>
    "tpu.trace_start"() <{level = 10 : i32, message = "bqd,bkd->bqk"}> : () -> ()
    %cst_54 = arith.constant dense<0.000000e+00> : vector<4x16x8xf32>
    %197 = tpu.matmul %195, %196, %cst_54 {dimension_numbers = #tpu.dot_dimension_numbers<[2], [2], [1], [1], [0, 0, 0, 1, 1, 1], [0], [0]>} : vector<4x16x8xbf16>, vector<4x8x8xbf16>, vector<4x16x8xf32> -> vector<4x16x8xf32>
    "tpu.trace_stop"() : () -> ()
    %cst_55 = arith.constant 0.176776692 : f32
    %198 = vector.broadcast %cst_55 : f32 to vector<4x16x8xf32>
    %199 = arith.mulf %197, %198 : vector<4x16x8xf32>
    %cst_56 = arith.constant dense<0xFF800000> : vector<4x16xf32>
    %200 = vector.multi_reduction <maximumf>, %199, %cst_56 [2] : vector<4x16x8xf32> to vector<4x16xf32>
    %201 = vector.shape_cast %200 : vector<4x16xf32> to vector<4x16x1xf32>
    %202 = vector.broadcast %201 : vector<4x16x1xf32> to vector<4x16x8xf32>
    %203 = arith.subf %199, %202 : vector<4x16x8xf32>
    %204 = math.exp %203 : vector<4x16x8xf32>
    %cst_57 = arith.constant dense<0.000000e+00> : vector<4x16xf32>
    %205 = vector.multi_reduction <add>, %204, %cst_57 [2] : vector<4x16x8xf32> to vector<4x16xf32>
    %206 = vector.shape_cast %205 : vector<4x16xf32> to vector<4x16x1xf32>
    %207 = tpu.reciprocal %206 {approx = true} : vector<4x16x1xf32> -> vector<4x16x1xf32>
    %208 = vector.broadcast %207 : vector<4x16x1xf32> to vector<4x16x8xf32>
    %209 = arith.mulf %204, %208 : vector<4x16x8xf32>
    %210 = arith.truncf %209 : vector<4x16x8xf32> to vector<4x16x8xbf16>
    %211 = vector.extract_strided_slice %174 {offsets = [0, 0, 8], sizes = [4, 8, 8], strides = [1, 1, 1]} : vector<4x8x32xbf16> to vector<4x8x8xbf16>
    "tpu.trace_start"() <{level = 10 : i32, message = "bqk,bkd->bqd"}> : () -> ()
    %cst_58 = arith.constant dense<0.000000e+00> : vector<4x16x8xf32>
    %212 = tpu.matmul %210, %211, %cst_58 {dimension_numbers = #tpu.dot_dimension_numbers<[2], [1], [1], [2], [0, 0, 0, 1, 1, 2], [0], [0]>} : vector<4x16x8xbf16>, vector<4x8x8xbf16>, vector<4x16x8xf32> -> vector<4x16x8xf32>
    "tpu.trace_stop"() : () -> ()
    %213 = vector.extract_strided_slice %16 {offsets = [0, 0, 8], sizes = [4, 16, 8], strides = [1, 1, 1]} : vector<4x16x32xf32> to vector<4x16x8xf32>
    %214 = arith.addf %213, %212 : vector<4x16x8xf32>
    %215 = vector.extract_strided_slice %172 {offsets = [0, 0, 16], sizes = [4, 16, 8], strides = [1, 1, 1]} : vector<4x16x32xbf16> to vector<4x16x8xbf16>
    %216 = vector.extract_strided_slice %173 {offsets = [0, 0, 16], sizes = [4, 8, 8], strides = [1, 1, 1]} : vector<4x8x32xbf16> to vector<4x8x8xbf16>
    "tpu.trace_start"() <{level = 10 : i32, message = "bqd,bkd->bqk"}> : () -> ()
    %cst_59 = arith.constant dense<0.000000e+00> : vector<4x16x8xf32>
    %217 = tpu.matmul %215, %216, %cst_59 {dimension_numbers = #tpu.dot_dimension_numbers<[2], [2], [1], [1], [0, 0, 0, 1, 1, 1], [0], [0]>} : vector<4x16x8xbf16>, vector<4x8x8xbf16>, vector<4x16x8xf32> -> vector<4x16x8xf32>
    "tpu.trace_stop"() : () -> ()
    %cst_60 = arith.constant 0.176776692 : f32
    %218 = vector.broadcast %cst_60 : f32 to vector<4x16x8xf32>
    %219 = arith.mulf %217, %218 : vector<4x16x8xf32>
    %cst_61 = arith.constant dense<0xFF800000> : vector<4x16xf32>
    %220 = vector.multi_reduction <maximumf>, %219, %cst_61 [2] : vector<4x16x8xf32> to vector<4x16xf32>
    %221 = vector.shape_cast %220 : vector<4x16xf32> to vector<4x16x1xf32>
    %222 = vector.broadcast %221 : vector<4x16x1xf32> to vector<4x16x8xf32>
    %223 = arith.subf %219, %222 : vector<4x16x8xf32>
    %224 = math.exp %223 : vector<4x16x8xf32>
    %cst_62 = arith.constant dense<0.000000e+00> : vector<4x16xf32>
    %225 = vector.multi_reduction <add>, %224, %cst_62 [2] : vector<4x16x8xf32> to vector<4x16xf32>
    %226 = vector.shape_cast %225 : vector<4x16xf32> to vector<4x16x1xf32>
    %227 = tpu.reciprocal %226 {approx = true} : vector<4x16x1xf32> -> vector<4x16x1xf32>
    %228 = vector.broadcast %227 : vector<4x16x1xf32> to vector<4x16x8xf32>
    %229 = arith.mulf %224, %228 : vector<4x16x8xf32>
    %230 = arith.truncf %229 : vector<4x16x8xf32> to vector<4x16x8xbf16>
    %231 = vector.extract_strided_slice %174 {offsets = [0, 0, 16], sizes = [4, 8, 8], strides = [1, 1, 1]} : vector<4x8x32xbf16> to vector<4x8x8xbf16>
    "tpu.trace_start"() <{level = 10 : i32, message = "bqk,bkd->bqd"}> : () -> ()
    %cst_63 = arith.constant dense<0.000000e+00> : vector<4x16x8xf32>
    %232 = tpu.matmul %230, %231, %cst_63 {dimension_numbers = #tpu.dot_dimension_numbers<[2], [1], [1], [2], [0, 0, 0, 1, 1, 2], [0], [0]>} : vector<4x16x8xbf16>, vector<4x8x8xbf16>, vector<4x16x8xf32> -> vector<4x16x8xf32>
    "tpu.trace_stop"() : () -> ()
    %233 = vector.extract_strided_slice %16 {offsets = [0, 0, 16], sizes = [4, 16, 8], strides = [1, 1, 1]} : vector<4x16x32xf32> to vector<4x16x8xf32>
    %234 = arith.addf %233, %232 : vector<4x16x8xf32>
    %235 = vector.extract_strided_slice %172 {offsets = [0, 0, 24], sizes = [4, 16, 8], strides = [1, 1, 1]} : vector<4x16x32xbf16> to vector<4x16x8xbf16>
    %236 = vector.extract_strided_slice %173 {offsets = [0, 0, 24], sizes = [4, 8, 8], strides = [1, 1, 1]} : vector<4x8x32xbf16> to vector<4x8x8xbf16>
    "tpu.trace_start"() <{level = 10 : i32, message = "bqd,bkd->bqk"}> : () -> ()
    %cst_64 = arith.constant dense<0.000000e+00> : vector<4x16x8xf32>
    %237 = tpu.matmul %235, %236, %cst_64 {dimension_numbers = #tpu.dot_dimension_numbers<[2], [2], [1], [1], [0, 0, 0, 1, 1, 1], [0], [0]>} : vector<4x16x8xbf16>, vector<4x8x8xbf16>, vector<4x16x8xf32> -> vector<4x16x8xf32>
    "tpu.trace_stop"() : () -> ()
    %cst_65 = arith.constant 0.176776692 : f32
    %238 = vector.broadcast %cst_65 : f32 to vector<4x16x8xf32>
    %239 = arith.mulf %237, %238 : vector<4x16x8xf32>
    %cst_66 = arith.constant dense<0xFF800000> : vector<4x16xf32>
    %240 = vector.multi_reduction <maximumf>, %239, %cst_66 [2] : vector<4x16x8xf32> to vector<4x16xf32>
    %241 = vector.shape_cast %240 : vector<4x16xf32> to vector<4x16x1xf32>
    %242 = vector.broadcast %241 : vector<4x16x1xf32> to vector<4x16x8xf32>
    %243 = arith.subf %239, %242 : vector<4x16x8xf32>
    %244 = math.exp %243 : vector<4x16x8xf32>
    %cst_67 = arith.constant dense<0.000000e+00> : vector<4x16xf32>
    %245 = vector.multi_reduction <add>, %244, %cst_67 [2] : vector<4x16x8xf32> to vector<4x16xf32>
    %246 = vector.shape_cast %245 : vector<4x16xf32> to vector<4x16x1xf32>
    %247 = tpu.reciprocal %246 {approx = true} : vector<4x16x1xf32> -> vector<4x16x1xf32>
    %248 = vector.broadcast %247 : vector<4x16x1xf32> to vector<4x16x8xf32>
    %249 = arith.mulf %244, %248 : vector<4x16x8xf32>
    %250 = arith.truncf %249 : vector<4x16x8xf32> to vector<4x16x8xbf16>
    %251 = vector.extract_strided_slice %174 {offsets = [0, 0, 24], sizes = [4, 8, 8], strides = [1, 1, 1]} : vector<4x8x32xbf16> to vector<4x8x8xbf16>
    "tpu.trace_start"() <{level = 10 : i32, message = "bqk,bkd->bqd"}> : () -> ()
    %cst_68 = arith.constant dense<0.000000e+00> : vector<4x16x8xf32>
    %252 = tpu.matmul %250, %251, %cst_68 {dimension_numbers = #tpu.dot_dimension_numbers<[2], [1], [1], [2], [0, 0, 0, 1, 1, 2], [0], [0]>} : vector<4x16x8xbf16>, vector<4x8x8xbf16>, vector<4x16x8xf32> -> vector<4x16x8xf32>
    "tpu.trace_stop"() : () -> ()
    %253 = vector.extract_strided_slice %16 {offsets = [0, 0, 24], sizes = [4, 16, 8], strides = [1, 1, 1]} : vector<4x16x32xf32> to vector<4x16x8xf32>
    %254 = arith.addf %253, %252 : vector<4x16x8xf32>
    %255 = tpu.concatenate %194, %214, %234, %254 in 2 : vector<4x16x8xf32>, vector<4x16x8xf32>, vector<4x16x8xf32>, vector<4x16x8xf32> -> vector<4x16x32xf32>
    %256 = vector.shape_cast %255 : vector<4x16x32xf32> to vector<64x32xf32>
    %c0_69 = arith.constant 0 : index
    %c0_70 = arith.constant 0 : index
    %257 = vector.load %arg8[%c0_69, %c0_70] : memref<32x32xbf16, #tpu.memory_space<vmem>>, vector<32x32xbf16>
    %258 = vector.extract_strided_slice %5 {offsets = [0, 0], sizes = [1, 32], strides = [1, 1]} : vector<5x32xf32> to vector<1x32xf32>
    %259 = vector.extract_strided_slice %5 {offsets = [1, 0], sizes = [1, 32], strides = [1, 1]} : vector<5x32xf32> to vector<1x32xf32>
    %260 = vector.extract_strided_slice %5 {offsets = [2, 0], sizes = [1, 32], strides = [1, 1]} : vector<5x32xf32> to vector<1x32xf32>
    %261 = vector.extract_strided_slice %5 {offsets = [3, 0], sizes = [1, 32], strides = [1, 1]} : vector<5x32xf32> to vector<1x32xf32>
    %262 = vector.extract_strided_slice %5 {offsets = [4, 0], sizes = [1, 32], strides = [1, 1]} : vector<5x32xf32> to vector<1x32xf32>
    %cst_71 = arith.constant dense<0.000000e+00> : vector<64xf32>
    %263 = vector.multi_reduction <add>, %256, %cst_71 [1] : vector<64x32xf32> to vector<64xf32>
    %264 = vector.shape_cast %263 : vector<64xf32> to vector<64x1xf32>
    %cst_72 = arith.constant 3.200000e+01 : f32
    %265 = vector.broadcast %cst_72 : f32 to vector<64x1xf32>
    %266 = arith.divf %264, %265 : vector<64x1xf32>
    %267 = vector.broadcast %266 : vector<64x1xf32> to vector<64x32xf32>
    %268 = arith.subf %256, %267 : vector<64x32xf32>
    %269 = arith.mulf %268, %268 : vector<64x32xf32>
    %cst_73 = arith.constant dense<0.000000e+00> : vector<64xf32>
    %270 = vector.multi_reduction <add>, %269, %cst_73 [1] : vector<64x32xf32> to vector<64xf32>
    %271 = vector.shape_cast %270 : vector<64xf32> to vector<64x1xf32>
    %cst_74 = arith.constant 3.200000e+01 : f32
    %272 = vector.broadcast %cst_74 : f32 to vector<64x1xf32>
    %273 = arith.divf %271, %272 : vector<64x1xf32>
    %cst_75 = arith.constant 9.99999974E-6 : f32
    %274 = vector.broadcast %cst_75 : f32 to vector<64x1xf32>
    %275 = arith.addf %273, %274 : vector<64x1xf32>
    %276 = math.rsqrt %275 : vector<64x1xf32>
    %277 = vector.broadcast %266 : vector<64x1xf32> to vector<64x32xf32>
    %278 = arith.subf %256, %277 : vector<64x32xf32>
    %279 = vector.broadcast %276 : vector<64x1xf32> to vector<64x32xf32>
    %280 = arith.mulf %278, %279 : vector<64x32xf32>
    %281 = vector.broadcast %259 : vector<1x32xf32> to vector<64x32xf32>
    %282 = arith.mulf %280, %281 : vector<64x32xf32>
    %283 = vector.broadcast %260 : vector<1x32xf32> to vector<64x32xf32>
    %284 = arith.addf %282, %283 : vector<64x32xf32>
    %285 = arith.truncf %284 : vector<64x32xf32> to vector<64x32xbf16>
    %cst_76 = arith.constant dense<0.000000e+00> : vector<64x32xf32>
    %286 = tpu.matmul %285, %257, %cst_76 {dimension_numbers = #tpu.dot_dimension_numbers<[1], [0], [0], [1], [0, 0, 1, 1], [], []>} : vector<64x32xbf16>, vector<32x32xbf16>, vector<64x32xf32> -> vector<64x32xf32>
    %287 = vector.broadcast %258 : vector<1x32xf32> to vector<64x32xf32>
    %288 = arith.addf %286, %287 : vector<64x32xf32>
    %cst_77 = arith.constant 0.000000e+00 : f32
    %289 = vector.broadcast %cst_77 : f32 to vector<64x32xf32>
    %290 = arith.maximumf %288, %289 : vector<64x32xf32>
    %291 = arith.addf %284, %290 : vector<64x32xf32>
    %cst_78 = arith.constant dense<0.000000e+00> : vector<64xf32>
    %292 = vector.multi_reduction <add>, %291, %cst_78 [1] : vector<64x32xf32> to vector<64xf32>
    %293 = vector.shape_cast %292 : vector<64xf32> to vector<64x1xf32>
    %cst_79 = arith.constant 3.200000e+01 : f32
    %294 = vector.broadcast %cst_79 : f32 to vector<64x1xf32>
    %295 = arith.divf %293, %294 : vector<64x1xf32>
    %296 = vector.broadcast %295 : vector<64x1xf32> to vector<64x32xf32>
    %297 = arith.subf %291, %296 : vector<64x32xf32>
    %298 = arith.mulf %297, %297 : vector<64x32xf32>
    %cst_80 = arith.constant dense<0.000000e+00> : vector<64xf32>
    %299 = vector.multi_reduction <add>, %298, %cst_80 [1] : vector<64x32xf32> to vector<64xf32>
    %300 = vector.shape_cast %299 : vector<64xf32> to vector<64x1xf32>
    %cst_81 = arith.constant 3.200000e+01 : f32
    %301 = vector.broadcast %cst_81 : f32 to vector<64x1xf32>
    %302 = arith.divf %300, %301 : vector<64x1xf32>
    %cst_82 = arith.constant 9.99999974E-6 : f32
    %303 = vector.broadcast %cst_82 : f32 to vector<64x1xf32>
    %304 = arith.addf %302, %303 : vector<64x1xf32>
    %305 = math.rsqrt %304 : vector<64x1xf32>
    %306 = vector.broadcast %295 : vector<64x1xf32> to vector<64x32xf32>
    %307 = arith.subf %291, %306 : vector<64x32xf32>
    %308 = vector.broadcast %305 : vector<64x1xf32> to vector<64x32xf32>
    %309 = arith.mulf %307, %308 : vector<64x32xf32>
    %310 = vector.broadcast %261 : vector<1x32xf32> to vector<64x32xf32>
    %311 = arith.mulf %309, %310 : vector<64x32xf32>
    %312 = vector.broadcast %262 : vector<1x32xf32> to vector<64x32xf32>
    %313 = arith.addf %311, %312 : vector<64x32xf32>
    %314 = vector.shape_cast %313 : vector<64x32xf32> to vector<4x16x32xf32>
    %c0_83 = arith.constant 0 : index
    %c0_84 = arith.constant 0 : index
    %c0_85 = arith.constant 0 : index
    %315 = vector.load %arg10[%c0_83, %c0_84, %c0_85] : memref<4x16x32xf32, #tpu.memory_space<vmem>>, vector<4x16x32xf32>
    tpu.vector_store %arg10[%c0_83, %c0_84, %c0_85], %314 {strides = array<i32>} : memref<4x16x32xf32, #tpu.memory_space<vmem>>, vector<4x16x32xf32>,
    return
  }
  func.func @transform_0(%arg0: i32) -> (i32, i32, i32) {
    %c0_i32 = arith.constant 0 : i32
    %c0_i32_0 = arith.constant 0 : i32
    %c0_i32_1 = arith.constant 0 : i32
    return %arg0, %c0_i32, %c0_i32_0 : i32, i32, i32
  }
  func.func @transform_1(%arg0: i32) -> (i32, i32) {
    %c0_i32 = arith.constant 0 : i32
    %c0_i32_0 = arith.constant 0 : i32
    %c0_i32_1 = arith.constant 0 : i32
    return %c0_i32, %c0_i32_0 : i32, i32
  }
  func.func @transform_2(%arg0: i32) -> (i32, i32) {
    %c0_i32 = arith.constant 0 : i32
    %c0_i32_0 = arith.constant 0 : i32
    %c0_i32_1 = arith.constant 0 : i32
    return %c0_i32, %c0_i32_0 : i32, i32
  }
  func.func @transform_3(%arg0: i32) -> (i32, i32) {
    %c0_i32 = arith.constant 0 : i32
    %c0_i32_0 = arith.constant 0 : i32
    %c0_i32_1 = arith.constant 0 : i32
    return %c0_i32, %c0_i32_0 : i32, i32
  }
  func.func @transform_4(%arg0: i32) -> (i32, i32) {
    %c0_i32 = arith.constant 0 : i32
    %c0_i32_0 = arith.constant 0 : i32
    %c0_i32_1 = arith.constant 0 : i32
    return %c0_i32, %c0_i32_0 : i32, i32
  }
  func.func @transform_5(%arg0: i32) -> (i32, i32) {
    %c0_i32 = arith.constant 0 : i32
    %c0_i32_0 = arith.constant 0 : i32
    %c0_i32_1 = arith.constant 0 : i32
    return %c0_i32, %c0_i32_0 : i32, i32
  }
  func.func @transform_6(%arg0: i32) -> (i32, i32) {
    %c0_i32 = arith.constant 0 : i32
    %c0_i32_0 = arith.constant 0 : i32
    %c0_i32_1 = arith.constant 0 : i32
    return %c0_i32, %c0_i32_0 : i32, i32
  }
  func.func @transform_7(%arg0: i32) -> (i32, i32) {
    %c0_i32 = arith.constant 0 : i32
    %c0_i32_0 = arith.constant 0 : i32
    %c0_i32_1 = arith.constant 0 : i32
    return %c0_i32, %c0_i32_0 : i32, i32
  }
  func.func @transform_8(%arg0: i32) -> (i32, i32) {
    %c0_i32 = arith.constant 0 : i32
    %c0_i32_0 = arith.constant 0 : i32
    %c0_i32_1 = arith.constant 0 : i32
    return %c0_i32, %c0_i32_0 : i32, i32
  }
  func.func @transform_9(%arg0: i32) -> (i32, i32, i32) {
    %c0_i32 = arith.constant 0 : i32
    %c0_i32_0 = arith.constant 0 : i32
    %c0_i32_1 = arith.constant 0 : i32
    return %arg0, %c0_i32, %c0_i32_0 : i32, i32, i32
  }
}

</mosaic_0001>

<llo_original>
// kernel: isab_forward.1
$region0: #{isab_forward.1}
  #allocation0 [shape = 'u32[]', space=smem, size = 0x4, offset = 0x4, fixed_abs, tag = 'smem constant byte address 0x4 - core index']
  #allocation1 [shape = 'u32[144,128]{1,0:T(1,128)}', space=vmem, size = 0x12000, scoped, tag = 'internal scratch']
  %s0 = inlined_call_operand.vmem [shape: f32[4,16,16], index: 0, kind: input, shape index: {}]
  %s1 = inlined_call_operand.vmem [shape: f32[8,32], index: 1, kind: input, shape index: {}]
  %s2 = inlined_call_operand.vmem [shape: bf16[16,96], index: 2, kind: input, shape index: {}]
  %s3 = inlined_call_operand.vmem [shape: f32[1,96], index: 3, kind: input, shape index: {}]
  %s4 = inlined_call_operand.vmem [shape: bf16[32,32], index: 4, kind: input, shape index: {}]
  %s5 = inlined_call_operand.vmem [shape: bf16[32,64], index: 5, kind: input, shape index: {}]
  %s6 = inlined_call_operand.vmem [shape: f32[1,64], index: 6, kind: input, shape index: {}]
  %s7 = inlined_call_operand.vmem [shape: bf16[32,32], index: 7, kind: input, shape index: {}]
  %s8 = inlined_call_operand.vmem [shape: f32[10,32], index: 8, kind: input, shape index: {}]
  %s9 = inlined_call_operand.hbm [shape: f32[4,16,32], index: 9, kind: output, shape index: {}]
  %s10 = sld [smem:[#allocation0]]
  $region46: #{isab_forward.1} parent=0
    _
  %s12 = ssub.s32 1, %s10
  %s13 = scalar_select 0, %s12, %s10
  $region1: #{isab_forward.1} parent=0
    #allocation2 [shape = 'u8[32768]{0}', space=vmem, size = 0x8000, scoped, tag = 'output window, operand 0, single buffered']
    #allocation3 [shape = 's32[1]{0}', space=sflag, size = 0x4, scoped, tag = 'scoped memory for isab_forward.1']
    %14 = vsyncpa [#allocation3], 0
    // Predicated region
    $region2: #{isab_forward.1} parent=1 // pred_check
      _
    $region3: #{isab_forward.1} parent=1 // pred_check_branch
      %16 = sbr.rel (0) target = $region5
    $region4: #{isab_forward.1} parent=1 // pred_region
      _
    $region5: #{isab_forward.1} parent=1 // pred_fallthru
      _
    // Predicated region
    $region6: #{isab_forward.1} parent=1 // pred_check
      _
    $region7: #{isab_forward.1} parent=1 // pred_check_branch
      %18 = sbr.rel (0) target = $region9
    $region8: #{isab_forward.1} parent=1 // pred_region
      _
    $region9: #{isab_forward.1} parent=1 // pred_fallthru
      _
    // Predicated region
    $region10: #{isab_forward.1} parent=1 // pred_check
      _
    $region11: #{isab_forward.1} parent=1 // pred_check_branch
      %20 = sbr.rel (0) target = $region13
    $region12: #{isab_forward.1} parent=1 // pred_region
      _
    $region13: #{isab_forward.1} parent=1 // pred_fallthru
      _
    // Predicated region
    $region14: #{isab_forward.1} parent=1 // pred_check
      _
    $region15: #{isab_forward.1} parent=1 // pred_check_branch
      %22 = sbr.rel (0) target = $region17
    $region16: #{isab_forward.1} parent=1 // pred_region
      _
    $region17: #{isab_forward.1} parent=1 // pred_fallthru
      _
    // Predicated region
    $region18: #{isab_forward.1} parent=1 // pred_check
      _
    $region19: #{isab_forward.1} parent=1 // pred_check_branch
      %24 = sbr.rel (0) target = $region21
    $region20: #{isab_forward.1} parent=1 // pred_region
      _
    $region21: #{isab_forward.1} parent=1 // pred_fallthru
      _
    // Predicated region
    $region22: #{isab_forward.1} parent=1 // pred_check
      _
    $region23: #{isab_forward.1} parent=1 // pred_check_branch
      %26 = sbr.rel (0) target = $region25
    $region24: #{isab_forward.1} parent=1 // pred_region
      _
    $region25: #{isab_forward.1} parent=1 // pred_fallthru
      _
    // Predicated region
    $region26: #{isab_forward.1} parent=1 // pred_check
      _
    $region27: #{isab_forward.1} parent=1 // pred_check_branch
      %28 = sbr.rel (0) target = $region29
    $region28: #{isab_forward.1} parent=1 // pred_region
      _
    $region29: #{isab_forward.1} parent=1 // pred_fallthru
      _
    // Predicated region
    $region30: #{isab_forward.1} parent=1 // pred_check
      _
    $region31: #{isab_forward.1} parent=1 // pred_check_branch
      %30 = sbr.rel (0) target = $region33
    $region32: #{isab_forward.1} parent=1 // pred_region
      _
    $region33: #{isab_forward.1} parent=1 // pred_fallthru
      _
    // Predicated region
    $region34: #{isab_forward.1} parent=1 // pred_check
      _
    $region35: #{isab_forward.1} parent=1 // pred_check_branch
      %32 = sbr.rel (0) target = $region37
    $region36: #{isab_forward.1} parent=1 // pred_region
      _
    $region37: #{isab_forward.1} parent=1 // pred_fallthru
      _
    %v34 = vld [vmem:[%s0] sm:$0xff]
    %v35 = vld [vmem:[%s0 + $0x8] sm:$0xff]
    %v36 = vld [vmem:[%s0 + $0x10] sm:$0xff]
    %v37 = vld [vmem:[%s0 + $0x18] sm:$0xff]
    %v38 = vld [vmem:[%s0 + $0x20] sm:$0xff]
    %v39 = vld [vmem:[%s0 + $0x28] sm:$0xff]
    %v40 = vld [vmem:[%s0 + $0x30] sm:$0xff]
    %v41 = vld [vmem:[%s0 + $0x38] sm:$0xff]
    %v42 = vpack.c.bf16 %v35, %v34
    %v43 = vpack.c.bf16 %v37, %v36
    %v44 = vpack.c.bf16 %v39, %v38
    %v45 = vpack.c.bf16 %v41, %v40
    %v46 = vld [vmem:[%s8] sm:$0xff]
    %v47 = vld [vmem:[%s8 + $0x8] sm:$0x3]
    %v48 = vld [vmem:[%s2] sm:$0xf]
    %v49 = vld [vmem:[%s2 + $0x4] sm:$0xf]
    %v50 = vld [vmem:[%s3] sm:$0x1]
    %v52 = vlaneseq
    %v53 = vshrl.u32 %v52, 7
    %v54 = vsub.s32 0, %v53
    %v55 = vrot.slane %v50, %v54
    %v59 = vunpack.c.l.b16 %v48
    %v60 = vunpack.c.l.b16 %v49
    %v61 = vpack.c.b16 %v60, %v59
    %vm63 = vcmask 130048
    %v65 = vsel %vm63, %v42, 0
    %v68 = vsel %vm63, %v43, 0
    %v71 = vsel %vm63, %v44, 0
    %v74 = vsel %vm63, %v45, 0
    %76 = vmatprep.subr.bf16.mxu0 0
    %77 = vmatpush1.bf16.msra.mxu0 0
    %78 = vmatprep.subr.bf16.mxu0 0
    %79 = vmatpush1.bf16.msra.mxu0 0
    %80 = vmatprep.subr.bf16.mxu0 0
    %81 = vmatpush1.bf16.msra.mxu0 0
    %82 = vmatprep.subr.bf16.mxu0 0
    %83 = vmatpush1.bf16.msra.mxu0 0
    %84 = vmatprep.subr.bf16.mxu0 0
    %85 = vmatpush1.bf16.msra.mxu0 0
    %86 = vmatprep.subr.bf16.mxu0 0
    %87 = vmatpush1.bf16.msra.mxu0 0
    %88 = vmatprep.subr.bf16.mxu0 0
    %89 = vmatpush1.bf16.msra.mxu0 0
    %90 = vmatprep.subr.bf16.mxu0 0
    %91 = vmatpush1.bf16.msra.mxu0 %v61
    %92 = vmatprep.subr.bf16.mxu0 0
    %93 = vmatpush2.bf16.msra.mxu0 0
    %94 = vmatprep.subr.bf16.mxu0 0
    %95 = vmatpush2.bf16.msra.mxu0 0
    %96 = vmatprep.subr.bf16.mxu0 0
    %97 = vmatpush2.bf16.msra.mxu0 0
    %98 = vmatprep.subr.bf16.mxu0 0
    %99 = vmatpush2.bf16.msra.mxu0 0
    %100 = vmatprep.subr.bf16.mxu0 0
    %101 = vmatpush2.bf16.msra.mxu0 0
    %102 = vmatprep.subr.bf16.mxu0 0
    %103 = vmatpush2.bf16.msra.mxu0 0
    %104 = vmatprep.subr.bf16.mxu0 0
    %105 = vmatpush2.bf16.msra.mxu0 0
    %106 = vmatprep.subr.bf16.mxu0 0
    %107 = vmatpush2.bf16.msra.mxu0 0
    %108 = vmatprep.mubr.bf16.mxu0 0
    %109 = vmatmul.mubr.bf16.gmra.mxu0 %v65
    %v110 = vpop.f32.mrf.mxu0
    %v111 = vadd.f32 %v55, %v110
    %v112 = vpop.f32.mrf.mxu0
    %v113 = vpop.f32.mrf.mxu0
    %v114 = vadd.f32 %v55, %v113
    %v115 = vpop.f32.mrf.mxu0
    %116 = vmatprep.mubr.bf16.mxu0 0
    %117 = vmatmul.mubr.bf16.gmra.mxu0 %v68
    %v118 = vpop.f32.mrf.mxu0
    %v119 = vadd.f32 %v55, %v118
    %v120 = vpop.f32.mrf.mxu0
    %v121 = vpop.f32.mrf.mxu0
    %v122 = vadd.f32 %v55, %v121
    %v123 = vpop.f32.mrf.mxu0
    %124 = vmatprep.mubr.bf16.mxu0 0
    %125 = vmatmul.mubr.bf16.gmra.mxu0 %v71
    %v126 = vpop.f32.mrf.mxu0
    %v127 = vadd.f32 %v55, %v126
    %v128 = vpop.f32.mrf.mxu0
    %v129 = vpop.f32.mrf.mxu0
    %v130 = vadd.f32 %v55, %v129
    %v131 = vpop.f32.mrf.mxu0
    %132 = vmatprep.mubr.bf16.mxu0 0
    %133 = vmatmul.mubr.bf16.gmra.mxu0 %v74
    %v134 = vpop.f32.mrf.mxu0
    %v135 = vadd.f32 %v55, %v134
    %v136 = vpop.f32.mrf.mxu0
    %v137 = vpop.f32.mrf.mxu0
    %v138 = vadd.f32 %v55, %v137
    %v139 = vpop.f32.mrf.mxu0
    %140 = vdwg.mxu0
    %v141 = vld [vmem:[%s1] sm:$0xff]
    %v142 = vpack.c.bf16 %v141, %v141
    %v143 = vpack.c.bf16 %v114, %v111
    %v144 = vpack.c.bf16 %v122, %v119
    %v145 = vpack.c.bf16 %v130, %v127
    %v146 = vpack.c.bf16 %v138, %v135
    %vm147 = vcmask 64512
    %v149 = vsel %vm147, %v142, 0
    %v152 = vsel %vm147, %v143, 0
    %154 = vmatprep.subr.bf16.mxu0 0
    %155 = vmatpush1.bf16.xpose.msra.mxu0 0
    %156 = vmatprep.subr.bf16.mxu0 0
    %157 = vmatpush1.bf16.xpose.msra.mxu0 0
    %158 = vmatprep.subr.bf16.mxu0 0
    %159 = vmatpush1.bf16.xpose.msra.mxu0 0
    %160 = vmatprep.subr.bf16.mxu0 0
    %161 = vmatpush1.bf16.xpose.msra.mxu0 0
    %162 = vmatprep.subr.bf16.mxu0 0
    %163 = vmatpush1.bf16.xpose.msra.mxu0 0
    %164 = vmatprep.subr.bf16.mxu0 0
    %165 = vmatpush1.bf16.xpose.msra.mxu0 0
    %166 = vmatprep.subr.bf16.mxu0 0
    %167 = vmatpush1.bf16.xpose.msra.mxu0 0
    %168 = vmatprep.subr.bf16.mxu0 0
    %169 = vmatpush1.bf16.xpose.msra.mxu0 %v152
    %170 = vmatprep.subr.bf16.mxu0 0
    %171 = vmatpush2.bf16.xpose.msra.mxu0 0
    %172 = vmatprep.subr.bf16.mxu0 0
    %173 = vmatpush2.bf16.xpose.msra.mxu0 0
    %174 = vmatprep.subr.bf16.mxu0 0
    %175 = vmatpush2.bf16.xpose.msra.mxu0 0
    %176 = vmatprep.subr.bf16.mxu0 0
    %177 = vmatpush2.bf16.xpose.msra.mxu0 0
    %178 = vmatprep.subr.bf16.mxu0 0
    %179 = vmatpush2.bf16.xpose.msra.mxu0 0
    %180 = vmatprep.subr.bf16.mxu0 0
    %181 = vmatpush2.bf16.xpose.msra.mxu0 0
    %182 = vmatprep.subr.bf16.mxu0 0
    %183 = vmatpush2.bf16.xpose.msra.mxu0 0
    %184 = vmatprep.subr.bf16.mxu0 0
    %185 = vmatpush2.bf16.xpose.msra.mxu0 0
    %186 = vmatprep.mubr.bf16.mxu0 0
    %187 = vmatmul.mubr.bf16.gmra.mxu0 %v149
    %v188 = vpop.f32.mrf.mxu0
    %v189 = vadd.f32 0.0, %v188
    %v190 = vpop.f32.mrf.mxu0
    %v191 = vpop.f32.mrf.mxu0
    %v192 = vpop.f32.mrf.mxu0
    %193 = vdwg.mxu0
    %v195 = vsel %vm147, %v144, 0
    %197 = vmatprep.subr.bf16.mxu0 0
    %198 = vmatpush1.bf16.xpose.msra.mxu0 0
    %199 = vmatprep.subr.bf16.mxu0 0
    %200 = vmatpush1.bf16.xpose.msra.mxu0 0
    %201 = vmatprep.subr.bf16.mxu0 0
    %202 = vmatpush1.bf16.xpose.msra.mxu0 0
    %203 = vmatprep.subr.bf16.mxu0 0
    %204 = vmatpush1.bf16.xpose.msra.mxu0 0
    %205 = vmatprep.subr.bf16.mxu0 0
    %206 = vmatpush1.bf16.xpose.msra.mxu0 0
    %207 = vmatprep.subr.bf16.mxu0 0
    %208 = vmatpush1.bf16.xpose.msra.mxu0 0
    %209 = vmatprep.subr.bf16.mxu0 0
    %210 = vmatpush1.bf16.xpose.msra.mxu0 0
    %211 = vmatprep.subr.bf16.mxu0 0
    %212 = vmatpush1.bf16.xpose.msra.mxu0 %v195
    %213 = vmatprep.subr.bf16.mxu0 0
    %214 = vmatpush2.bf16.xpose.msra.mxu0 0
    %215 = vmatprep.subr.bf16.mxu0 0
    %216 = vmatpush2.bf16.xpose.msra.mxu0 0
    %217 = vmatprep.subr.bf16.mxu0 0
    %218 = vmatpush2.bf16.xpose.msra.mxu0 0
    %219 = vmatprep.subr.bf16.mxu0 0
    %220 = vmatpush2.bf16.xpose.msra.mxu0 0
    %221 = vmatprep.subr.bf16.mxu0 0
    %222 = vmatpush2.bf16.xpose.msra.mxu0 0
    %223 = vmatprep.subr.bf16.mxu0 0
    %224 = vmatpush2.bf16.xpose.msra.mxu0 0
    %225 = vmatprep.subr.bf16.mxu0 0
    %226 = vmatpush2.bf16.xpose.msra.mxu0 0
    %227 = vmatprep.subr.bf16.mxu0 0
    %228 = vmatpush2.bf16.xpose.msra.mxu0 0
    %229 = vmatprep.mubr.bf16.mxu0 0
    %230 = vmatmul.mubr.bf16.gmra.mxu0 %v149
    %v231 = vpop.f32.mrf.mxu0
    %v232 = vadd.f32 0.0, %v231
    %v233 = vpop.f32.mrf.mxu0
    %v234 = vpop.f32.mrf.mxu0
    %v235 = vpop.f32.mrf.mxu0
    %236 = vdwg.mxu0
    %v238 = vsel %vm147, %v145, 0
    %240 = vmatprep.subr.bf16.mxu0 0
    %241 = vmatpush1.bf16.xpose.msra.mxu0 0
    %242 = vmatprep.subr.bf16.mxu0 0
    %243 = vmatpush1.bf16.xpose.msra.mxu0 0
    %244 = vmatprep.subr.bf16.mxu0 0
    %245 = vmatpush1.bf16.xpose.msra.mxu0 0
    %246 = vmatprep.subr.bf16.mxu0 0
    %247 = vmatpush1.bf16.xpose.msra.mxu0 0
    %248 = vmatprep.subr.bf16.mxu0 0
    %249 = vmatpush1.bf16.xpose.msra.mxu0 0
    %250 = vmatprep.subr.bf16.mxu0 0
    %251 = vmatpush1.bf16.xpose.msra.mxu0 0
    %252 = vmatprep.subr.bf16.mxu0 0
    %253 = vmatpush1.bf16.xpose.msra.mxu0 0
    %254 = vmatprep.subr.bf16.mxu0 0
    %255 = vmatpush1.bf16.xpose.msra.mxu0 %v238
    %256 = vmatprep.subr.bf16.mxu0 0
    %257 = vmatpush2.bf16.xpose.msra.mxu0 0
    %258 = vmatprep.subr.bf16.mxu0 0
    %259 = vmatpush2.bf16.xpose.msra.mxu0 0
    %260 = vmatprep.subr.bf16.mxu0 0
    %261 = vmatpush2.bf16.xpose.msra.mxu0 0
    %262 = vmatprep.subr.bf16.mxu0 0
    %263 = vmatpush2.bf16.xpose.msra.mxu0 0
    %264 = vmatprep.subr.bf16.mxu0 0
    %265 = vmatpush2.bf16.xpose.msra.mxu0 0
    %266 = vmatprep.subr.bf16.mxu0 0
    %267 = vmatpush2.bf16.xpose.msra.mxu0 0
    %268 = vmatprep.subr.bf16.mxu0 0
    %269 = vmatpush2.bf16.xpose.msra.mxu0 0
    %270 = vmatprep.subr.bf16.mxu0 0
    %271 = vmatpush2.bf16.xpose.msra.mxu0 0
    %272 = vmatprep.mubr.bf16.mxu0 0
    %273 = vmatmul.mubr.bf16.gmra.mxu0 %v149
    %v274 = vpop.f32.mrf.mxu0
    %v275 = vadd.f32 0.0, %v274
    %v276 = vpop.f32.mrf.mxu0
    %v277 = vpop.f32.mrf.mxu0
    %v278 = vpop.f32.mrf.mxu0
    %279 = vdwg.mxu0
    %v281 = vsel %vm147, %v146, 0
    %283 = vmatprep.subr.bf16.mxu0 0
    %284 = vmatpush1.bf16.xpose.msra.mxu0 0
    %285 = vmatprep.subr.bf16.mxu0 0
    %286 = vmatpush1.bf16.xpose.msra.mxu0 0
    %287 = vmatprep.subr.bf16.mxu0 0
    %288 = vmatpush1.bf16.xpose.msra.mxu0 0
    %289 = vmatprep.subr.bf16.mxu0 0
    %290 = vmatpush1.bf16.xpose.msra.mxu0 0
    %291 = vmatprep.subr.bf16.mxu0 0
    %292 = vmatpush1.bf16.xpose.msra.mxu0 0
    %293 = vmatprep.subr.bf16.mxu0 0
    %294 = vmatpush1.bf16.xpose.msra.mxu0 0
    %295 = vmatprep.subr.bf16.mxu0 0
    %296 = vmatpush1.bf16.xpose.msra.mxu0 0
    %297 = vmatprep.subr.bf16.mxu0 0
    %298 = vmatpush1.bf16.xpose.msra.mxu0 %v281
    %299 = vmatprep.subr.bf16.mxu0 0
    %300 = vmatpush2.bf16.xpose.msra.mxu0 0
    %301 = vmatprep.subr.bf16.mxu0 0
    %302 = vmatpush2.bf16.xpose.msra.mxu0 0
    %303 = vmatprep.subr.bf16.mxu0 0
    %304 = vmatpush2.bf16.xpose.msra.mxu0 0
    %305 = vmatprep.subr.bf16.mxu0 0
    %306 = vmatpush2.bf16.xpose.msra.mxu0 0
    %307 = vmatprep.subr.bf16.mxu0 0
    %308 = vmatpush2.bf16.xpose.msra.mxu0 0
    %309 = vmatprep.subr.bf16.mxu0 0
    %310 = vmatpush2.bf16.xpose.msra.mxu0 0
    %311 = vmatprep.subr.bf16.mxu0 0
    %312 = vmatpush2.bf16.xpose.msra.mxu0 0
    %313 = vmatprep.subr.bf16.mxu0 0
    %314 = vmatpush2.bf16.xpose.msra.mxu0 0
    %315 = vmatprep.mubr.bf16.mxu0 0
    %316 = vmatmul.mubr.bf16.gmra.mxu0 %v149
    %v317 = vpop.f32.mrf.mxu0
    %v318 = vadd.f32 0.0, %v317
    %v319 = vpop.f32.mrf.mxu0
    %v320 = vpop.f32.mrf.mxu0
    %v321 = vpop.f32.mrf.mxu0
    %322 = vdwg.mxu0
    %v323 = vmul.f32 %v189, 0.17677669
    %v324 = vmul.f32 %v232, 0.17677669
    %v325 = vmul.f32 %v275, 0.17677669
    %v326 = vmul.f32 %v318, 0.17677669
    %v327 = vsel %vm63, %v323, -inf
    %328 = vmax.xlane.f32.xlu0 %v327
    %v329 = vpop.xlane.xlu0 %328
    %v330 = vsel %vm63, %v324, -inf
    %331 = vmax.xlane.f32.xlu0 %v330
    %v332 = vpop.xlane.xlu0 %331
    %v333 = vsel %vm63, %v325, -inf
    %334 = vmax.xlane.f32.xlu0 %v333
    %v335 = vpop.xlane.xlu0 %334
    %v336 = vsel %vm63, %v326, -inf
    %337 = vmax.xlane.f32.xlu0 %v336
    %v338 = vpop.xlane.xlu0 %337
    %v339 = vsub.f32 %v323, %v329
    %v340 = vsub.f32 %v324, %v332
    %v341 = vsub.f32 %v325, %v335
    %v342 = vsub.f32 %v326, %v338
    %v343 = vmul.f32 %v339, 1.442695
    %v344 = vpow.pop %v343
    %v345 = vmul.f32 %v340, 1.442695
    %v346 = vpow.pop %v345
    %v347 = vmul.f32 %v341, 1.442695
    %v348 = vpow.pop %v347
    %v349 = vmul.f32 %v342, 1.442695
    %v350 = vpow.pop %v349
    %v351 = vsel %vm63, %v344, 0.0
    %352 = vadd.xlane.f32.xlu0 %v351
    %v353 = vpop.xlane.xlu0 %352
    %v354 = vsel %vm63, %v346, 0.0
    %355 = vadd.xlane.f32.xlu0 %v354
    %v356 = vpop.xlane.xlu0 %355
    %v357 = vsel %vm63, %v348, 0.0
    %358 = vadd.xlane.f32.xlu0 %v357
    %v359 = vpop.xlane.xlu0 %358
    %v360 = vsel %vm63, %v350, 0.0
    %361 = vadd.xlane.f32.xlu0 %v360
    %v362 = vpop.xlane.xlu0 %361
    %v363 = vrcp.pop %v353
    %v364 = vrcp.pop %v356
    %v365 = vrcp.pop %v359
    %v366 = vrcp.pop %v362
    %v367 = vmul.f32 %v344, %v363
    %v368 = vmul.f32 %v346, %v364
    %v369 = vmul.f32 %v348, %v365
    %v370 = vmul.f32 %v350, %v366
    %v371 = vpack.c.bf16 %v367, %v367
    %v372 = vpack.c.bf16 %v368, %v368
    %v373 = vpack.c.bf16 %v369, %v369
    %v374 = vpack.c.bf16 %v370, %v370
    %376 = vrot.lane.b32.xlu0 %v143, 96
    %v377 = vpop.permute.xlu0 %376
    %v380 = vsel %vm63, %v371, 0
    %382 = vmatprep.subr.bf16.mxu0 0
    %383 = vmatpush1.bf16.msra.mxu0 0
    %384 = vmatprep.subr.bf16.mxu0 0
    %385 = vmatpush1.bf16.msra.mxu0 0
    %386 = vmatprep.subr.bf16.mxu0 0
    %387 = vmatpush1.bf16.msra.mxu0 0
    %388 = vmatprep.subr.bf16.mxu0 0
    %389 = vmatpush1.bf16.msra.mxu0 0
    %390 = vmatprep.subr.bf16.mxu0 0
    %391 = vmatpush1.bf16.msra.mxu0 0
    %392 = vmatprep.subr.bf16.mxu0 0
    %393 = vmatpush1.bf16.msra.mxu0 0
    %394 = vmatprep.subr.bf16.mxu0 0
    %395 = vmatpush1.bf16.msra.mxu0 0
    %396 = vmatprep.subr.bf16.mxu0 0
    %397 = vmatpush1.bf16.msra.mxu0 %v377
    %398 = vmatprep.subr.bf16.mxu0 0
    %399 = vmatpush2.bf16.msra.mxu0 0
    %400 = vmatprep.subr.bf16.mxu0 0
    %401 = vmatpush2.bf16.msra.mxu0 0
    %402 = vmatprep.subr.bf16.mxu0 0
    %403 = vmatpush2.bf16.msra.mxu0 0
    %404 = vmatprep.subr.bf16.mxu0 0
    %405 = vmatpush2.bf16.msra.mxu0 0
    %406 = vmatprep.subr.bf16.mxu0 0
    %407 = vmatpush2.bf16.msra.mxu0 0
    %408 = vmatprep.subr.bf16.mxu0 0
    %409 = vmatpush2.bf16.msra.mxu0 0
    %410 = vmatprep.subr.bf16.mxu0 0
    %411 = vmatpush2.bf16.msra.mxu0 0
    %412 = vmatprep.subr.bf16.mxu0 0
    %413 = vmatpush2.bf16.msra.mxu0 0
    %414 = vmatprep.mubr.bf16.mxu0 0
    %415 = vmatmul.mubr.bf16.gmra.mxu0 %v380
    %v416 = vpop.f32.mrf.mxu0
    %v417 = vadd.f32 0.0, %v416
    %v418 = vpop.f32.mrf.mxu0
    %v419 = vpop.f32.mrf.mxu0
    %v420 = vpop.f32.mrf.mxu0
    %421 = vdwg.mxu0
    %423 = vrot.lane.b32.xlu0 %v144, 96
    %v424 = vpop.permute.xlu0 %423
    %v427 = vsel %vm63, %v372, 0
    %429 = vmatprep.subr.bf16.mxu0 0
    %430 = vmatpush1.bf16.msra.mxu0 0
    %431 = vmatprep.subr.bf16.mxu0 0
    %432 = vmatpush1.bf16.msra.mxu0 0
    %433 = vmatprep.subr.bf16.mxu0 0
    %434 = vmatpush1.bf16.msra.mxu0 0
    %435 = vmatprep.subr.bf16.mxu0 0
    %436 = vmatpush1.bf16.msra.mxu0 0
    %437 = vmatprep.subr.bf16.mxu0 0
    %438 = vmatpush1.bf16.msra.mxu0 0
    %439 = vmatprep.subr.bf16.mxu0 0
    %440 = vmatpush1.bf16.msra.mxu0 0
    %441 = vmatprep.subr.bf16.mxu0 0
    %442 = vmatpush1.bf16.msra.mxu0 0
    %443 = vmatprep.subr.bf16.mxu0 0
    %444 = vmatpush1.bf16.msra.mxu0 %v424
    %445 = vmatprep.subr.bf16.mxu0 0
    %446 = vmatpush2.bf16.msra.mxu0 0
    %447 = vmatprep.subr.bf16.mxu0 0
    %448 = vmatpush2.bf16.msra.mxu0 0
    %449 = vmatprep.subr.bf16.mxu0 0
    %450 = vmatpush2.bf16.msra.mxu0 0
    %451 = vmatprep.subr.bf16.mxu0 0
    %452 = vmatpush2.bf16.msra.mxu0 0
    %453 = vmatprep.subr.bf16.mxu0 0
    %454 = vmatpush2.bf16.msra.mxu0 0
    %455 = vmatprep.subr.bf16.mxu0 0
    %456 = vmatpush2.bf16.msra.mxu0 0
    %457 = vmatprep.subr.bf16.mxu0 0
    %458 = vmatpush2.bf16.msra.mxu0 0
    %459 = vmatprep.subr.bf16.mxu0 0
    %460 = vmatpush2.bf16.msra.mxu0 0
    %461 = vmatprep.mubr.bf16.mxu0 0
    %462 = vmatmul.mubr.bf16.gmra.mxu0 %v427
    %v463 = vpop.f32.mrf.mxu0
    %v464 = vadd.f32 0.0, %v463
    %v465 = vpop.f32.mrf.mxu0
    %v466 = vpop.f32.mrf.mxu0
    %v467 = vpop.f32.mrf.mxu0
    %468 = vdwg.mxu0
    %470 = vrot.lane.b32.xlu0 %v145, 96
    %v471 = vpop.permute.xlu0 %470
    %v474 = vsel %vm63, %v373, 0
    %476 = vmatprep.subr.bf16.mxu0 0
    %477 = vmatpush1.bf16.msra.mxu0 0
    %478 = vmatprep.subr.bf16.mxu0 0
    %479 = vmatpush1.bf16.msra.mxu0 0
    %480 = vmatprep.subr.bf16.mxu0 0
    %481 = vmatpush1.bf16.msra.mxu0 0
    %482 = vmatprep.subr.bf16.mxu0 0
    %483 = vmatpush1.bf16.msra.mxu0 0
    %484 = vmatprep.subr.bf16.mxu0 0
    %485 = vmatpush1.bf16.msra.mxu0 0
    %486 = vmatprep.subr.bf16.mxu0 0
    %487 = vmatpush1.bf16.msra.mxu0 0
    %488 = vmatprep.subr.bf16.mxu0 0
    %489 = vmatpush1.bf16.msra.mxu0 0
    %490 = vmatprep.subr.bf16.mxu0 0
    %491 = vmatpush1.bf16.msra.mxu0 %v471
    %492 = vmatprep.subr.bf16.mxu0 0
    %493 = vmatpush2.bf16.msra.mxu0 0
    %494 = vmatprep.subr.bf16.mxu0 0
    %495 = vmatpush2.bf16.msra.mxu0 0
    %496 = vmatprep.subr.bf16.mxu0 0
    %497 = vmatpush2.bf16.msra.mxu0 0
    %498 = vmatprep.subr.bf16.mxu0 0
    %499 = vmatpush2.bf16.msra.mxu0 0
    %500 = vmatprep.subr.bf16.mxu0 0
    %501 = vmatpush2.bf16.msra.mxu0 0
    %502 = vmatprep.subr.bf16.mxu0 0
    %503 = vmatpush2.bf16.msra.mxu0 0
    %504 = vmatprep.subr.bf16.mxu0 0
    %505 = vmatpush2.bf16.msra.mxu0 0
    %506 = vmatprep.subr.bf16.mxu0 0
    %507 = vmatpush2.bf16.msra.mxu0 0
    %508 = vmatprep.mubr.bf16.mxu0 0
    %509 = vmatmul.mubr.bf16.gmra.mxu0 %v474
    %v510 = vpop.f32.mrf.mxu0
    %v511 = vadd.f32 0.0, %v510
    %v512 = vpop.f32.mrf.mxu0
    %v513 = vpop.f32.mrf.mxu0
    %v514 = vpop.f32.mrf.mxu0
    %515 = vdwg.mxu0
    %517 = vrot.lane.b32.xlu0 %v146, 96
    %v518 = vpop.permute.xlu0 %517
    %v521 = vsel %vm63, %v374, 0
    %523 = vmatprep.subr.bf16.mxu0 0
    %524 = vmatpush1.bf16.msra.mxu0 0
    %525 = vmatprep.subr.bf16.mxu0 0
    %526 = vmatpush1.bf16.msra.mxu0 0
    %527 = vmatprep.subr.bf16.mxu0 0
    %528 = vmatpush1.bf16.msra.mxu0 0
    %529 = vmatprep.subr.bf16.mxu0 0
    %530 = vmatpush1.bf16.msra.mxu0 0
    %531 = vmatprep.subr.bf16.mxu0 0
    %532 = vmatpush1.bf16.msra.mxu0 0
    %533 = vmatprep.subr.bf16.mxu0 0
    %534 = vmatpush1.bf16.msra.mxu0 0
    %535 = vmatprep.subr.bf16.mxu0 0
    %536 = vmatpush1.bf16.msra.mxu0 0
    %537 = vmatprep.subr.bf16.mxu0 0
    %538 = vmatpush1.bf16.msra.mxu0 %v518
    %539 = vmatprep.subr.bf16.mxu0 0
    %540 = vmatpush2.bf16.msra.mxu0 0
    %541 = vmatprep.subr.bf16.mxu0 0
    %542 = vmatpush2.bf16.msra.mxu0 0
    %543 = vmatprep.subr.bf16.mxu0 0
    %544 = vmatpush2.bf16.msra.mxu0 0
    %545 = vmatprep.subr.bf16.mxu0 0
    %546 = vmatpush2.bf16.msra.mxu0 0
    %547 = vmatprep.subr.bf16.mxu0 0
    %548 = vmatpush2.bf16.msra.mxu0 0
    %549 = vmatprep.subr.bf16.mxu0 0
    %550 = vmatpush2.bf16.msra.mxu0 0
    %551 = vmatprep.subr.bf16.mxu0 0
    %552 = vmatpush2.bf16.msra.mxu0 0
    %553 = vmatprep.subr.bf16.mxu0 0
    %554 = vmatpush2.bf16.msra.mxu0 0
    %555 = vmatprep.mubr.bf16.mxu0 0
    %556 = vmatmul.mubr.bf16.gmra.mxu0 %v521
    %v557 = vpop.f32.mrf.mxu0
    %v558 = vadd.f32 0.0, %v557
    %v559 = vpop.f32.mrf.mxu0
    %v560 = vpop.f32.mrf.mxu0
    %v561 = vpop.f32.mrf.mxu0
    %562 = vdwg.mxu0
    %v563 = vadd.f32 %v141, %v417
    %v564 = vadd.f32 %v141, %v464
    %v565 = vadd.f32 %v141, %v511
    %v566 = vadd.f32 %v141, %v558
    %568 = vrot.lane.b32.xlu0 %v142, 120
    %v569 = vpop.permute.xlu0 %568
    %570 = vrot.lane.b32.xlu0 %v143, 120
    %v571 = vpop.permute.xlu0 %570
    %v573 = vsel %vm147, %v569, 0
    %v576 = vsel %vm147, %v571, 0
    %578 = vmatprep.subr.bf16.mxu0 0
    %579 = vmatpush1.bf16.xpose.msra.mxu0 0
    %580 = vmatprep.subr.bf16.mxu0 0
    %581 = vmatpush1.bf16.xpose.msra.mxu0 0
    %582 = vmatprep.subr.bf16.mxu0 0
    %583 = vmatpush1.bf16.xpose.msra.mxu0 0
    %584 = vmatprep.subr.bf16.mxu0 0
    %585 = vmatpush1.bf16.xpose.msra.mxu0 0
    %586 = vmatprep.subr.bf16.mxu0 0
    %587 = vmatpush1.bf16.xpose.msra.mxu0 0
    %588 = vmatprep.subr.bf16.mxu0 0
    %589 = vmatpush1.bf16.xpose.msra.mxu0 0
    %590 = vmatprep.subr.bf16.mxu0 0
    %591 = vmatpush1.bf16.xpose.msra.mxu0 0
    %592 = vmatprep.subr.bf16.mxu0 0
    %593 = vmatpush1.bf16.xpose.msra.mxu0 %v576
    %594 = vmatprep.subr.bf16.mxu0 0
    %595 = vmatpush2.bf16.xpose.msra.mxu0 0
    %596 = vmatprep.subr.bf16.mxu0 0
    %597 = vmatpush2.bf16.xpose.msra.mxu0 0
    %598 = vmatprep.subr.bf16.mxu0 0
    %599 = vmatpush2.bf16.xpose.msra.mxu0 0
    %600 = vmatprep.subr.bf16.mxu0 0
    %601 = vmatpush2.bf16.xpose.msra.mxu0 0
    %602 = vmatprep.subr.bf16.mxu0 0
    %603 = vmatpush2.bf16.xpose.msra.mxu0 0
    %604 = vmatprep.subr.bf16.mxu0 0
    %605 = vmatpush2.bf16.xpose.msra.mxu0 0
    %606 = vmatprep.subr.bf16.mxu0 0
    %607 = vmatpush2.bf16.xpose.msra.mxu0 0
    %608 = vmatprep.subr.bf16.mxu0 0
    %609 = vmatpush2.bf16.xpose.msra.mxu0 0
    %610 = vmatprep.mubr.bf16.mxu0 0
    %611 = vmatmul.mubr.bf16.gmra.mxu0 %v573
    %v612 = vpop.f32.mrf.mxu0
    %v613 = vadd.f32 0.0, %v612
    %v614 = vpop.f32.mrf.mxu0
    %v615 = vpop.f32.mrf.mxu0
    %v616 = vpop.f32.mrf.mxu0
    %617 = vdwg.mxu0
    %618 = vrot.lane.b32.xlu0 %v144, 120
    %v619 = vpop.permute.xlu0 %618
    %v621 = vsel %vm147, %v619, 0
    %623 = vmatprep.subr.bf16.mxu0 0
    %624 = vmatpush1.bf16.xpose.msra.mxu0 0
    %625 = vmatprep.subr.bf16.mxu0 0
    %626 = vmatpush1.bf16.xpose.msra.mxu0 0
    %627 = vmatprep.subr.bf16.mxu0 0
    %628 = vmatpush1.bf16.xpose.msra.mxu0 0
    %629 = vmatprep.subr.bf16.mxu0 0
    %630 = vmatpush1.bf16.xpose.msra.mxu0 0
    %631 = vmatprep.subr.bf16.mxu0 0
    %632 = vmatpush1.bf16.xpose.msra.mxu0 0
    %633 = vmatprep.subr.bf16.mxu0 0
    %634 = vmatpush1.bf16.xpose.msra.mxu0 0
    %635 = vmatprep.subr.bf16.mxu0 0
    %636 = vmatpush1.bf16.xpose.msra.mxu0 0
    %637 = vmatprep.subr.bf16.mxu0 0
    %638 = vmatpush1.bf16.xpose.msra.mxu0 %v621
    %639 = vmatprep.subr.bf16.mxu0 0
    %640 = vmatpush2.bf16.xpose.msra.mxu0 0
    %641 = vmatprep.subr.bf16.mxu0 0
    %642 = vmatpush2.bf16.xpose.msra.mxu0 0
    %643 = vmatprep.subr.bf16.mxu0 0
    %644 = vmatpush2.bf16.xpose.msra.mxu0 0
    %645 = vmatprep.subr.bf16.mxu0 0
    %646 = vmatpush2.bf16.xpose.msra.mxu0 0
    %647 = vmatprep.subr.bf16.mxu0 0
    %648 = vmatpush2.bf16.xpose.msra.mxu0 0
    %649 = vmatprep.subr.bf16.mxu0 0
    %650 = vmatpush2.bf16.xpose.msra.mxu0 0
    %651 = vmatprep.subr.bf16.mxu0 0
    %652 = vmatpush2.bf16.xpose.msra.mxu0 0
    %653 = vmatprep.subr.bf16.mxu0 0
    %654 = vmatpush2.bf16.xpose.msra.mxu0 0
    %655 = vmatprep.mubr.bf16.mxu0 0
    %656 = vmatmul.mubr.bf16.gmra.mxu0 %v573
    %v657 = vpop.f32.mrf.mxu0
    %v658 = vadd.f32 0.0, %v657
    %v659 = vpop.f32.mrf.mxu0
    %v660 = vpop.f32.mrf.mxu0
    %v661 = vpop.f32.mrf.mxu0
    %662 = vdwg.mxu0
    %663 = vrot.lane.b32.xlu0 %v145, 120
    %v664 = vpop.permute.xlu0 %663
    %v666 = vsel %vm147, %v664, 0
    %668 = vmatprep.subr.bf16.mxu0 0
    %669 = vmatpush1.bf16.xpose.msra.mxu0 0
    %670 = vmatprep.subr.bf16.mxu0 0
    %671 = vmatpush1.bf16.xpose.msra.mxu0 0
    %672 = vmatprep.subr.bf16.mxu0 0
    %673 = vmatpush1.bf16.xpose.msra.mxu0 0
    %674 = vmatprep.subr.bf16.mxu0 0
    %675 = vmatpush1.bf16.xpose.msra.mxu0 0
    %676 = vmatprep.subr.bf16.mxu0 0
    %677 = vmatpush1.bf16.xpose.msra.mxu0 0
    %678 = vmatprep.subr.bf16.mxu0 0
    %679 = vmatpush1.bf16.xpose.msra.mxu0 0
    %680 = vmatprep.subr.bf16.mxu0 0
    %681 = vmatpush1.bf16.xpose.msra.mxu0 0
    %682 = vmatprep.subr.bf16.mxu0 0
    %683 = vmatpush1.bf16.xpose.msra.mxu0 %v666
    %684 = vmatprep.subr.bf16.mxu0 0
    %685 = vmatpush2.bf16.xpose.msra.mxu0 0
    %686 = vmatprep.subr.bf16.mxu0 0
    %687 = vmatpush2.bf16.xpose.msra.mxu0 0
    %688 = vmatprep.subr.bf16.mxu0 0
    %689 = vmatpush2.bf16.xpose.msra.mxu0 0
    %690 = vmatprep.subr.bf16.mxu0 0
    %691 = vmatpush2.bf16.xpose.msra.mxu0 0
    %692 = vmatprep.subr.bf16.mxu0 0
    %693 = vmatpush2.bf16.xpose.msra.mxu0 0
    %694 = vmatprep.subr.bf16.mxu0 0
    %695 = vmatpush2.bf16.xpose.msra.mxu0 0
    %696 = vmatprep.subr.bf16.mxu0 0
    %697 = vmatpush2.bf16.xpose.msra.mxu0 0
    %698 = vmatprep.subr.bf16.mxu0 0
    %699 = vmatpush2.bf16.xpose.msra.mxu0 0
    %700 = vmatprep.mubr.bf16.mxu0 0
    %701 = vmatmul.mubr.bf16.gmra.mxu0 %v573
    %v702 = vpop.f32.mrf.mxu0
    %v703 = vadd.f32 0.0, %v702
    %v704 = vpop.f32.mrf.mxu0
    %v705 = vpop.f32.mrf.mxu0
    %v706 = vpop.f32.mrf.mxu0
    %707 = vdwg.mxu0
    %708 = vrot.lane.b32.xlu0 %v146, 120
    %v709 = vpop.permute.xlu0 %708
    %v711 = vsel %vm147, %v709, 0
    %713 = vmatprep.subr.bf16.mxu0 0
    %714 = vmatpush1.bf16.xpose.msra.mxu0 0
    %715 = vmatprep.subr.bf16.mxu0 0
    %716 = vmatpush1.bf16.xpose.msra.mxu0 0
    %717 = vmatprep.subr.bf16.mxu0 0
    %718 = vmatpush1.bf16.xpose.msra.mxu0 0
    %719 = vmatprep.subr.bf16.mxu0 0
    %720 = vmatpush1.bf16.xpose.msra.mxu0 0
    %721 = vmatprep.subr.bf16.mxu0 0
    %722 = vmatpush1.bf16.xpose.msra.mxu0 0
    %723 = vmatprep.subr.bf16.mxu0 0
    %724 = vmatpush1.bf16.xpose.msra.mxu0 0
    %725 = vmatprep.subr.bf16.mxu0 0
    %726 = vmatpush1.bf16.xpose.msra.mxu0 0
    %727 = vmatprep.subr.bf16.mxu0 0
    %728 = vmatpush1.bf16.xpose.msra.mxu0 %v711
    %729 = vmatprep.subr.bf16.mxu0 0
    %730 = vmatpush2.bf16.xpose.msra.mxu0 0
    %731 = vmatprep.subr.bf16.mxu0 0
    %732 = vmatpush2.bf16.xpose.msra.mxu0 0
    %733 = vmatprep.subr.bf16.mxu0 0
    %734 = vmatpush2.bf16.xpose.msra.mxu0 0
    %735 = vmatprep.subr.bf16.mxu0 0
    %736 = vmatpush2.bf16.xpose.msra.mxu0 0
    %737 = vmatprep.subr.bf16.mxu0 0
    %738 = vmatpush2.bf16.xpose.msra.mxu0 0
    %739 = vmatprep.subr.bf16.mxu0 0
    %740 = vmatpush2.bf16.xpose.msra.mxu0 0
    %741 = vmatprep.subr.bf16.mxu0 0
    %742 = vmatpush2.bf16.xpose.msra.mxu0 0
    %743 = vmatprep.subr.bf16.mxu0 0
    %744 = vmatpush2.bf16.xpose.msra.mxu0 0
    %745 = vmatprep.mubr.bf16.mxu0 0
    %746 = vmatmul.mubr.bf16.gmra.mxu0 %v573
    %v747 = vpop.f32.mrf.mxu0
    %v748 = vadd.f32 0.0, %v747
    %v749 = vpop.f32.mrf.mxu0
    %v750 = vpop.f32.mrf.mxu0
    %v751 = vpop.f32.mrf.mxu0
    %752 = vdwg.mxu0
    %v753 = vmul.f32 %v613, 0.17677669
    %v754 = vmul.f32 %v658, 0.17677669
    %v755 = vmul.f32 %v703, 0.17677669
    %v756 = vmul.f32 %v748, 0.17677669
    %v757 = vsel %vm63, %v753, -inf
    %758 = vmax.xlane.f32.xlu0 %v757
    %v759 = vpop.xlane.xlu0 %758
    %v760 = vsel %vm63, %v754, -inf
    %761 = vmax.xlane.f32.xlu0 %v760
    %v762 = vpop.xlane.xlu0 %761
    %v763 = vsel %vm63, %v755, -inf
    %764 = vmax.xlane.f32.xlu0 %v763
    %v765 = vpop.xlane.xlu0 %764
    %v766 = vsel %vm63, %v756, -inf
    %767 = vmax.xlane.f32.xlu0 %v766
    %v768 = vpop.xlane.xlu0 %767
    %v769 = vsub.f32 %v753, %v759
    %v770 = vsub.f32 %v754, %v762
    %v771 = vsub.f32 %v755, %v765
    %v772 = vsub.f32 %v756, %v768
    %v773 = vmul.f32 %v769, 1.442695
    %v774 = vpow.pop %v773
    %v775 = vmul.f32 %v770, 1.442695
    %v776 = vpow.pop %v775
    %v777 = vmul.f32 %v771, 1.442695
    %v778 = vpow.pop %v777
    %v779 = vmul.f32 %v772, 1.442695
    %v780 = vpow.pop %v779
    %v781 = vsel %vm63, %v774, 0.0
    %782 = vadd.xlane.f32.xlu0 %v781
    %v783 = vpop.xlane.xlu0 %782
    %v784 = vsel %vm63, %v776, 0.0
    %785 = vadd.xlane.f32.xlu0 %v784
    %v786 = vpop.xlane.xlu0 %785
    %v787 = vsel %vm63, %v778, 0.0
    %788 = vadd.xlane.f32.xlu0 %v787
    %v789 = vpop.xlane.xlu0 %788
    %v790 = vsel %vm63, %v780, 0.0
    %791 = vadd.xlane.f32.xlu0 %v790
    %v792 = vpop.xlane.xlu0 %791
    %v793 = vrcp.pop %v783
    %v794 = vrcp.pop %v786
    %v795 = vrcp.pop %v789
    %v796 = vrcp.pop %v792
    %v797 = vmul.f32 %v774, %v793
    %v798 = vmul.f32 %v776, %v794
    %v799 = vmul.f32 %v778, %v795
    %v800 = vmul.f32 %v780, %v796
    %v801 = vpack.c.bf16 %v797, %v797
    %v802 = vpack.c.bf16 %v798, %v798
    %v803 = vpack.c.bf16 %v799, %v799
    %v804 = vpack.c.bf16 %v800, %v800
    %805 = vrot.lane.b32.xlu0 %v143, 88
    %v806 = vpop.permute.xlu0 %805
    %v809 = vsel %vm63, %v801, 0
    %811 = vmatprep.subr.bf16.mxu0 0
    %812 = vmatpush1.bf16.msra.mxu0 0
    %813 = vmatprep.subr.bf16.mxu0 0
    %814 = vmatpush1.bf16.msra.mxu0 0
    %815 = vmatprep.subr.bf16.mxu0 0
    %816 = vmatpush1.bf16.msra.mxu0 0
    %817 = vmatprep.subr.bf16.mxu0 0
    %818 = vmatpush1.bf16.msra.mxu0 0
    %819 = vmatprep.subr.bf16.mxu0 0
    %820 = vmatpush1.bf16.msra.mxu0 0
    %821 = vmatprep.subr.bf16.mxu0 0
    %822 = vmatpush1.bf16.msra.mxu0 0
    %823 = vmatprep.subr.bf16.mxu0 0
    %824 = vmatpush1.bf16.msra.mxu0 0
    %825 = vmatprep.subr.bf16.mxu0 0
    %826 = vmatpush1.bf16.msra.mxu0 %v806
    %827 = vmatprep.subr.bf16.mxu0 0
    %828 = vmatpush2.bf16.msra.mxu0 0
    %829 = vmatprep.subr.bf16.mxu0 0
    %830 = vmatpush2.bf16.msra.mxu0 0
    %831 = vmatprep.subr.bf16.mxu0 0
    %832 = vmatpush2.bf16.msra.mxu0 0
    %833 = vmatprep.subr.bf16.mxu0 0
    %834 = vmatpush2.bf16.msra.mxu0 0
    %835 = vmatprep.subr.bf16.mxu0 0
    %836 = vmatpush2.bf16.msra.mxu0 0
    %837 = vmatprep.subr.bf16.mxu0 0
    %838 = vmatpush2.bf16.msra.mxu0 0
    %839 = vmatprep.subr.bf16.mxu0 0
    %840 = vmatpush2.bf16.msra.mxu0 0
    %841 = vmatprep.subr.bf16.mxu0 0
    %842 = vmatpush2.bf16.msra.mxu0 0
    %843 = vmatprep.mubr.bf16.mxu0 0
    %844 = vmatmul.mubr.bf16.gmra.mxu0 %v809
    %v845 = vpop.f32.mrf.mxu0
    %v846 = vadd.f32 0.0, %v845
    %v847 = vpop.f32.mrf.mxu0
    %v848 = vpop.f32.mrf.mxu0
    %v849 = vpop.f32.mrf.mxu0
    %850 = vdwg.mxu0
    %851 = vrot.lane.b32.xlu0 %v144, 88
    %v852 = vpop.permute.xlu0 %851
    %v855 = vsel %vm63, %v802, 0
    %857 = vmatprep.subr.bf16.mxu0 0
    %858 = vmatpush1.bf16.msra.mxu0 0
    %859 = vmatprep.subr.bf16.mxu0 0
    %860 = vmatpush1.bf16.msra.mxu0 0
    %861 = vmatprep.subr.bf16.mxu0 0
    %862 = vmatpush1.bf16.msra.mxu0 0
    %863 = vmatprep.subr.bf16.mxu0 0
    %864 = vmatpush1.bf16.msra.mxu0 0
    %865 = vmatprep.subr.bf16.mxu0 0
    %866 = vmatpush1.bf16.msra.mxu0 0
    %867 = vmatprep.subr.bf16.mxu0 0
    %868 = vmatpush1.bf16.msra.mxu0 0
    %869 = vmatprep.subr.bf16.mxu0 0
    %870 = vmatpush1.bf16.msra.mxu0 0
    %871 = vmatprep.subr.bf16.mxu0 0
    %872 = vmatpush1.bf16.msra.mxu0 %v852
    %873 = vmatprep.subr.bf16.mxu0 0
    %874 = vmatpush2.bf16.msra.mxu0 0
    %875 = vmatprep.subr.bf16.mxu0 0
    %876 = vmatpush2.bf16.msra.mxu0 0
    %877 = vmatprep.subr.bf16.mxu0 0
    %878 = vmatpush2.bf16.msra.mxu0 0
    %879 = vmatprep.subr.bf16.mxu0 0
    %880 = vmatpush2.bf16.msra.mxu0 0
    %881 = vmatprep.subr.bf16.mxu0 0
    %882 = vmatpush2.bf16.msra.mxu0 0
    %883 = vmatprep.subr.bf16.mxu0 0
    %884 = vmatpush2.bf16.msra.mxu0 0
    %885 = vmatprep.subr.bf16.mxu0 0
    %886 = vmatpush2.bf16.msra.mxu0 0
    %887 = vmatprep.subr.bf16.mxu0 0
    %888 = vmatpush2.bf16.msra.mxu0 0
    %889 = vmatprep.mubr.bf16.mxu0 0
    %890 = vmatmul.mubr.bf16.gmra.mxu0 %v855
    %v891 = vpop.f32.mrf.mxu0
    %v892 = vadd.f32 0.0, %v891
    %v893 = vpop.f32.mrf.mxu0
    %v894 = vpop.f32.mrf.mxu0
    %v895 = vpop.f32.mrf.mxu0
    %896 = vdwg.mxu0
    %897 = vrot.lane.b32.xlu0 %v145, 88
    %v898 = vpop.permute.xlu0 %897
    %v901 = vsel %vm63, %v803, 0
    %903 = vmatprep.subr.bf16.mxu0 0
    %904 = vmatpush1.bf16.msra.mxu0 0
    %905 = vmatprep.subr.bf16.mxu0 0
    %906 = vmatpush1.bf16.msra.mxu0 0
    %907 = vmatprep.subr.bf16.mxu0 0
    %908 = vmatpush1.bf16.msra.mxu0 0
    %909 = vmatprep.subr.bf16.mxu0 0
    %910 = vmatpush1.bf16.msra.mxu0 0
    %911 = vmatprep.subr.bf16.mxu0 0
    %912 = vmatpush1.bf16.msra.mxu0 0
    %913 = vmatprep.subr.bf16.mxu0 0
    %914 = vmatpush1.bf16.msra.mxu0 0
    %915 = vmatprep.subr.bf16.mxu0 0
    %916 = vmatpush1.bf16.msra.mxu0 0
    %917 = vmatprep.subr.bf16.mxu0 0
    %918 = vmatpush1.bf16.msra.mxu0 %v898
    %919 = vmatprep.subr.bf16.mxu0 0
    %920 = vmatpush2.bf16.msra.mxu0 0
    %921 = vmatprep.subr.bf16.mxu0 0
    %922 = vmatpush2.bf16.msra.mxu0 0
    %923 = vmatprep.subr.bf16.mxu0 0
    %924 = vmatpush2.bf16.msra.mxu0 0
    %925 = vmatprep.subr.bf16.mxu0 0
    %926 = vmatpush2.bf16.msra.mxu0 0
    %927 = vmatprep.subr.bf16.mxu0 0
    %928 = vmatpush2.bf16.msra.mxu0 0
    %929 = vmatprep.subr.bf16.mxu0 0
    %930 = vmatpush2.bf16.msra.mxu0 0
    %931 = vmatprep.subr.bf16.mxu0 0
    %932 = vmatpush2.bf16.msra.mxu0 0
    %933 = vmatprep.subr.bf16.mxu0 0
    %934 = vmatpush2.bf16.msra.mxu0 0
    %935 = vmatprep.mubr.bf16.mxu0 0
    %936 = vmatmul.mubr.bf16.gmra.mxu0 %v901
    %v937 = vpop.f32.mrf.mxu0
    %v938 = vadd.f32 0.0, %v937
    %v939 = vpop.f32.mrf.mxu0
    %v940 = vpop.f32.mrf.mxu0
    %v941 = vpop.f32.mrf.mxu0
    %942 = vdwg.mxu0
    %943 = vrot.lane.b32.xlu0 %v146, 88
    %v944 = vpop.permute.xlu0 %943
    %v947 = vsel %vm63, %v804, 0
    %949 = vmatprep.subr.bf16.mxu0 0
    %950 = vmatpush1.bf16.msra.mxu0 0
    %951 = vmatprep.subr.bf16.mxu0 0
    %952 = vmatpush1.bf16.msra.mxu0 0
    %953 = vmatprep.subr.bf16.mxu0 0
    %954 = vmatpush1.bf16.msra.mxu0 0
    %955 = vmatprep.subr.bf16.mxu0 0
    %956 = vmatpush1.bf16.msra.mxu0 0
    %957 = vmatprep.subr.bf16.mxu0 0
    %958 = vmatpush1.bf16.msra.mxu0 0
    %959 = vmatprep.subr.bf16.mxu0 0
    %960 = vmatpush1.bf16.msra.mxu0 0
    %961 = vmatprep.subr.bf16.mxu0 0
    %962 = vmatpush1.bf16.msra.mxu0 0
    %963 = vmatprep.subr.bf16.mxu0 0
    %964 = vmatpush1.bf16.msra.mxu0 %v944
    %965 = vmatprep.subr.bf16.mxu0 0
    %966 = vmatpush2.bf16.msra.mxu0 0
    %967 = vmatprep.subr.bf16.mxu0 0
    %968 = vmatpush2.bf16.msra.mxu0 0
    %969 = vmatprep.subr.bf16.mxu0 0
    %970 = vmatpush2.bf16.msra.mxu0 0
    %971 = vmatprep.subr.bf16.mxu0 0
    %972 = vmatpush2.bf16.msra.mxu0 0
    %973 = vmatprep.subr.bf16.mxu0 0
    %974 = vmatpush2.bf16.msra.mxu0 0
    %975 = vmatprep.subr.bf16.mxu0 0
    %976 = vmatpush2.bf16.msra.mxu0 0
    %977 = vmatprep.subr.bf16.mxu0 0
    %978 = vmatpush2.bf16.msra.mxu0 0
    %979 = vmatprep.subr.bf16.mxu0 0
    %980 = vmatpush2.bf16.msra.mxu0 0
    %981 = vmatprep.mubr.bf16.mxu0 0
    %982 = vmatmul.mubr.bf16.gmra.mxu0 %v947
    %v983 = vpop.f32.mrf.mxu0
    %v984 = vadd.f32 0.0, %v983
    %v985 = vpop.f32.mrf.mxu0
    %v986 = vpop.f32.mrf.mxu0
    %v987 = vpop.f32.mrf.mxu0
    %988 = vdwg.mxu0
    %993 = vrot.lane.b32.xlu0 %v846, 8
    %v994 = vpop.permute.xlu0 %993
    %995 = vrot.lane.b32.xlu0 %v892, 8
    %v996 = vpop.permute.xlu0 %995
    %997 = vrot.lane.b32.xlu0 %v938, 8
    %v998 = vpop.permute.xlu0 %997
    %999 = vrot.lane.b32.xlu0 %v984, 8
    %v1000 = vpop.permute.xlu0 %999
    %v1005 = vadd.f32 %v141, %v994
    %v1006 = vadd.f32 %v141, %v996
    %v1007 = vadd.f32 %v141, %v998
    %v1008 = vadd.f32 %v141, %v1000
    %1009 = vrot.lane.b32.xlu0 %v142, 112
    %v1010 = vpop.permute.xlu0 %1009
    %1011 = vrot.lane.b32.xlu0 %v143, 112
    %v1012 = vpop.permute.xlu0 %1011
    %v1014 = vsel %vm147, %v1010, 0
    %v1017 = vsel %vm147, %v1012, 0
    %1019 = vmatprep.subr.bf16.mxu0 0
    %1020 = vmatpush1.bf16.xpose.msra.mxu0 0
    %1021 = vmatprep.subr.bf16.mxu0 0
    %1022 = vmatpush1.bf16.xpose.msra.mxu0 0
    %1023 = vmatprep.subr.bf16.mxu0 0
    %1024 = vmatpush1.bf16.xpose.msra.mxu0 0
    %1025 = vmatprep.subr.bf16.mxu0 0
    %1026 = vmatpush1.bf16.xpose.msra.mxu0 0
    %1027 = vmatprep.subr.bf16.mxu0 0
    %1028 = vmatpush1.bf16.xpose.msra.mxu0 0
    %1029 = vmatprep.subr.bf16.mxu0 0
    %1030 = vmatpush1.bf16.xpose.msra.mxu0 0
    %1031 = vmatprep.subr.bf16.mxu0 0
    %1032 = vmatpush1.bf16.xpose.msra.mxu0 0
    %1033 = vmatprep.subr.bf16.mxu0 0
    %1034 = vmatpush1.bf16.xpose.msra.mxu0 %v1017
    %1035 = vmatprep.subr.bf16.mxu0 0
    %1036 = vmatpush2.bf16.xpose.msra.mxu0 0
    %1037 = vmatprep.subr.bf16.mxu0 0
    %1038 = vmatpush2.bf16.xpose.msra.mxu0 0
    %1039 = vmatprep.subr.bf16.mxu0 0
    %1040 = vmatpush2.bf16.xpose.msra.mxu0 0
    %1041 = vmatprep.subr.bf16.mxu0 0
    %1042 = vmatpush2.bf16.xpose.msra.mxu0 0
    %1043 = vmatprep.subr.bf16.mxu0 0
    %1044 = vmatpush2.bf16.xpose.msra.mxu0 0
    %1045 = vmatprep.subr.bf16.mxu0 0
    %1046 = vmatpush2.bf16.xpose.msra.mxu0 0
    %1047 = vmatprep.subr.bf16.mxu0 0
    %1048 = vmatpush2.bf16.xpose.msra.mxu0 0
    %1049 = vmatprep.subr.bf16.mxu0 0
    %1050 = vmatpush2.bf16.xpose.msra.mxu0 0
    %1051 = vmatprep.mubr.bf16.mxu0 0
    %1052 = vmatmul.mubr.bf16.gmra.mxu0 %v1014
    %v1053 = vpop.f32.mrf.mxu0
    %v1054 = vadd.f32 0.0, %v1053
    %v1055 = vpop.f32.mrf.mxu0
    %v1056 = vpop.f32.mrf.mxu0
    %v1057 = vpop.f32.mrf.mxu0
    %1058 = vdwg.mxu0
    %1059 = vrot.lane.b32.xlu0 %v144, 112
    %v1060 = vpop.permute.xlu0 %1059
    %v1062 = vsel %vm147, %v1060, 0
    %1064 = vmatprep.subr.bf16.mxu0 0
    %1065 = vmatpush1.bf16.xpose.msra.mxu0 0
    %1066 = vmatprep.subr.bf16.mxu0 0
    %1067 = vmatpush1.bf16.xpose.msra.mxu0 0
    %1068 = vmatprep.subr.bf16.mxu0 0
    %1069 = vmatpush1.bf16.xpose.msra.mxu0 0
    %1070 = vmatprep.subr.bf16.mxu0 0
    %1071 = vmatpush1.bf16.xpose.msra.mxu0 0
    %1072 = vmatprep.subr.bf16.mxu0 0
    %1073 = vmatpush1.bf16.xpose.msra.mxu0 0
    %1074 = vmatprep.subr.bf16.mxu0 0
    %1075 = vmatpush1.bf16.xpose.msra.mxu0 0
    %1076 = vmatprep.subr.bf16.mxu0 0
    %1077 = vmatpush1.bf16.xpose.msra.mxu0 0
    %1078 = vmatprep.subr.bf16.mxu0 0
    %1079 = vmatpush1.bf16.xpose.msra.mxu0 %v1062
    %1080 = vmatprep.subr.bf16.mxu0 0
    %1081 = vmatpush2.bf16.xpose.msra.mxu0 0
    %1082 = vmatprep.subr.bf16.mxu0 0
    %1083 = vmatpush2.bf16.xpose.msra.mxu0 0
    %1084 = vmatprep.subr.bf16.mxu0 0
    %1085 = vmatpush2.bf16.xpose.msra.mxu0 0
    %1086 = vmatprep.subr.bf16.mxu0 0
    %1087 = vmatpush2.bf16.xpose.msra.mxu0 0
    %1088 = vmatprep.subr.bf16.mxu0 0
    %1089 = vmatpush2.bf16.xpose.msra.mxu0 0
    %1090 = vmatprep.subr.bf16.mxu0 0
    %1091 = vmatpush2.bf16.xpose.msra.mxu0 0
    %1092 = vmatprep.subr.bf16.mxu0 0
    %1093 = vmatpush2.bf16.xpose.msra.mxu0 0
    %1094 = vmatprep.subr.bf16.mxu0 0
    %1095 = vmatpush2.bf16.xpose.msra.mxu0 0
    %1096 = vmatprep.mubr.bf16.mxu0 0
    %1097 = vmatmul.mubr.bf16.gmra.mxu0 %v1014
    %v1098 = vpop.f32.mrf.mxu0
    %v1099 = vadd.f32 0.0, %v1098
    %v1100 = vpop.f32.mrf.mxu0
    %v1101 = vpop.f32.mrf.mxu0
    %v1102 = vpop.f32.mrf.mxu0
    %1103 = vdwg.mxu0
    %1104 = vrot.lane.b32.xlu0 %v145, 112
    %v1105 = vpop.permute.xlu0 %1104
    %v1107 = vsel %vm147, %v1105, 0
    %1109 = vmatprep.subr.bf16.mxu0 0
    %1110 = vmatpush1.bf16.xpose.msra.mxu0 0
    %1111 = vmatprep.subr.bf16.mxu0 0
    %1112 = vmatpush1.bf16.xpose.msra.mxu0 0
    %1113 = vmatprep.subr.bf16.mxu0 0
    %1114 = vmatpush1.bf16.xpose.msra.mxu0 0
    %1115 = vmatprep.subr.bf16.mxu0 0
    %1116 = vmatpush1.bf16.xpose.msra.mxu0 0
    %1117 = vmatprep.subr.bf16.mxu0 0
    %1118 = vmatpush1.bf16.xpose.msra.mxu0 0
    %1119 = vmatprep.subr.bf16.mxu0 0
    %1120 = vmatpush1.bf16.xpose.msra.mxu0 0
    %1121 = vmatprep.subr.bf16.mxu0 0
    %1122 = vmatpush1.bf16.xpose.msra.mxu0 0
    %1123 = vmatprep.subr.bf16.mxu0 0
    %1124 = vmatpush1.bf16.xpose.msra.mxu0 %v1107
    %1125 = vmatprep.subr.bf16.mxu0 0
    %1126 = vmatpush2.bf16.xpose.msra.mxu0 0
    %1127 = vmatprep.subr.bf16.mxu0 0
    %1128 = vmatpush2.bf16.xpose.msra.mxu0 0
    %1129 = vmatprep.subr.bf16.mxu0 0
    %1130 = vmatpush2.bf16.xpose.msra.mxu0 0
    %1131 = vmatprep.subr.bf16.mxu0 0
    %1132 = vmatpush2.bf16.xpose.msra.mxu0 0
    %1133 = vmatprep.subr.bf16.mxu0 0
    %1134 = vmatpush2.bf16.xpose.msra.mxu0 0
    %1135 = vmatprep.subr.bf16.mxu0 0
    %1136 = vmatpush2.bf16.xpose.msra.mxu0 0
    %1137 = vmatprep.subr.bf16.mxu0 0
    %1138 = vmatpush2.bf16.xpose.msra.mxu0 0
    %1139 = vmatprep.subr.bf16.mxu0 0
    %1140 = vmatpush2.bf16.xpose.msra.mxu0 0
    %1141 = vmatprep.mubr.bf16.mxu0 0
    %1142 = vmatmul.mubr.bf16.gmra.mxu0 %v1014
    %v1143 = vpop.f32.mrf.mxu0
    %v1144 = vadd.f32 0.0, %v1143
    %v1145 = vpop.f32.mrf.mxu0
    %v1146 = vpop.f32.mrf.mxu0
    %v1147 = vpop.f32.mrf.mxu0
    %1148 = vdwg.mxu0
    %1149 = vrot.lane.b32.xlu0 %v146, 112
    %v1150 = vpop.permute.xlu0 %1149
    %v1152 = vsel %vm147, %v1150, 0
    %1154 = vmatprep.subr.bf16.mxu0 0
    %1155 = vmatpush1.bf16.xpose.msra.mxu0 0
    %1156 = vmatprep.subr.bf16.mxu0 0
    %1157 = vmatpush1.bf16.xpose.msra.mxu0 0
    %1158 = vmatprep.subr.bf16.mxu0 0
    %1159 = vmatpush1.bf16.xpose.msra.mxu0 0
    %1160 = vmatprep.subr.bf16.mxu0 0
    %1161 = vmatpush1.bf16.xpose.msra.mxu0 0
    %1162 = vmatprep.subr.bf16.mxu0 0
    %1163 = vmatpush1.bf16.xpose.msra.mxu0 0
    %1164 = vmatprep.subr.bf16.mxu0 0
    %1165 = vmatpush1.bf16.xpose.msra.mxu0 0
    %1166 = vmatprep.subr.bf16.mxu0 0
    %1167 = vmatpush1.bf16.xpose.msra.mxu0 0
    %1168 = vmatprep.subr.bf16.mxu0 0
    %1169 = vmatpush1.bf16.xpose.msra.mxu0 %v1152
    %1170 = vmatprep.subr.bf16.mxu0 0
    %1171 = vmatpush2.bf16.xpose.msra.mxu0 0
    %1172 = vmatprep.subr.bf16.mxu0 0
    %1173 = vmatpush2.bf16.xpose.msra.mxu0 0
    %1174 = vmatprep.subr.bf16.mxu0 0
    %1175 = vmatpush2.bf16.xpose.msra.mxu0 0
    %1176 = vmatprep.subr.bf16.mxu0 0
    %1177 = vmatpush2.bf16.xpose.msra.mxu0 0
    %1178 = vmatprep.subr.bf16.mxu0 0
    %1179 = vmatpush2.bf16.xpose.msra.mxu0 0
    %1180 = vmatprep.subr.bf16.mxu0 0
    %1181 = vmatpush2.bf16.xpose.msra.mxu0 0
    %1182 = vmatprep.subr.bf16.mxu0 0
    %1183 = vmatpush2.bf16.xpose.msra.mxu0 0
    %1184 = vmatprep.subr.bf16.mxu0 0
    %1185 = vmatpush2.bf16.xpose.msra.mxu0 0
    %1186 = vmatprep.mubr.bf16.mxu0 0
    %1187 = vmatmul.mubr.bf16.gmra.mxu0 %v1014
    %v1188 = vpop.f32.mrf.mxu0
    %v1189 = vadd.f32 0.0, %v1188
    %v1190 = vpop.f32.mrf.mxu0
    %v1191 = vpop.f32.mrf.mxu0
    %v1192 = vpop.f32.mrf.mxu0
    %1193 = vdwg.mxu0
    %v1194 = vmul.f32 %v1054, 0.17677669
    %v1195 = vmul.f32 %v1099, 0.17677669
    %v1196 = vmul.f32 %v1144, 0.17677669
    %v1197 = vmul.f32 %v1189, 0.17677669
    %v1198 = vsel %vm63, %v1194, -inf
    %1199 = vmax.xlane.f32.xlu0 %v1198
    %v1200 = vpop.xlane.xlu0 %1199
    %v1201 = vsel %vm63, %v1195, -inf
    %1202 = vmax.xlane.f32.xlu0 %v1201
    %v1203 = vpop.xlane.xlu0 %1202
    %v1204 = vsel %vm63, %v1196, -inf
    %1205 = vmax.xlane.f32.xlu0 %v1204
    %v1206 = vpop.xlane.xlu0 %1205
    %v1207 = vsel %vm63, %v1197, -inf
    %1208 = vmax.xlane.f32.xlu0 %v1207
    %v1209 = vpop.xlane.xlu0 %1208
    %v1210 = vsub.f32 %v1194, %v1200
    %v1211 = vsub.f32 %v1195, %v1203
    %v1212 = vsub.f32 %v1196, %v1206
    %v1213 = vsub.f32 %v1197, %v1209
    %v1214 = vmul.f32 %v1210, 1.442695
    %v1215 = vpow.pop %v1214
    %v1216 = vmul.f32 %v1211, 1.442695
    %v1217 = vpow.pop %v1216
    %v1218 = vmul.f32 %v1212, 1.442695
    %v1219 = vpow.pop %v1218
    %v1220 = vmul.f32 %v1213, 1.442695
    %v1221 = vpow.pop %v1220
    %v1222 = vsel %vm63, %v1215, 0.0
    %1223 = vadd.xlane.f32.xlu0 %v1222
    %v1224 = vpop.xlane.xlu0 %1223
    %v1225 = vsel %vm63, %v1217, 0.0
    %1226 = vadd.xlane.f32.xlu0 %v1225
    %v1227 = vpop.xlane.xlu0 %1226
    %v1228 = vsel %vm63, %v1219, 0.0
    %1229 = vadd.xlane.f32.xlu0 %v1228
    %v1230 = vpop.xlane.xlu0 %1229
    %v1231 = vsel %vm63, %v1221, 0.0
    %1232 = vadd.xlane.f32.xlu0 %v1231
    %v1233 = vpop.xlane.xlu0 %1232
    %v1234 = vrcp.pop %v1224
    %v1235 = vrcp.pop %v1227
    %v1236 = vrcp.pop %v1230
    %v1237 = vrcp.pop %v1233
    %v1238 = vmul.f32 %v1215, %v1234
    %v1239 = vmul.f32 %v1217, %v1235
    %v1240 = vmul.f32 %v1219, %v1236
    %v1241 = vmul.f32 %v1221, %v1237
    %v1242 = vpack.c.bf16 %v1238, %v1238
    %v1243 = vpack.c.bf16 %v1239, %v1239
    %v1244 = vpack.c.bf16 %v1240, %v1240
    %v1245 = vpack.c.bf16 %v1241, %v1241
    %1246 = vrot.lane.b32.xlu0 %v143, 80
    %v1247 = vpop.permute.xlu0 %1246
    %v1250 = vsel %vm63, %v1242, 0
    %1252 = vmatprep.subr.bf16.mxu0 0
    %1253 = vmatpush1.bf16.msra.mxu0 0
    %1254 = vmatprep.subr.bf16.mxu0 0
    %1255 = vmatpush1.bf16.msra.mxu0 0
    %1256 = vmatprep.subr.bf16.mxu0 0
    %1257 = vmatpush1.bf16.msra.mxu0 0
    %1258 = vmatprep.subr.bf16.mxu0 0
    %1259 = vmatpush1.bf16.msra.mxu0 0
    %1260 = vmatprep.subr.bf16.mxu0 0
    %1261 = vmatpush1.bf16.msra.mxu0 0
    %1262 = vmatprep.subr.bf16.mxu0 0
    %1263 = vmatpush1.bf16.msra.mxu0 0
    %1264 = vmatprep.subr.bf16.mxu0 0
    %1265 = vmatpush1.bf16.msra.mxu0 0
    %1266 = vmatprep.subr.bf16.mxu0 0
    %1267 = vmatpush1.bf16.msra.mxu0 %v1247
    %1268 = vmatprep.subr.bf16.mxu0 0
    %1269 = vmatpush2.bf16.msra.mxu0 0
    %1270 = vmatprep.subr.bf16.mxu0 0
    %1271 = vmatpush2.bf16.msra.mxu0 0
    %1272 = vmatprep.subr.bf16.mxu0 0
    %1273 = vmatpush2.bf16.msra.mxu0 0
    %1274 = vmatprep.subr.bf16.mxu0 0
    %1275 = vmatpush2.bf16.msra.mxu0 0
    %1276 = vmatprep.subr.bf16.mxu0 0
    %1277 = vmatpush2.bf16.msra.mxu0 0
    %1278 = vmatprep.subr.bf16.mxu0 0
    %1279 = vmatpush2.bf16.msra.mxu0 0
    %1280 = vmatprep.subr.bf16.mxu0 0
    %1281 = vmatpush2.bf16.msra.mxu0 0
    %1282 = vmatprep.subr.bf16.mxu0 0
    %1283 = vmatpush2.bf16.msra.mxu0 0
    %1284 = vmatprep.mubr.bf16.mxu0 0
    %1285 = vmatmul.mubr.bf16.gmra.mxu0 %v1250
    %v1286 = vpop.f32.mrf.mxu0
    %v1287 = vadd.f32 0.0, %v1286
    %v1288 = vpop.f32.mrf.mxu0
    %v1289 = vpop.f32.mrf.mxu0
    %v1290 = vpop.f32.mrf.mxu0
    %1291 = vdwg.mxu0
    %1292 = vrot.lane.b32.xlu0 %v144, 80
    %v1293 = vpop.permute.xlu0 %1292
    %v1296 = vsel %vm63, %v1243, 0
    %1298 = vmatprep.subr.bf16.mxu0 0
    %1299 = vmatpush1.bf16.msra.mxu0 0
    %1300 = vmatprep.subr.bf16.mxu0 0
    %1301 = vmatpush1.bf16.msra.mxu0 0
    %1302 = vmatprep.subr.bf16.mxu0 0
    %1303 = vmatpush1.bf16.msra.mxu0 0
    %1304 = vmatprep.subr.bf16.mxu0 0
    %1305 = vmatpush1.bf16.msra.mxu0 0
    %1306 = vmatprep.subr.bf16.mxu0 0
    %1307 = vmatpush1.bf16.msra.mxu0 0
    %1308 = vmatprep.subr.bf16.mxu0 0
    %1309 = vmatpush1.bf16.msra.mxu0 0
    %1310 = vmatprep.subr.bf16.mxu0 0
    %1311 = vmatpush1.bf16.msra.mxu0 0
    %1312 = vmatprep.subr.bf16.mxu0 0
    %1313 = vmatpush1.bf16.msra.mxu0 %v1293
    %1314 = vmatprep.subr.bf16.mxu0 0
    %1315 = vmatpush2.bf16.msra.mxu0 0
    %1316 = vmatprep.subr.bf16.mxu0 0
    %1317 = vmatpush2.bf16.msra.mxu0 0
    %1318 = vmatprep.subr.bf16.mxu0 0
    %1319 = vmatpush2.bf16.msra.mxu0 0
    %1320 = vmatprep.subr.bf16.mxu0 0
    %1321 = vmatpush2.bf16.msra.mxu0 0
    %1322 = vmatprep.subr.bf16.mxu0 0
    %1323 = vmatpush2.bf16.msra.mxu0 0
    %1324 = vmatprep.subr.bf16.mxu0 0
    %1325 = vmatpush2.bf16.msra.mxu0 0
    %1326 = vmatprep.subr.bf16.mxu0 0
    %1327 = vmatpush2.bf16.msra.mxu0 0
    %1328 = vmatprep.subr.bf16.mxu0 0
    %1329 = vmatpush2.bf16.msra.mxu0 0
    %1330 = vmatprep.mubr.bf16.mxu0 0
    %1331 = vmatmul.mubr.bf16.gmra.mxu0 %v1296
    %v1332 = vpop.f32.mrf.mxu0
    %v1333 = vadd.f32 0.0, %v1332
    %v1334 = vpop.f32.mrf.mxu0
    %v1335 = vpop.f32.mrf.mxu0
    %v1336 = vpop.f32.mrf.mxu0
    %1337 = vdwg.mxu0
    %1338 = vrot.lane.b32.xlu0 %v145, 80
    %v1339 = vpop.permute.xlu0 %1338
    %v1342 = vsel %vm63, %v1244, 0
    %1344 = vmatprep.subr.bf16.mxu0 0
    %1345 = vmatpush1.bf16.msra.mxu0 0
    %1346 = vmatprep.subr.bf16.mxu0 0
    %1347 = vmatpush1.bf16.msra.mxu0 0
    %1348 = vmatprep.subr.bf16.mxu0 0
    %1349 = vmatpush1.bf16.msra.mxu0 0
    %1350 = vmatprep.subr.bf16.mxu0 0
    %1351 = vmatpush1.bf16.msra.mxu0 0
    %1352 = vmatprep.subr.bf16.mxu0 0
    %1353 = vmatpush1.bf16.msra.mxu0 0
    %1354 = vmatprep.subr.bf16.mxu0 0
    %1355 = vmatpush1.bf16.msra.mxu0 0
    %1356 = vmatprep.subr.bf16.mxu0 0
    %1357 = vmatpush1.bf16.msra.mxu0 0
    %1358 = vmatprep.subr.bf16.mxu0 0
    %1359 = vmatpush1.bf16.msra.mxu0 %v1339
    %1360 = vmatprep.subr.bf16.mxu0 0
    %1361 = vmatpush2.bf16.msra.mxu0 0
    %1362 = vmatprep.subr.bf16.mxu0 0
    %1363 = vmatpush2.bf16.msra.mxu0 0
    %1364 = vmatprep.subr.bf16.mxu0 0
    %1365 = vmatpush2.bf16.msra.mxu0 0
    %1366 = vmatprep.subr.bf16.mxu0 0
    %1367 = vmatpush2.bf16.msra.mxu0 0
    %1368 = vmatprep.subr.bf16.mxu0 0
    %1369 = vmatpush2.bf16.msra.mxu0 0
    %1370 = vmatprep.subr.bf16.mxu0 0
    %1371 = vmatpush2.bf16.msra.mxu0 0
    %1372 = vmatprep.subr.bf16.mxu0 0
    %1373 = vmatpush2.bf16.msra.mxu0 0
    %1374 = vmatprep.subr.bf16.mxu0 0
    %1375 = vmatpush2.bf16.msra.mxu0 0
    %1376 = vmatprep.mubr.bf16.mxu0 0
    %1377 = vmatmul.mubr.bf16.gmra.mxu0 %v1342
    %v1378 = vpop.f32.mrf.mxu0
    %v1379 = vadd.f32 0.0, %v1378
    %v1380 = vpop.f32.mrf.mxu0
    %v1381 = vpop.f32.mrf.mxu0
    %v1382 = vpop.f32.mrf.mxu0
    %1383 = vdwg.mxu0
    %1384 = vrot.lane.b32.xlu0 %v146, 80
    %v1385 = vpop.permute.xlu0 %1384
    %v1388 = vsel %vm63, %v1245, 0
    %1390 = vmatprep.subr.bf16.mxu0 0
    %1391 = vmatpush1.bf16.msra.mxu0 0
    %1392 = vmatprep.subr.bf16.mxu0 0
    %1393 = vmatpush1.bf16.msra.mxu0 0
    %1394 = vmatprep.subr.bf16.mxu0 0
    %1395 = vmatpush1.bf16.msra.mxu0 0
    %1396 = vmatprep.subr.bf16.mxu0 0
    %1397 = vmatpush1.bf16.msra.mxu0 0
    %1398 = vmatprep.subr.bf16.mxu0 0
    %1399 = vmatpush1.bf16.msra.mxu0 0
    %1400 = vmatprep.subr.bf16.mxu0 0
    %1401 = vmatpush1.bf16.msra.mxu0 0
    %1402 = vmatprep.subr.bf16.mxu0 0
    %1403 = vmatpush1.bf16.msra.mxu0 0
    %1404 = vmatprep.subr.bf16.mxu0 0
    %1405 = vmatpush1.bf16.msra.mxu0 %v1385
    %1406 = vmatprep.subr.bf16.mxu0 0
    %1407 = vmatpush2.bf16.msra.mxu0 0
    %1408 = vmatprep.subr.bf16.mxu0 0
    %1409 = vmatpush2.bf16.msra.mxu0 0
    %1410 = vmatprep.subr.bf16.mxu0 0
    %1411 = vmatpush2.bf16.msra.mxu0 0
    %1412 = vmatprep.subr.bf16.mxu0 0
    %1413 = vmatpush2.bf16.msra.mxu0 0
    %1414 = vmatprep.subr.bf16.mxu0 0
    %1415 = vmatpush2.bf16.msra.mxu0 0
    %1416 = vmatprep.subr.bf16.mxu0 0
    %1417 = vmatpush2.bf16.msra.mxu0 0
    %1418 = vmatprep.subr.bf16.mxu0 0
    %1419 = vmatpush2.bf16.msra.mxu0 0
    %1420 = vmatprep.subr.bf16.mxu0 0
    %1421 = vmatpush2.bf16.msra.mxu0 0
    %1422 = vmatprep.mubr.bf16.mxu0 0
    %1423 = vmatmul.mubr.bf16.gmra.mxu0 %v1388
    %v1424 = vpop.f32.mrf.mxu0
    %v1425 = vadd.f32 0.0, %v1424
    %v1426 = vpop.f32.mrf.mxu0
    %v1427 = vpop.f32.mrf.mxu0
    %v1428 = vpop.f32.mrf.mxu0
    %1429 = vdwg.mxu0
    %1434 = vrot.lane.b32.xlu0 %v1287, 16
    %v1435 = vpop.permute.xlu0 %1434
    %1436 = vrot.lane.b32.xlu0 %v1333, 16
    %v1437 = vpop.permute.xlu0 %1436
    %1438 = vrot.lane.b32.xlu0 %v1379, 16
    %v1439 = vpop.permute.xlu0 %1438
    %1440 = vrot.lane.b32.xlu0 %v1425, 16
    %v1441 = vpop.permute.xlu0 %1440
    %v1446 = vadd.f32 %v141, %v1435
    %v1447 = vadd.f32 %v141, %v1437
    %v1448 = vadd.f32 %v141, %v1439
    %v1449 = vadd.f32 %v141, %v1441
    %1450 = vrot.lane.b32.xlu0 %v142, 104
    %v1451 = vpop.permute.xlu0 %1450
    %1452 = vrot.lane.b32.xlu0 %v143, 104
    %v1453 = vpop.permute.xlu0 %1452
    %v1455 = vsel %vm147, %v1451, 0
    %v1458 = vsel %vm147, %v1453, 0
    %1460 = vmatprep.subr.bf16.mxu0 0
    %1461 = vmatpush1.bf16.xpose.msra.mxu0 0
    %1462 = vmatprep.subr.bf16.mxu0 0
    %1463 = vmatpush1.bf16.xpose.msra.mxu0 0
    %1464 = vmatprep.subr.bf16.mxu0 0
    %1465 = vmatpush1.bf16.xpose.msra.mxu0 0
    %1466 = vmatprep.subr.bf16.mxu0 0
    %1467 = vmatpush1.bf16.xpose.msra.mxu0 0
    %1468 = vmatprep.subr.bf16.mxu0 0
    %1469 = vmatpush1.bf16.xpose.msra.mxu0 0
    %1470 = vmatprep.subr.bf16.mxu0 0
    %1471 = vmatpush1.bf16.xpose.msra.mxu0 0
    %1472 = vmatprep.subr.bf16.mxu0 0
    %1473 = vmatpush1.bf16.xpose.msra.mxu0 0
    %1474 = vmatprep.subr.bf16.mxu0 0
    %1475 = vmatpush1.bf16.xpose.msra.mxu0 %v1458
    %1476 = vmatprep.subr.bf16.mxu0 0
    %1477 = vmatpush2.bf16.xpose.msra.mxu0 0
    %1478 = vmatprep.subr.bf16.mxu0 0
    %1479 = vmatpush2.bf16.xpose.msra.mxu0 0
    %1480 = vmatprep.subr.bf16.mxu0 0
    %1481 = vmatpush2.bf16.xpose.msra.mxu0 0
    %1482 = vmatprep.subr.bf16.mxu0 0
    %1483 = vmatpush2.bf16.xpose.msra.mxu0 0
    %1484 = vmatprep.subr.bf16.mxu0 0
    %1485 = vmatpush2.bf16.xpose.msra.mxu0 0
    %1486 = vmatprep.subr.bf16.mxu0 0
    %1487 = vmatpush2.bf16.xpose.msra.mxu0 0
    %1488 = vmatprep.subr.bf16.mxu0 0
    %1489 = vmatpush2.bf16.xpose.msra.mxu0 0
    %1490 = vmatprep.subr.bf16.mxu0 0
    %1491 = vmatpush2.bf16.xpose.msra.mxu0 0
    %1492 = vmatprep.mubr.bf16.mxu0 0
    %1493 = vmatmul.mubr.bf16.gmra.mxu0 %v1455
    %v1494 = vpop.f32.mrf.mxu0
    %v1495 = vadd.f32 0.0, %v1494
    %v1496 = vpop.f32.mrf.mxu0
    %v1497 = vpop.f32.mrf.mxu0
    %v1498 = vpop.f32.mrf.mxu0
    %1499 = vdwg.mxu0
    %1500 = vrot.lane.b32.xlu0 %v144, 104
    %v1501 = vpop.permute.xlu0 %1500
    %v1503 = vsel %vm147, %v1501, 0
    %1505 = vmatprep.subr.bf16.mxu0 0
    %1506 = vmatpush1.bf16.xpose.msra.mxu0 0
    %1507 = vmatprep.subr.bf16.mxu0 0
    %1508 = vmatpush1.bf16.xpose.msra.mxu0 0
    %1509 = vmatprep.subr.bf16.mxu0 0
    %1510 = vmatpush1.bf16.xpose.msra.mxu0 0
    %1511 = vmatprep.subr.bf16.mxu0 0
    %1512 = vmatpush1.bf16.xpose.msra.mxu0 0
    %1513 = vmatprep.subr.bf16.mxu0 0
    %1514 = vmatpush1.bf16.xpose.msra.mxu0 0
    %1515 = vmatprep.subr.bf16.mxu0 0
    %1516 = vmatpush1.bf16.xpose.msra.mxu0 0
    %1517 = vmatprep.subr.bf16.mxu0 0
    %1518 = vmatpush1.bf16.xpose.msra.mxu0 0
    %1519 = vmatprep.subr.bf16.mxu0 0
    %1520 = vmatpush1.bf16.xpose.msra.mxu0 %v1503
    %1521 = vmatprep.subr.bf16.mxu0 0
    %1522 = vmatpush2.bf16.xpose.msra.mxu0 0
    %1523 = vmatprep.subr.bf16.mxu0 0
    %1524 = vmatpush2.bf16.xpose.msra.mxu0 0
    %1525 = vmatprep.subr.bf16.mxu0 0
    %1526 = vmatpush2.bf16.xpose.msra.mxu0 0
    %1527 = vmatprep.subr.bf16.mxu0 0
    %1528 = vmatpush2.bf16.xpose.msra.mxu0 0
    %1529 = vmatprep.subr.bf16.mxu0 0
    %1530 = vmatpush2.bf16.xpose.msra.mxu0 0
    %1531 = vmatprep.subr.bf16.mxu0 0
    %1532 = vmatpush2.bf16.xpose.msra.mxu0 0
    %1533 = vmatprep.subr.bf16.mxu0 0
    %1534 = vmatpush2.bf16.xpose.msra.mxu0 0
    %1535 = vmatprep.subr.bf16.mxu0 0
    %1536 = vmatpush2.bf16.xpose.msra.mxu0 0
    %1537 = vmatprep.mubr.bf16.mxu0 0
    %1538 = vmatmul.mubr.bf16.gmra.mxu0 %v1455
    %v1539 = vpop.f32.mrf.mxu0
    %v1540 = vadd.f32 0.0, %v1539
    %v1541 = vpop.f32.mrf.mxu0
    %v1542 = vpop.f32.mrf.mxu0
    %v1543 = vpop.f32.mrf.mxu0
    %1544 = vdwg.mxu0
    %1545 = vrot.lane.b32.xlu0 %v145, 104
    %v1546 = vpop.permute.xlu0 %1545
    %v1548 = vsel %vm147, %v1546, 0
    %1550 = vmatprep.subr.bf16.mxu0 0
    %1551 = vmatpush1.bf16.xpose.msra.mxu0 0
    %1552 = vmatprep.subr.bf16.mxu0 0
    %1553 = vmatpush1.bf16.xpose.msra.mxu0 0
    %1554 = vmatprep.subr.bf16.mxu0 0
    %1555 = vmatpush1.bf16.xpose.msra.mxu0 0
    %1556 = vmatprep.subr.bf16.mxu0 0
    %1557 = vmatpush1.bf16.xpose.msra.mxu0 0
    %1558 = vmatprep.subr.bf16.mxu0 0
    %1559 = vmatpush1.bf16.xpose.msra.mxu0 0
    %1560 = vmatprep.subr.bf16.mxu0 0
    %1561 = vmatpush1.bf16.xpose.msra.mxu0 0
    %1562 = vmatprep.subr.bf16.mxu0 0
    %1563 = vmatpush1.bf16.xpose.msra.mxu0 0
    %1564 = vmatprep.subr.bf16.mxu0 0
    %1565 = vmatpush1.bf16.xpose.msra.mxu0 %v1548
    %1566 = vmatprep.subr.bf16.mxu0 0
    %1567 = vmatpush2.bf16.xpose.msra.mxu0 0
    %1568 = vmatprep.subr.bf16.mxu0 0
    %1569 = vmatpush2.bf16.xpose.msra.mxu0 0
    %1570 = vmatprep.subr.bf16.mxu0 0
    %1571 = vmatpush2.bf16.xpose.msra.mxu0 0
    %1572 = vmatprep.subr.bf16.mxu0 0
    %1573 = vmatpush2.bf16.xpose.msra.mxu0 0
    %1574 = vmatprep.subr.bf16.mxu0 0
    %1575 = vmatpush2.bf16.xpose.msra.mxu0 0
    %1576 = vmatprep.subr.bf16.mxu0 0
    %1577 = vmatpush2.bf16.xpose.msra.mxu0 0
    %1578 = vmatprep.subr.bf16.mxu0 0
    %1579 = vmatpush2.bf16.xpose.msra.mxu0 0
    %1580 = vmatprep.subr.bf16.mxu0 0
    %1581 = vmatpush2.bf16.xpose.msra.mxu0 0
    %1582 = vmatprep.mubr.bf16.mxu0 0
    %1583 = vmatmul.mubr.bf16.gmra.mxu0 %v1455
    %v1584 = vpop.f32.mrf.mxu0
    %v1585 = vadd.f32 0.0, %v1584
    %v1586 = vpop.f32.mrf.mxu0
    %v1587 = vpop.f32.mrf.mxu0
    %v1588 = vpop.f32.mrf.mxu0
    %1589 = vdwg.mxu0
    %1590 = vrot.lane.b32.xlu0 %v146, 104
    %v1591 = vpop.permute.xlu0 %1590
    %v1593 = vsel %vm147, %v1591, 0
    %1595 = vmatprep.subr.bf16.mxu0 0
    %1596 = vmatpush1.bf16.xpose.msra.mxu0 0
    %1597 = vmatprep.subr.bf16.mxu0 0
    %1598 = vmatpush1.bf16.xpose.msra.mxu0 0
    %1599 = vmatprep.subr.bf16.mxu0 0
    %1600 = vmatpush1.bf16.xpose.msra.mxu0 0
    %1601 = vmatprep.subr.bf16.mxu0 0
    %1602 = vmatpush1.bf16.xpose.msra.mxu0 0
    %1603 = vmatprep.subr.bf16.mxu0 0
    %1604 = vmatpush1.bf16.xpose.msra.mxu0 0
    %1605 = vmatprep.subr.bf16.mxu0 0
    %1606 = vmatpush1.bf16.xpose.msra.mxu0 0
    %1607 = vmatprep.subr.bf16.mxu0 0
    %1608 = vmatpush1.bf16.xpose.msra.mxu0 0
    %1609 = vmatprep.subr.bf16.mxu0 0
    %1610 = vmatpush1.bf16.xpose.msra.mxu0 %v1593
    %1611 = vmatprep.subr.bf16.mxu0 0
    %1612 = vmatpush2.bf16.xpose.msra.mxu0 0
    %1613 = vmatprep.subr.bf16.mxu0 0
    %1614 = vmatpush2.bf16.xpose.msra.mxu0 0
    %1615 = vmatprep.subr.bf16.mxu0 0
    %1616 = vmatpush2.bf16.xpose.msra.mxu0 0
    %1617 = vmatprep.subr.bf16.mxu0 0
    %1618 = vmatpush2.bf16.xpose.msra.mxu0 0
    %1619 = vmatprep.subr.bf16.mxu0 0
    %1620 = vmatpush2.bf16.xpose.msra.mxu0 0
    %1621 = vmatprep.subr.bf16.mxu0 0
    %1622 = vmatpush2.bf16.xpose.msra.mxu0 0
    %1623 = vmatprep.subr.bf16.mxu0 0
    %1624 = vmatpush2.bf16.xpose.msra.mxu0 0
    %1625 = vmatprep.subr.bf16.mxu0 0
    %1626 = vmatpush2.bf16.xpose.msra.mxu0 0
    %1627 = vmatprep.mubr.bf16.mxu0 0
    %1628 = vmatmul.mubr.bf16.gmra.mxu0 %v1455
    %v1629 = vpop.f32.mrf.mxu0
    %v1630 = vadd.f32 0.0, %v1629
    %v1631 = vpop.f32.mrf.mxu0
    %v1632 = vpop.f32.mrf.mxu0
    %v1633 = vpop.f32.mrf.mxu0
    %1634 = vdwg.mxu0
    %v1635 = vmul.f32 %v1495, 0.17677669
    %v1636 = vmul.f32 %v1540, 0.17677669
    %v1637 = vmul.f32 %v1585, 0.17677669
    %v1638 = vmul.f32 %v1630, 0.17677669
    %v1639 = vsel %vm63, %v1635, -inf
    %1640 = vmax.xlane.f32.xlu0 %v1639
    %v1641 = vpop.xlane.xlu0 %1640
    %v1642 = vsel %vm63, %v1636, -inf
    %1643 = vmax.xlane.f32.xlu0 %v1642
    %v1644 = vpop.xlane.xlu0 %1643
    %v1645 = vsel %vm63, %v1637, -inf
    %1646 = vmax.xlane.f32.xlu0 %v1645
    %v1647 = vpop.xlane.xlu0 %1646
    %v1648 = vsel %vm63, %v1638, -inf
    %1649 = vmax.xlane.f32.xlu0 %v1648
    %v1650 = vpop.xlane.xlu0 %1649
    %v1651 = vsub.f32 %v1635, %v1641
    %v1652 = vsub.f32 %v1636, %v1644
    %v1653 = vsub.f32 %v1637, %v1647
    %v1654 = vsub.f32 %v1638, %v1650
    %v1655 = vmul.f32 %v1651, 1.442695
    %v1656 = vpow.pop %v1655
    %v1657 = vmul.f32 %v1652, 1.442695
    %v1658 = vpow.pop %v1657
    %v1659 = vmul.f32 %v1653, 1.442695
    %v1660 = vpow.pop %v1659
    %v1661 = vmul.f32 %v1654, 1.442695
    %v1662 = vpow.pop %v1661
    %v1663 = vsel %vm63, %v1656, 0.0
    %1664 = vadd.xlane.f32.xlu0 %v1663
    %v1665 = vpop.xlane.xlu0 %1664
    %v1666 = vsel %vm63, %v1658, 0.0
    %1667 = vadd.xlane.f32.xlu0 %v1666
    %v1668 = vpop.xlane.xlu0 %1667
    %v1669 = vsel %vm63, %v1660, 0.0
    %1670 = vadd.xlane.f32.xlu0 %v1669
    %v1671 = vpop.xlane.xlu0 %1670
    %v1672 = vsel %vm63, %v1662, 0.0
    %1673 = vadd.xlane.f32.xlu0 %v1672
    %v1674 = vpop.xlane.xlu0 %1673
    %v1675 = vrcp.pop %v1665
    %v1676 = vrcp.pop %v1668
    %v1677 = vrcp.pop %v1671
    %v1678 = vrcp.pop %v1674
    %v1679 = vmul.f32 %v1656, %v1675
    %v1680 = vmul.f32 %v1658, %v1676
    %v1681 = vmul.f32 %v1660, %v1677
    %v1682 = vmul.f32 %v1662, %v1678
    %v1683 = vpack.c.bf16 %v1679, %v1679
    %v1684 = vpack.c.bf16 %v1680, %v1680
    %v1685 = vpack.c.bf16 %v1681, %v1681
    %v1686 = vpack.c.bf16 %v1682, %v1682
    %1687 = vrot.lane.b32.xlu0 %v143, 72
    %v1688 = vpop.permute.xlu0 %1687
    %v1691 = vsel %vm63, %v1683, 0
    %1693 = vmatprep.subr.bf16.mxu0 0
    %1694 = vmatpush1.bf16.msra.mxu0 0
    %1695 = vmatprep.subr.bf16.mxu0 0
    %1696 = vmatpush1.bf16.msra.mxu0 0
    %1697 = vmatprep.subr.bf16.mxu0 0
    %1698 = vmatpush1.bf16.msra.mxu0 0
    %1699 = vmatprep.subr.bf16.mxu0 0
    %1700 = vmatpush1.bf16.msra.mxu0 0
    %1701 = vmatprep.subr.bf16.mxu0 0
    %1702 = vmatpush1.bf16.msra.mxu0 0
    %1703 = vmatprep.subr.bf16.mxu0 0
    %1704 = vmatpush1.bf16.msra.mxu0 0
    %1705 = vmatprep.subr.bf16.mxu0 0
    %1706 = vmatpush1.bf16.msra.mxu0 0
    %1707 = vmatprep.subr.bf16.mxu0 0
    %1708 = vmatpush1.bf16.msra.mxu0 %v1688
    %1709 = vmatprep.subr.bf16.mxu0 0
    %1710 = vmatpush2.bf16.msra.mxu0 0
    %1711 = vmatprep.subr.bf16.mxu0 0
    %1712 = vmatpush2.bf16.msra.mxu0 0
    %1713 = vmatprep.subr.bf16.mxu0 0
    %1714 = vmatpush2.bf16.msra.mxu0 0
    %1715 = vmatprep.subr.bf16.mxu0 0
    %1716 = vmatpush2.bf16.msra.mxu0 0
    %1717 = vmatprep.subr.bf16.mxu0 0
    %1718 = vmatpush2.bf16.msra.mxu0 0
    %1719 = vmatprep.subr.bf16.mxu0 0
    %1720 = vmatpush2.bf16.msra.mxu0 0
    %1721 = vmatprep.subr.bf16.mxu0 0
    %1722 = vmatpush2.bf16.msra.mxu0 0
    %1723 = vmatprep.subr.bf16.mxu0 0
    %1724 = vmatpush2.bf16.msra.mxu0 0
    %1725 = vmatprep.mubr.bf16.mxu0 0
    %1726 = vmatmul.mubr.bf16.gmra.mxu0 %v1691
    %v1727 = vpop.f32.mrf.mxu0
    %v1728 = vadd.f32 0.0, %v1727
    %v1729 = vpop.f32.mrf.mxu0
    %v1730 = vpop.f32.mrf.mxu0
    %v1731 = vpop.f32.mrf.mxu0
    %1732 = vdwg.mxu0
    %1733 = vrot.lane.b32.xlu0 %v144, 72
    %v1734 = vpop.permute.xlu0 %1733
    %v1737 = vsel %vm63, %v1684, 0
    %1739 = vmatprep.subr.bf16.mxu0 0
    %1740 = vmatpush1.bf16.msra.mxu0 0
    %1741 = vmatprep.subr.bf16.mxu0 0
    %1742 = vmatpush1.bf16.msra.mxu0 0
    %1743 = vmatprep.subr.bf16.mxu0 0
    %1744 = vmatpush1.bf16.msra.mxu0 0
    %1745 = vmatprep.subr.bf16.mxu0 0
    %1746 = vmatpush1.bf16.msra.mxu0 0
    %1747 = vmatprep.subr.bf16.mxu0 0
    %1748 = vmatpush1.bf16.msra.mxu0 0
    %1749 = vmatprep.subr.bf16.mxu0 0
    %1750 = vmatpush1.bf16.msra.mxu0 0
    %1751 = vmatprep.subr.bf16.mxu0 0
    %1752 = vmatpush1.bf16.msra.mxu0 0
    %1753 = vmatprep.subr.bf16.mxu0 0
    %1754 = vmatpush1.bf16.msra.mxu0 %v1734
    %1755 = vmatprep.subr.bf16.mxu0 0
    %1756 = vmatpush2.bf16.msra.mxu0 0
    %1757 = vmatprep.subr.bf16.mxu0 0
    %1758 = vmatpush2.bf16.msra.mxu0 0
    %1759 = vmatprep.subr.bf16.mxu0 0
    %1760 = vmatpush2.bf16.msra.mxu0 0
    %1761 = vmatprep.subr.bf16.mxu0 0
    %1762 = vmatpush2.bf16.msra.mxu0 0
    %1763 = vmatprep.subr.bf16.mxu0 0
    %1764 = vmatpush2.bf16.msra.mxu0 0
    %1765 = vmatprep.subr.bf16.mxu0 0
    %1766 = vmatpush2.bf16.msra.mxu0 0
    %1767 = vmatprep.subr.bf16.mxu0 0
    %1768 = vmatpush2.bf16.msra.mxu0 0
    %1769 = vmatprep.subr.bf16.mxu0 0
    %1770 = vmatpush2.bf16.msra.mxu0 0
    %1771 = vmatprep.mubr.bf16.mxu0 0
    %1772 = vmatmul.mubr.bf16.gmra.mxu0 %v1737
    %v1773 = vpop.f32.mrf.mxu0
    %v1774 = vadd.f32 0.0, %v1773
    %v1775 = vpop.f32.mrf.mxu0
    %v1776 = vpop.f32.mrf.mxu0
    %v1777 = vpop.f32.mrf.mxu0
    %1778 = vdwg.mxu0
    %1779 = vrot.lane.b32.xlu0 %v145, 72
    %v1780 = vpop.permute.xlu0 %1779
    %v1783 = vsel %vm63, %v1685, 0
    %1785 = vmatprep.subr.bf16.mxu0 0
    %1786 = vmatpush1.bf16.msra.mxu0 0
    %1787 = vmatprep.subr.bf16.mxu0 0
    %1788 = vmatpush1.bf16.msra.mxu0 0
    %1789 = vmatprep.subr.bf16.mxu0 0
    %1790 = vmatpush1.bf16.msra.mxu0 0
    %1791 = vmatprep.subr.bf16.mxu0 0
    %1792 = vmatpush1.bf16.msra.mxu0 0
    %1793 = vmatprep.subr.bf16.mxu0 0
    %1794 = vmatpush1.bf16.msra.mxu0 0
    %1795 = vmatprep.subr.bf16.mxu0 0
    %1796 = vmatpush1.bf16.msra.mxu0 0
    %1797 = vmatprep.subr.bf16.mxu0 0
    %1798 = vmatpush1.bf16.msra.mxu0 0
    %1799 = vmatprep.subr.bf16.mxu0 0
    %1800 = vmatpush1.bf16.msra.mxu0 %v1780
    %1801 = vmatprep.subr.bf16.mxu0 0
    %1802 = vmatpush2.bf16.msra.mxu0 0
    %1803 = vmatprep.subr.bf16.mxu0 0
    %1804 = vmatpush2.bf16.msra.mxu0 0
    %1805 = vmatprep.subr.bf16.mxu0 0
    %1806 = vmatpush2.bf16.msra.mxu0 0
    %1807 = vmatprep.subr.bf16.mxu0 0
    %1808 = vmatpush2.bf16.msra.mxu0 0
    %1809 = vmatprep.subr.bf16.mxu0 0
    %1810 = vmatpush2.bf16.msra.mxu0 0
    %1811 = vmatprep.subr.bf16.mxu0 0
    %1812 = vmatpush2.bf16.msra.mxu0 0
    %1813 = vmatprep.subr.bf16.mxu0 0
    %1814 = vmatpush2.bf16.msra.mxu0 0
    %1815 = vmatprep.subr.bf16.mxu0 0
    %1816 = vmatpush2.bf16.msra.mxu0 0
    %1817 = vmatprep.mubr.bf16.mxu0 0
    %1818 = vmatmul.mubr.bf16.gmra.mxu0 %v1783
    %v1819 = vpop.f32.mrf.mxu0
    %v1820 = vadd.f32 0.0, %v1819
    %v1821 = vpop.f32.mrf.mxu0
    %v1822 = vpop.f32.mrf.mxu0
    %v1823 = vpop.f32.mrf.mxu0
    %1824 = vdwg.mxu0
    %1825 = vrot.lane.b32.xlu0 %v146, 72
    %v1826 = vpop.permute.xlu0 %1825
    %v1829 = vsel %vm63, %v1686, 0
    %1831 = vmatprep.subr.bf16.mxu0 0
    %1832 = vmatpush1.bf16.msra.mxu0 0
    %1833 = vmatprep.subr.bf16.mxu0 0
    %1834 = vmatpush1.bf16.msra.mxu0 0
    %1835 = vmatprep.subr.bf16.mxu0 0
    %1836 = vmatpush1.bf16.msra.mxu0 0
    %1837 = vmatprep.subr.bf16.mxu0 0
    %1838 = vmatpush1.bf16.msra.mxu0 0
    %1839 = vmatprep.subr.bf16.mxu0 0
    %1840 = vmatpush1.bf16.msra.mxu0 0
    %1841 = vmatprep.subr.bf16.mxu0 0
    %1842 = vmatpush1.bf16.msra.mxu0 0
    %1843 = vmatprep.subr.bf16.mxu0 0
    %1844 = vmatpush1.bf16.msra.mxu0 0
    %1845 = vmatprep.subr.bf16.mxu0 0
    %1846 = vmatpush1.bf16.msra.mxu0 %v1826
    %1847 = vmatprep.subr.bf16.mxu0 0
    %1848 = vmatpush2.bf16.msra.mxu0 0
    %1849 = vmatprep.subr.bf16.mxu0 0
    %1850 = vmatpush2.bf16.msra.mxu0 0
    %1851 = vmatprep.subr.bf16.mxu0 0
    %1852 = vmatpush2.bf16.msra.mxu0 0
    %1853 = vmatprep.subr.bf16.mxu0 0
    %1854 = vmatpush2.bf16.msra.mxu0 0
    %1855 = vmatprep.subr.bf16.mxu0 0
    %1856 = vmatpush2.bf16.msra.mxu0 0
    %1857 = vmatprep.subr.bf16.mxu0 0
    %1858 = vmatpush2.bf16.msra.mxu0 0
    %1859 = vmatprep.subr.bf16.mxu0 0
    %1860 = vmatpush2.bf16.msra.mxu0 0
    %1861 = vmatprep.subr.bf16.mxu0 0
    %1862 = vmatpush2.bf16.msra.mxu0 0
    %1863 = vmatprep.mubr.bf16.mxu0 0
    %1864 = vmatmul.mubr.bf16.gmra.mxu0 %v1829
    %v1865 = vpop.f32.mrf.mxu0
    %v1866 = vadd.f32 0.0, %v1865
    %v1867 = vpop.f32.mrf.mxu0
    %v1868 = vpop.f32.mrf.mxu0
    %v1869 = vpop.f32.mrf.mxu0
    %1870 = vdwg.mxu0
    %1875 = vrot.lane.b32.xlu0 %v1728, 24
    %v1876 = vpop.permute.xlu0 %1875
    %1877 = vrot.lane.b32.xlu0 %v1774, 24
    %v1878 = vpop.permute.xlu0 %1877
    %1879 = vrot.lane.b32.xlu0 %v1820, 24
    %v1880 = vpop.permute.xlu0 %1879
    %1881 = vrot.lane.b32.xlu0 %v1866, 24
    %v1882 = vpop.permute.xlu0 %1881
    %v1887 = vadd.f32 %v141, %v1876
    %v1888 = vadd.f32 %v141, %v1878
    %v1889 = vadd.f32 %v141, %v1880
    %v1890 = vadd.f32 %v141, %v1882
    %v1891 = vsel %vm147, %v563, %v1005
    %v1892 = vsel %vm147, %v564, %v1006
    %v1893 = vsel %vm147, %v565, %v1007
    %v1894 = vsel %vm147, %v566, %v1008
    %v1895 = vsel %vm63, %v1891, %v1446
    %v1896 = vsel %vm63, %v1892, %v1447
    %v1897 = vsel %vm63, %v1893, %v1448
    %v1898 = vsel %vm63, %v1894, %v1449
    %vm1899 = vcmask 195584
    %v1900 = vsel %vm1899, %v1895, %v1887
    %v1901 = vsel %vm1899, %v1896, %v1888
    %v1902 = vsel %vm1899, %v1897, %v1889
    %v1903 = vsel %vm1899, %v1898, %v1890
    %v1904 = vld [vmem:[%s4] sm:$0xf]
    %v1905 = vld [vmem:[%s4 + $0x4] sm:$0xf]
    %v1906 = vld [vmem:[%s4 + $0x8] sm:$0xf]
    %v1907 = vld [vmem:[%s4 + $0xc] sm:$0xf]
    %vm1908 = vcmask 261120
    %v1909 = vsel %vm1908, %v1900, 0.0
    %1910 = vadd.xlane.f32.xlu0 %v1909
    %v1911 = vpop.xlane.xlu0 %1910
    %v1912 = vsel %vm1908, %v1901, 0.0
    %1913 = vadd.xlane.f32.xlu0 %v1912
    %v1914 = vpop.xlane.xlu0 %1913
    %v1915 = vsel %vm1908, %v1902, 0.0
    %1916 = vadd.xlane.f32.xlu0 %v1915
    %v1917 = vpop.xlane.xlu0 %1916
    %v1918 = vsel %vm1908, %v1903, 0.0
    %1919 = vadd.xlane.f32.xlu0 %v1918
    %v1920 = vpop.xlane.xlu0 %1919
    %v1921 = vrcp.pop 32.0
    %v1922 = vmul.f32 %v1911, %v1921
    %v1923 = vmul.f32 %v1914, %v1921
    %v1924 = vmul.f32 %v1917, %v1921
    %v1925 = vmul.f32 %v1920, %v1921
    %v1926 = vsub.f32 %v1900, %v1922
    %v1927 = vsub.f32 %v1901, %v1923
    %v1928 = vsub.f32 %v1902, %v1924
    %v1929 = vsub.f32 %v1903, %v1925
    %v1930 = vmul.f32 %v1926, %v1926
    %v1931 = vmul.f32 %v1927, %v1927
    %v1932 = vmul.f32 %v1928, %v1928
    %v1933 = vmul.f32 %v1929, %v1929
    %v1934 = vsel %vm1908, %v1930, 0.0
    %1935 = vadd.xlane.f32.xlu0 %v1934
    %v1936 = vpop.xlane.xlu0 %1935
    %v1937 = vsel %vm1908, %v1931, 0.0
    %1938 = vadd.xlane.f32.xlu0 %v1937
    %v1939 = vpop.xlane.xlu0 %1938
    %v1940 = vsel %vm1908, %v1932, 0.0
    %1941 = vadd.xlane.f32.xlu0 %v1940
    %v1942 = vpop.xlane.xlu0 %1941
    %v1943 = vsel %vm1908, %v1933, 0.0
    %1944 = vadd.xlane.f32.xlu0 %v1943
    %v1945 = vpop.xlane.xlu0 %1944
    %v1946 = vmul.f32 %v1936, %v1921
    %v1947 = vmul.f32 %v1939, %v1921
    %v1948 = vmul.f32 %v1942, %v1921
    %v1949 = vmul.f32 %v1945, %v1921
    %v1950 = vadd.f32 %v1946, 1e-05
    %v1951 = vadd.f32 %v1947, 1e-05
    %v1952 = vadd.f32 %v1948, 1e-05
    %v1953 = vadd.f32 %v1949, 1e-05
    %v1954 = vrsqrt.pop %v1950
    %v1955 = vrsqrt.pop %v1951
    %v1956 = vrsqrt.pop %v1952
    %v1957 = vrsqrt.pop %v1953
    %v1958 = vmul.f32 %v1926, %v1954
    %v1959 = vmul.f32 %v1927, %v1955
    %v1960 = vmul.f32 %v1928, %v1956
    %v1961 = vmul.f32 %v1929, %v1957
    %v1962 = vlaneseq
    %v1963 = vshrl.u32 %v1962, 7
    %v1964 = vsub.s32 1, %v1963
    %v1965 = vrot.slane %v46, %v1964
    %v1966 = vmul.f32 %v1958, %v1965
    %v1967 = vmul.f32 %v1959, %v1965
    %v1968 = vmul.f32 %v1960, %v1965
    %v1969 = vmul.f32 %v1961, %v1965
    %v1970 = vlaneseq
    %v1971 = vshrl.u32 %v1970, 7
    %v1972 = vsub.s32 2, %v1971
    %v1973 = vrot.slane %v46, %v1972
    %v1974 = vadd.f32 %v1966, %v1973
    %v1975 = vadd.f32 %v1967, %v1973
    %v1976 = vadd.f32 %v1968, %v1973
    %v1977 = vadd.f32 %v1969, %v1973
    %v1978 = vpack.c.bf16 %v1975, %v1974
    %v1979 = vpack.c.bf16 %v1977, %v1976
    %v1980 = vlaneseq
    %v1981 = vshrl.u32 %v1980, 7
    %v1982 = vsub.s32 0, %v1981
    %v1983 = vrot.slane %v46, %v1982
    %v1988 = vunpack.c.l.b16 %v1904
    %v1989 = vunpack.c.l.b16 %v1905
    %v1990 = vunpack.c.l.b16 %v1906
    %v1991 = vunpack.c.l.b16 %v1907
    %v1992 = vpack.c.b16 %v1989, %v1988
    %v1993 = vpack.c.b16 %v1991, %v1990
    %v1997 = vsel %vm1908, %v1978, 0
    %v2000 = vsel %vm1908, %v1979, 0
    %2002 = vmatprep.subr.bf16.mxu0 0
    %2003 = vmatpush1.bf16.msra.mxu0 0
    %2004 = vmatprep.subr.bf16.mxu0 0
    %2005 = vmatpush1.bf16.msra.mxu0 0
    %2006 = vmatprep.subr.bf16.mxu0 0
    %2007 = vmatpush1.bf16.msra.mxu0 0
    %2008 = vmatprep.subr.bf16.mxu0 0
    %2009 = vmatpush1.bf16.msra.mxu0 0
    %2010 = vmatprep.subr.bf16.mxu0 0
    %2011 = vmatpush1.bf16.msra.mxu0 0
    %2012 = vmatprep.subr.bf16.mxu0 0
    %2013 = vmatpush1.bf16.msra.mxu0 0
    %2014 = vmatprep.subr.bf16.mxu0 0
    %2015 = vmatpush1.bf16.msra.mxu0 %v1993
    %2016 = vmatprep.subr.bf16.mxu0 0
    %2017 = vmatpush1.bf16.msra.mxu0 %v1992
    %2018 = vmatprep.subr.bf16.mxu0 0
    %2019 = vmatpush2.bf16.msra.mxu0 0
    %2020 = vmatprep.subr.bf16.mxu0 0
    %2021 = vmatpush2.bf16.msra.mxu0 0
    %2022 = vmatprep.subr.bf16.mxu0 0
    %2023 = vmatpush2.bf16.msra.mxu0 0
    %2024 = vmatprep.subr.bf16.mxu0 0
    %2025 = vmatpush2.bf16.msra.mxu0 0
    %2026 = vmatprep.subr.bf16.mxu0 0
    %2027 = vmatpush2.bf16.msra.mxu0 0
    %2028 = vmatprep.subr.bf16.mxu0 0
    %2029 = vmatpush2.bf16.msra.mxu0 0
    %2030 = vmatprep.subr.bf16.mxu0 0
    %2031 = vmatpush2.bf16.msra.mxu0 0
    %2032 = vmatprep.subr.bf16.mxu0 0
    %2033 = vmatpush2.bf16.msra.mxu0 0
    %2034 = vmatprep.mubr.bf16.mxu0 0
    %2035 = vmatmul.mubr.bf16.gmra.mxu0 %v1997
    %v2036 = vpop.f32.mrf.mxu0
    %v2037 = vadd.f32 %v1983, %v2036
    %v2038 = vpop.f32.mrf.mxu0
    %v2039 = vpop.f32.mrf.mxu0
    %v2040 = vadd.f32 %v1983, %v2039
    %v2041 = vpop.f32.mrf.mxu0
    %2042 = vmatprep.mubr.bf16.mxu0 0
    %2043 = vmatmul.mubr.bf16.gmra.mxu0 %v2000
    %v2044 = vpop.f32.mrf.mxu0
    %v2045 = vadd.f32 %v1983, %v2044
    %v2046 = vpop.f32.mrf.mxu0
    %v2047 = vpop.f32.mrf.mxu0
    %v2048 = vadd.f32 %v1983, %v2047
    %v2049 = vpop.f32.mrf.mxu0
    %2050 = vdwg.mxu0
    %v2051 = vmax.f32 %v2037, 0.0
    %v2052 = vmax.f32 %v2040, 0.0
    %v2053 = vmax.f32 %v2045, 0.0
    %v2054 = vmax.f32 %v2048, 0.0
    %v2055 = vadd.f32 %v1974, %v2051
    %v2056 = vadd.f32 %v1975, %v2052
    %v2057 = vadd.f32 %v1976, %v2053
    %v2058 = vadd.f32 %v1977, %v2054
    %v2059 = vsel %vm1908, %v2055, 0.0
    %2060 = vadd.xlane.f32.xlu0 %v2059
    %v2061 = vpop.xlane.xlu0 %2060
    %v2062 = vsel %vm1908, %v2056, 0.0
    %2063 = vadd.xlane.f32.xlu0 %v2062
    %v2064 = vpop.xlane.xlu0 %2063
    %v2065 = vsel %vm1908, %v2057, 0.0
    %2066 = vadd.xlane.f32.xlu0 %v2065
    %v2067 = vpop.xlane.xlu0 %2066
    %v2068 = vsel %vm1908, %v2058, 0.0
    %2069 = vadd.xlane.f32.xlu0 %v2068
    %v2070 = vpop.xlane.xlu0 %2069
    %v2071 = vmul.f32 %v2061, %v1921
    %v2072 = vmul.f32 %v2064, %v1921
    %v2073 = vmul.f32 %v2067, %v1921
    %v2074 = vmul.f32 %v2070, %v1921
    %v2075 = vsub.f32 %v2055, %v2071
    %v2076 = vsub.f32 %v2056, %v2072
    %v2077 = vsub.f32 %v2057, %v2073
    %v2078 = vsub.f32 %v2058, %v2074
    %v2079 = vmul.f32 %v2075, %v2075
    %v2080 = vmul.f32 %v2076, %v2076
    %v2081 = vmul.f32 %v2077, %v2077
    %v2082 = vmul.f32 %v2078, %v2078
    %v2083 = vsel %vm1908, %v2079, 0.0
    %2084 = vadd.xlane.f32.xlu0 %v2083
    %v2085 = vpop.xlane.xlu0 %2084
    %v2086 = vsel %vm1908, %v2080, 0.0
    %2087 = vadd.xlane.f32.xlu0 %v2086
    %v2088 = vpop.xlane.xlu0 %2087
    %v2089 = vsel %vm1908, %v2081, 0.0
    %2090 = vadd.xlane.f32.xlu0 %v2089
    %v2091 = vpop.xlane.xlu0 %2090
    %v2092 = vsel %vm1908, %v2082, 0.0
    %2093 = vadd.xlane.f32.xlu0 %v2092
    %v2094 = vpop.xlane.xlu0 %2093
    %v2095 = vmul.f32 %v2085, %v1921
    %v2096 = vmul.f32 %v2088, %v1921
    %v2097 = vmul.f32 %v2091, %v1921
    %v2098 = vmul.f32 %v2094, %v1921
    %v2099 = vadd.f32 %v2095, 1e-05
    %v2100 = vadd.f32 %v2096, 1e-05
    %v2101 = vadd.f32 %v2097, 1e-05
    %v2102 = vadd.f32 %v2098, 1e-05
    %v2103 = vrsqrt.pop %v2099
    %v2104 = vrsqrt.pop %v2100
    %v2105 = vrsqrt.pop %v2101
    %v2106 = vrsqrt.pop %v2102
    %v2107 = vmul.f32 %v2075, %v2103
    %v2108 = vmul.f32 %v2076, %v2104
    %v2109 = vmul.f32 %v2077, %v2105
    %v2110 = vmul.f32 %v2078, %v2106
    %v2111 = vlaneseq
    %v2112 = vshrl.u32 %v2111, 7
    %v2113 = vsub.s32 3, %v2112
    %v2114 = vrot.slane %v46, %v2113
    %v2115 = vmul.f32 %v2107, %v2114
    %v2116 = vmul.f32 %v2108, %v2114
    %v2117 = vmul.f32 %v2109, %v2114
    %v2118 = vmul.f32 %v2110, %v2114
    %v2119 = vlaneseq
    %v2120 = vshrl.u32 %v2119, 7
    %v2121 = vsub.s32 4, %v2120
    %v2122 = vrot.slane %v46, %v2121
    %v2123 = vadd.f32 %v2115, %v2122
    %v2124 = vadd.f32 %v2116, %v2122
    %v2125 = vadd.f32 %v2117, %v2122
    %v2126 = vadd.f32 %v2118, %v2122
    %v2127 = vpack.c.bf16 %v2124, %v2123
    %v2128 = vpack.c.bf16 %v2126, %v2125
    %v2129 = vld [vmem:[%s5] sm:$0xf]
    %v2130 = vld [vmem:[%s5 + $0x4] sm:$0xf]
    %v2131 = vld [vmem:[%s5 + $0x8] sm:$0xf]
    %v2132 = vld [vmem:[%s5 + $0xc] sm:$0xf]
    %v2133 = vld [vmem:[%s6] sm:$0x1]
    %v2135 = vlaneseq
    %v2136 = vshrl.u32 %v2135, 7
    %v2137 = vsub.s32 0, %v2136
    %v2138 = vrot.slane %v2133, %v2137
    %v2144 = vunpack.c.l.b16 %v2129
    %v2145 = vunpack.c.l.b16 %v2130
    %v2146 = vunpack.c.l.b16 %v2131
    %v2147 = vunpack.c.l.b16 %v2132
    %v2148 = vpack.c.b16 %v2145, %v2144
    %v2149 = vpack.c.b16 %v2147, %v2146
    %v2153 = vsel %vm1908, %v2127, 0
    %v2156 = vsel %vm1908, %v2128, 0
    %2158 = vmatprep.subr.bf16.mxu0 0
    %2159 = vmatpush1.bf16.msra.mxu0 0
    %2160 = vmatprep.subr.bf16.mxu0 0
    %2161 = vmatpush1.bf16.msra.mxu0 0
    %2162 = vmatprep.subr.bf16.mxu0 0
    %2163 = vmatpush1.bf16.msra.mxu0 0
    %2164 = vmatprep.subr.bf16.mxu0 0
    %2165 = vmatpush1.bf16.msra.mxu0 0
    %2166 = vmatprep.subr.bf16.mxu0 0
    %2167 = vmatpush1.bf16.msra.mxu0 0
    %2168 = vmatprep.subr.bf16.mxu0 0
    %2169 = vmatpush1.bf16.msra.mxu0 0
    %2170 = vmatprep.subr.bf16.mxu0 0
    %2171 = vmatpush1.bf16.msra.mxu0 %v2149
    %2172 = vmatprep.subr.bf16.mxu0 0
    %2173 = vmatpush1.bf16.msra.mxu0 %v2148
    %2174 = vmatprep.subr.bf16.mxu0 0
    %2175 = vmatpush2.bf16.msra.mxu0 0
    %2176 = vmatprep.subr.bf16.mxu0 0
    %2177 = vmatpush2.bf16.msra.mxu0 0
    %2178 = vmatprep.subr.bf16.mxu0 0
    %2179 = vmatpush2.bf16.msra.mxu0 0
    %2180 = vmatprep.subr.bf16.mxu0 0
    %2181 = vmatpush2.bf16.msra.mxu0 0
    %2182 = vmatprep.subr.bf16.mxu0 0
    %2183 = vmatpush2.bf16.msra.mxu0 0
    %2184 = vmatprep.subr.bf16.mxu0 0
    %2185 = vmatpush2.bf16.msra.mxu0 0
    %2186 = vmatprep.subr.bf16.mxu0 0
    %2187 = vmatpush2.bf16.msra.mxu0 0
    %2188 = vmatprep.subr.bf16.mxu0 0
    %2189 = vmatpush2.bf16.msra.mxu0 0
    %2190 = vmatprep.mubr.bf16.mxu0 0
    %2191 = vmatmul.mubr.bf16.gmra.mxu0 %v2153
    %v2192 = vpop.f32.mrf.mxu0
    %v2193 = vadd.f32 %v2138, %v2192
    %v2194 = vpop.f32.mrf.mxu0
    %v2195 = vpop.f32.mrf.mxu0
    %v2196 = vadd.f32 %v2138, %v2195
    %v2197 = vpop.f32.mrf.mxu0
    %2198 = vmatprep.mubr.bf16.mxu0 0
    %2199 = vmatmul.mubr.bf16.gmra.mxu0 %v2156
    %v2200 = vpop.f32.mrf.mxu0
    %v2201 = vadd.f32 %v2138, %v2200
    %v2202 = vpop.f32.mrf.mxu0
    %v2203 = vpop.f32.mrf.mxu0
    %v2204 = vadd.f32 %v2138, %v2203
    %v2205 = vpop.f32.mrf.mxu0
    %2206 = vdwg.mxu0
    %v2207 = vpack.c.bf16 %v2193, %v2193
    %v2208 = vpack.c.bf16 %v2196, %v2196
    %v2209 = vpack.c.bf16 %v2201, %v2201
    %v2210 = vpack.c.bf16 %v2204, %v2204
    %2211 = vrot.lane.b32.xlu0 %v143, 64
    %v2212 = vpop.permute.xlu0 %2211
    %v2214 = vsel %vm147, %v2212, 0
    %v2217 = vsel %vm147, %v2207, 0
    %2219 = vmatprep.subr.bf16.mxu0 0
    %2220 = vmatpush1.bf16.xpose.msra.mxu0 0
    %2221 = vmatprep.subr.bf16.mxu0 0
    %2222 = vmatpush1.bf16.xpose.msra.mxu0 0
    %2223 = vmatprep.subr.bf16.mxu0 0
    %2224 = vmatpush1.bf16.xpose.msra.mxu0 0
    %2225 = vmatprep.subr.bf16.mxu0 0
    %2226 = vmatpush1.bf16.xpose.msra.mxu0 0
    %2227 = vmatprep.subr.bf16.mxu0 0
    %2228 = vmatpush1.bf16.xpose.msra.mxu0 0
    %2229 = vmatprep.subr.bf16.mxu0 0
    %2230 = vmatpush1.bf16.xpose.msra.mxu0 0
    %2231 = vmatprep.subr.bf16.mxu0 0
    %2232 = vmatpush1.bf16.xpose.msra.mxu0 0
    %2233 = vmatprep.subr.bf16.mxu0 0
    %2234 = vmatpush1.bf16.xpose.msra.mxu0 %v2217
    %2235 = vmatprep.subr.bf16.mxu0 0
    %2236 = vmatpush2.bf16.xpose.msra.mxu0 0
    %2237 = vmatprep.subr.bf16.mxu0 0
    %2238 = vmatpush2.bf16.xpose.msra.mxu0 0
    %2239 = vmatprep.subr.bf16.mxu0 0
    %2240 = vmatpush2.bf16.xpose.msra.mxu0 0
    %2241 = vmatprep.subr.bf16.mxu0 0
    %2242 = vmatpush2.bf16.xpose.msra.mxu0 0
    %2243 = vmatprep.subr.bf16.mxu0 0
    %2244 = vmatpush2.bf16.xpose.msra.mxu0 0
    %2245 = vmatprep.subr.bf16.mxu0 0
    %2246 = vmatpush2.bf16.xpose.msra.mxu0 0
    %2247 = vmatprep.subr.bf16.mxu0 0
    %2248 = vmatpush2.bf16.xpose.msra.mxu0 0
    %2249 = vmatprep.subr.bf16.mxu0 0
    %2250 = vmatpush2.bf16.xpose.msra.mxu0 0
    %2251 = vmatprep.mubr.bf16.mxu0 0
    %2252 = vmatmul.mubr.bf16.gmra.mxu0 %v2214
    %v2253 = vpop.f32.mrf.mxu0
    %v2254 = vadd.f32 0.0, %v2253
    %v2255 = vpop.f32.mrf.mxu0
    %v2256 = vpop.f32.mrf.mxu0
    %v2257 = vadd.f32 0.0, %v2256
    %v2258 = vpop.f32.mrf.mxu0
    %2259 = vdwg.mxu0
    %2260 = vrot.lane.b32.xlu0 %v144, 64
    %v2261 = vpop.permute.xlu0 %2260
    %v2263 = vsel %vm147, %v2261, 0
    %v2266 = vsel %vm147, %v2208, 0
    %2268 = vmatprep.subr.bf16.mxu0 0
    %2269 = vmatpush1.bf16.xpose.msra.mxu0 0
    %2270 = vmatprep.subr.bf16.mxu0 0
    %2271 = vmatpush1.bf16.xpose.msra.mxu0 0
    %2272 = vmatprep.subr.bf16.mxu0 0
    %2273 = vmatpush1.bf16.xpose.msra.mxu0 0
    %2274 = vmatprep.subr.bf16.mxu0 0
    %2275 = vmatpush1.bf16.xpose.msra.mxu0 0
    %2276 = vmatprep.subr.bf16.mxu0 0
    %2277 = vmatpush1.bf16.xpose.msra.mxu0 0
    %2278 = vmatprep.subr.bf16.mxu0 0
    %2279 = vmatpush1.bf16.xpose.msra.mxu0 0
    %2280 = vmatprep.subr.bf16.mxu0 0
    %2281 = vmatpush1.bf16.xpose.msra.mxu0 0
    %2282 = vmatprep.subr.bf16.mxu0 0
    %2283 = vmatpush1.bf16.xpose.msra.mxu0 %v2266
    %2284 = vmatprep.subr.bf16.mxu0 0
    %2285 = vmatpush2.bf16.xpose.msra.mxu0 0
    %2286 = vmatprep.subr.bf16.mxu0 0
    %2287 = vmatpush2.bf16.xpose.msra.mxu0 0
    %2288 = vmatprep.subr.bf16.mxu0 0
    %2289 = vmatpush2.bf16.xpose.msra.mxu0 0
    %2290 = vmatprep.subr.bf16.mxu0 0
    %2291 = vmatpush2.bf16.xpose.msra.mxu0 0
    %2292 = vmatprep.subr.bf16.mxu0 0
    %2293 = vmatpush2.bf16.xpose.msra.mxu0 0
    %2294 = vmatprep.subr.bf16.mxu0 0
    %2295 = vmatpush2.bf16.xpose.msra.mxu0 0
    %2296 = vmatprep.subr.bf16.mxu0 0
    %2297 = vmatpush2.bf16.xpose.msra.mxu0 0
    %2298 = vmatprep.subr.bf16.mxu0 0
    %2299 = vmatpush2.bf16.xpose.msra.mxu0 0
    %2300 = vmatprep.mubr.bf16.mxu0 0
    %2301 = vmatmul.mubr.bf16.gmra.mxu0 %v2263
    %v2302 = vpop.f32.mrf.mxu0
    %v2303 = vadd.f32 0.0, %v2302
    %v2304 = vpop.f32.mrf.mxu0
    %v2305 = vpop.f32.mrf.mxu0
    %v2306 = vadd.f32 0.0, %v2305
    %v2307 = vpop.f32.mrf.mxu0
    %2308 = vdwg.mxu0
    %2309 = vrot.lane.b32.xlu0 %v145, 64
    %v2310 = vpop.permute.xlu0 %2309
    %v2312 = vsel %vm147, %v2310, 0
    %v2315 = vsel %vm147, %v2209, 0
    %2317 = vmatprep.subr.bf16.mxu0 0
    %2318 = vmatpush1.bf16.xpose.msra.mxu0 0
    %2319 = vmatprep.subr.bf16.mxu0 0
    %2320 = vmatpush1.bf16.xpose.msra.mxu0 0
    %2321 = vmatprep.subr.bf16.mxu0 0
    %2322 = vmatpush1.bf16.xpose.msra.mxu0 0
    %2323 = vmatprep.subr.bf16.mxu0 0
    %2324 = vmatpush1.bf16.xpose.msra.mxu0 0
    %2325 = vmatprep.subr.bf16.mxu0 0
    %2326 = vmatpush1.bf16.xpose.msra.mxu0 0
    %2327 = vmatprep.subr.bf16.mxu0 0
    %2328 = vmatpush1.bf16.xpose.msra.mxu0 0
    %2329 = vmatprep.subr.bf16.mxu0 0
    %2330 = vmatpush1.bf16.xpose.msra.mxu0 0
    %2331 = vmatprep.subr.bf16.mxu0 0
    %2332 = vmatpush1.bf16.xpose.msra.mxu0 %v2315
    %2333 = vmatprep.subr.bf16.mxu0 0
    %2334 = vmatpush2.bf16.xpose.msra.mxu0 0
    %2335 = vmatprep.subr.bf16.mxu0 0
    %2336 = vmatpush2.bf16.xpose.msra.mxu0 0
    %2337 = vmatprep.subr.bf16.mxu0 0
    %2338 = vmatpush2.bf16.xpose.msra.mxu0 0
    %2339 = vmatprep.subr.bf16.mxu0 0
    %2340 = vmatpush2.bf16.xpose.msra.mxu0 0
    %2341 = vmatprep.subr.bf16.mxu0 0
    %2342 = vmatpush2.bf16.xpose.msra.mxu0 0
    %2343 = vmatprep.subr.bf16.mxu0 0
    %2344 = vmatpush2.bf16.xpose.msra.mxu0 0
    %2345 = vmatprep.subr.bf16.mxu0 0
    %2346 = vmatpush2.bf16.xpose.msra.mxu0 0
    %2347 = vmatprep.subr.bf16.mxu0 0
    %2348 = vmatpush2.bf16.xpose.msra.mxu0 0
    %2349 = vmatprep.mubr.bf16.mxu0 0
    %2350 = vmatmul.mubr.bf16.gmra.mxu0 %v2312
    %v2351 = vpop.f32.mrf.mxu0
    %v2352 = vadd.f32 0.0, %v2351
    %v2353 = vpop.f32.mrf.mxu0
    %v2354 = vpop.f32.mrf.mxu0
    %v2355 = vadd.f32 0.0, %v2354
    %v2356 = vpop.f32.mrf.mxu0
    %2357 = vdwg.mxu0
    %2358 = vrot.lane.b32.xlu0 %v146, 64
    %v2359 = vpop.permute.xlu0 %2358
    %v2361 = vsel %vm147, %v2359, 0
    %v2364 = vsel %vm147, %v2210, 0
    %2366 = vmatprep.subr.bf16.mxu0 0
    %2367 = vmatpush1.bf16.xpose.msra.mxu0 0
    %2368 = vmatprep.subr.bf16.mxu0 0
    %2369 = vmatpush1.bf16.xpose.msra.mxu0 0
    %2370 = vmatprep.subr.bf16.mxu0 0
    %2371 = vmatpush1.bf16.xpose.msra.mxu0 0
    %2372 = vmatprep.subr.bf16.mxu0 0
    %2373 = vmatpush1.bf16.xpose.msra.mxu0 0
    %2374 = vmatprep.subr.bf16.mxu0 0
    %2375 = vmatpush1.bf16.xpose.msra.mxu0 0
    %2376 = vmatprep.subr.bf16.mxu0 0
    %2377 = vmatpush1.bf16.xpose.msra.mxu0 0
    %2378 = vmatprep.subr.bf16.mxu0 0
    %2379 = vmatpush1.bf16.xpose.msra.mxu0 0
    %2380 = vmatprep.subr.bf16.mxu0 0
    %2381 = vmatpush1.bf16.xpose.msra.mxu0 %v2364
    %2382 = vmatprep.subr.bf16.mxu0 0
    %2383 = vmatpush2.bf16.xpose.msra.mxu0 0
    %2384 = vmatprep.subr.bf16.mxu0 0
    %2385 = vmatpush2.bf16.xpose.msra.mxu0 0
    %2386 = vmatprep.subr.bf16.mxu0 0
    %2387 = vmatpush2.bf16.xpose.msra.mxu0 0
    %2388 = vmatprep.subr.bf16.mxu0 0
    %2389 = vmatpush2.bf16.xpose.msra.mxu0 0
    %2390 = vmatprep.subr.bf16.mxu0 0
    %2391 = vmatpush2.bf16.xpose.msra.mxu0 0
    %2392 = vmatprep.subr.bf16.mxu0 0
    %2393 = vmatpush2.bf16.xpose.msra.mxu0 0
    %2394 = vmatprep.subr.bf16.mxu0 0
    %2395 = vmatpush2.bf16.xpose.msra.mxu0 0
    %2396 = vmatprep.subr.bf16.mxu0 0
    %2397 = vmatpush2.bf16.xpose.msra.mxu0 0
    %2398 = vmatprep.mubr.bf16.mxu0 0
    %2399 = vmatmul.mubr.bf16.gmra.mxu0 %v2361
    %v2400 = vpop.f32.mrf.mxu0
    %v2401 = vadd.f32 0.0, %v2400
    %v2402 = vpop.f32.mrf.mxu0
    %v2403 = vpop.f32.mrf.mxu0
    %v2404 = vadd.f32 0.0, %v2403
    %v2405 = vpop.f32.mrf.mxu0
    %2406 = vdwg.mxu0
    %v2407 = vmul.f32 %v2254, 0.17677669
    %v2408 = vmul.f32 %v2257, 0.17677669
    %v2409 = vmul.f32 %v2303, 0.17677669
    %v2410 = vmul.f32 %v2306, 0.17677669
    %v2411 = vmul.f32 %v2352, 0.17677669
    %v2412 = vmul.f32 %v2355, 0.17677669
    %v2413 = vmul.f32 %v2401, 0.17677669
    %v2414 = vmul.f32 %v2404, 0.17677669
    %v2415 = vsel %vm147, %v2407, -inf
    %2416 = vmax.xlane.f32.xlu0 %v2415
    %v2417 = vpop.xlane.xlu0 %2416
    %v2418 = vsel %vm147, %v2408, -inf
    %2419 = vmax.xlane.f32.xlu0 %v2418
    %v2420 = vpop.xlane.xlu0 %2419
    %v2421 = vsel %vm147, %v2409, -inf
    %2422 = vmax.xlane.f32.xlu0 %v2421
    %v2423 = vpop.xlane.xlu0 %2422
    %v2424 = vsel %vm147, %v2410, -inf
    %2425 = vmax.xlane.f32.xlu0 %v2424
    %v2426 = vpop.xlane.xlu0 %2425
    %v2427 = vsel %vm147, %v2411, -inf
    %2428 = vmax.xlane.f32.xlu0 %v2427
    %v2429 = vpop.xlane.xlu0 %2428
    %v2430 = vsel %vm147, %v2412, -inf
    %2431 = vmax.xlane.f32.xlu0 %v2430
    %v2432 = vpop.xlane.xlu0 %2431
    %v2433 = vsel %vm147, %v2413, -inf
    %2434 = vmax.xlane.f32.xlu0 %v2433
    %v2435 = vpop.xlane.xlu0 %2434
    %v2436 = vsel %vm147, %v2414, -inf
    %2437 = vmax.xlane.f32.xlu0 %v2436
    %v2438 = vpop.xlane.xlu0 %2437
    %v2439 = vsub.f32 %v2407, %v2417
    %v2440 = vsub.f32 %v2408, %v2420
    %v2441 = vsub.f32 %v2409, %v2423
    %v2442 = vsub.f32 %v2410, %v2426
    %v2443 = vsub.f32 %v2411, %v2429
    %v2444 = vsub.f32 %v2412, %v2432
    %v2445 = vsub.f32 %v2413, %v2435
    %v2446 = vsub.f32 %v2414, %v2438
    %v2447 = vmul.f32 %v2439, 1.442695
    %v2448 = vpow.pop %v2447
    %v2449 = vmul.f32 %v2440, 1.442695
    %v2450 = vpow.pop %v2449
    %v2451 = vmul.f32 %v2441, 1.442695
    %v2452 = vpow.pop %v2451
    %v2453 = vmul.f32 %v2442, 1.442695
    %v2454 = vpow.pop %v2453
    %v2455 = vmul.f32 %v2443, 1.442695
    %v2456 = vpow.pop %v2455
    %v2457 = vmul.f32 %v2444, 1.442695
    %v2458 = vpow.pop %v2457
    %v2459 = vmul.f32 %v2445, 1.442695
    %v2460 = vpow.pop %v2459
    %v2461 = vmul.f32 %v2446, 1.442695
    %v2462 = vpow.pop %v2461
    %v2463 = vsel %vm147, %v2448, 0.0
    %2464 = vadd.xlane.f32.xlu0 %v2463
    %v2465 = vpop.xlane.xlu0 %2464
    %v2466 = vsel %vm147, %v2450, 0.0
    %2467 = vadd.xlane.f32.xlu0 %v2466
    %v2468 = vpop.xlane.xlu0 %2467
    %v2469 = vsel %vm147, %v2452, 0.0
    %2470 = vadd.xlane.f32.xlu0 %v2469
    %v2471 = vpop.xlane.xlu0 %2470
    %v2472 = vsel %vm147, %v2454, 0.0
    %2473 = vadd.xlane.f32.xlu0 %v2472
    %v2474 = vpop.xlane.xlu0 %2473
    %v2475 = vsel %vm147, %v2456, 0.0
    %2476 = vadd.xlane.f32.xlu0 %v2475
    %v2477 = vpop.xlane.xlu0 %2476
    %v2478 = vsel %vm147, %v2458, 0.0
    %2479 = vadd.xlane.f32.xlu0 %v2478
    %v2480 = vpop.xlane.xlu0 %2479
    %v2481 = vsel %vm147, %v2460, 0.0
    %2482 = vadd.xlane.f32.xlu0 %v2481
    %v2483 = vpop.xlane.xlu0 %2482
    %v2484 = vsel %vm147, %v2462, 0.0
    %2485 = vadd.xlane.f32.xlu0 %v2484
    %v2486 = vpop.xlane.xlu0 %2485
    %v2487 = vrcp.pop %v2465
    %v2488 = vrcp.pop %v2468
    %v2489 = vrcp.pop %v2471
    %v2490 = vrcp.pop %v2474
    %v2491 = vrcp.pop %v2477
    %v2492 = vrcp.pop %v2480
    %v2493 = vrcp.pop %v2483
    %v2494 = vrcp.pop %v2486
    %v2495 = vmul.f32 %v2448, %v2487
    %v2496 = vmul.f32 %v2450, %v2488
    %v2497 = vmul.f32 %v2452, %v2489
    %v2498 = vmul.f32 %v2454, %v2490
    %v2499 = vmul.f32 %v2456, %v2491
    %v2500 = vmul.f32 %v2458, %v2492
    %v2501 = vmul.f32 %v2460, %v2493
    %v2502 = vmul.f32 %v2462, %v2494
    %v2503 = vpack.c.bf16 %v2496, %v2495
    %v2504 = vpack.c.bf16 %v2498, %v2497
    %v2505 = vpack.c.bf16 %v2500, %v2499
    %v2506 = vpack.c.bf16 %v2502, %v2501
    %2508 = vrot.lane.b32.xlu0 %v2207, 96
    %v2509 = vpop.permute.xlu0 %2508
    %v2511 = vsel %vm147, %v2503, 0
    %vm2513 = vcmask 1043456
    %v2515 = vsel %vm2513, %v2509, 0
    %2517 = vmatprep.subr.bf16.mxu0 0
    %2518 = vmatpush1.bf16.msra.mxu0 0
    %2519 = vmatprep.subr.bf16.mxu0 0
    %2520 = vmatpush1.bf16.msra.mxu0 0
    %2521 = vmatprep.subr.bf16.mxu0 0
    %2522 = vmatpush1.bf16.msra.mxu0 0
    %2523 = vmatprep.subr.bf16.mxu0 0
    %2524 = vmatpush1.bf16.msra.mxu0 0
    %2525 = vmatprep.subr.bf16.mxu0 0
    %2526 = vmatpush1.bf16.msra.mxu0 0
    %2527 = vmatprep.subr.bf16.mxu0 0
    %2528 = vmatpush1.bf16.msra.mxu0 0
    %2529 = vmatprep.subr.bf16.mxu0 0
    %2530 = vmatpush1.bf16.msra.mxu0 0
    %2531 = vmatprep.subr.bf16.mxu0 0
    %2532 = vmatpush1.bf16.msra.mxu0 %v2515
    %2533 = vmatprep.subr.bf16.mxu0 0
    %2534 = vmatpush2.bf16.msra.mxu0 0
    %2535 = vmatprep.subr.bf16.mxu0 0
    %2536 = vmatpush2.bf16.msra.mxu0 0
    %2537 = vmatprep.subr.bf16.mxu0 0
    %2538 = vmatpush2.bf16.msra.mxu0 0
    %2539 = vmatprep.subr.bf16.mxu0 0
    %2540 = vmatpush2.bf16.msra.mxu0 0
    %2541 = vmatprep.subr.bf16.mxu0 0
    %2542 = vmatpush2.bf16.msra.mxu0 0
    %2543 = vmatprep.subr.bf16.mxu0 0
    %2544 = vmatpush2.bf16.msra.mxu0 0
    %2545 = vmatprep.subr.bf16.mxu0 0
    %2546 = vmatpush2.bf16.msra.mxu0 0
    %2547 = vmatprep.subr.bf16.mxu0 0
    %2548 = vmatpush2.bf16.msra.mxu0 0
    %2549 = vmatprep.mubr.bf16.mxu0 0
    %2550 = vmatmul.mubr.bf16.gmra.mxu0 %v2511
    %v2551 = vpop.f32.mrf.mxu0
    %v2552 = vadd.f32 0.0, %v2551
    %v2553 = vpop.f32.mrf.mxu0
    %v2554 = vpop.f32.mrf.mxu0
    %v2555 = vadd.f32 0.0, %v2554
    %v2556 = vpop.f32.mrf.mxu0
    %2557 = vdwg.mxu0
    %2559 = vrot.lane.b32.xlu0 %v2208, 96
    %v2560 = vpop.permute.xlu0 %2559
    %v2562 = vsel %vm147, %v2504, 0
    %v2565 = vsel %vm2513, %v2560, 0
    %2567 = vmatprep.subr.bf16.mxu0 0
    %2568 = vmatpush1.bf16.msra.mxu0 0
    %2569 = vmatprep.subr.bf16.mxu0 0
    %2570 = vmatpush1.bf16.msra.mxu0 0
    %2571 = vmatprep.subr.bf16.mxu0 0
    %2572 = vmatpush1.bf16.msra.mxu0 0
    %2573 = vmatprep.subr.bf16.mxu0 0
    %2574 = vmatpush1.bf16.msra.mxu0 0
    %2575 = vmatprep.subr.bf16.mxu0 0
    %2576 = vmatpush1.bf16.msra.mxu0 0
    %2577 = vmatprep.subr.bf16.mxu0 0
    %2578 = vmatpush1.bf16.msra.mxu0 0
    %2579 = vmatprep.subr.bf16.mxu0 0
    %2580 = vmatpush1.bf16.msra.mxu0 0
    %2581 = vmatprep.subr.bf16.mxu0 0
    %2582 = vmatpush1.bf16.msra.mxu0 %v2565
    %2583 = vmatprep.subr.bf16.mxu0 0
    %2584 = vmatpush2.bf16.msra.mxu0 0
    %2585 = vmatprep.subr.bf16.mxu0 0
    %2586 = vmatpush2.bf16.msra.mxu0 0
    %2587 = vmatprep.subr.bf16.mxu0 0
    %2588 = vmatpush2.bf16.msra.mxu0 0
    %2589 = vmatprep.subr.bf16.mxu0 0
    %2590 = vmatpush2.bf16.msra.mxu0 0
    %2591 = vmatprep.subr.bf16.mxu0 0
    %2592 = vmatpush2.bf16.msra.mxu0 0
    %2593 = vmatprep.subr.bf16.mxu0 0
    %2594 = vmatpush2.bf16.msra.mxu0 0
    %2595 = vmatprep.subr.bf16.mxu0 0
    %2596 = vmatpush2.bf16.msra.mxu0 0
    %2597 = vmatprep.subr.bf16.mxu0 0
    %2598 = vmatpush2.bf16.msra.mxu0 0
    %2599 = vmatprep.mubr.bf16.mxu0 0
    %2600 = vmatmul.mubr.bf16.gmra.mxu0 %v2562
    %v2601 = vpop.f32.mrf.mxu0
    %v2602 = vadd.f32 0.0, %v2601
    %v2603 = vpop.f32.mrf.mxu0
    %v2604 = vpop.f32.mrf.mxu0
    %v2605 = vadd.f32 0.0, %v2604
    %v2606 = vpop.f32.mrf.mxu0
    %2607 = vdwg.mxu0
    %2609 = vrot.lane.b32.xlu0 %v2209, 96
    %v2610 = vpop.permute.xlu0 %2609
    %v2612 = vsel %vm147, %v2505, 0
    %v2615 = vsel %vm2513, %v2610, 0
    %2617 = vmatprep.subr.bf16.mxu0 0
    %2618 = vmatpush1.bf16.msra.mxu0 0
    %2619 = vmatprep.subr.bf16.mxu0 0
    %2620 = vmatpush1.bf16.msra.mxu0 0
    %2621 = vmatprep.subr.bf16.mxu0 0
    %2622 = vmatpush1.bf16.msra.mxu0 0
    %2623 = vmatprep.subr.bf16.mxu0 0
    %2624 = vmatpush1.bf16.msra.mxu0 0
    %2625 = vmatprep.subr.bf16.mxu0 0
    %2626 = vmatpush1.bf16.msra.mxu0 0
    %2627 = vmatprep.subr.bf16.mxu0 0
    %2628 = vmatpush1.bf16.msra.mxu0 0
    %2629 = vmatprep.subr.bf16.mxu0 0
    %2630 = vmatpush1.bf16.msra.mxu0 0
    %2631 = vmatprep.subr.bf16.mxu0 0
    %2632 = vmatpush1.bf16.msra.mxu0 %v2615
    %2633 = vmatprep.subr.bf16.mxu0 0
    %2634 = vmatpush2.bf16.msra.mxu0 0
    %2635 = vmatprep.subr.bf16.mxu0 0
    %2636 = vmatpush2.bf16.msra.mxu0 0
    %2637 = vmatprep.subr.bf16.mxu0 0
    %2638 = vmatpush2.bf16.msra.mxu0 0
    %2639 = vmatprep.subr.bf16.mxu0 0
    %2640 = vmatpush2.bf16.msra.mxu0 0
    %2641 = vmatprep.subr.bf16.mxu0 0
    %2642 = vmatpush2.bf16.msra.mxu0 0
    %2643 = vmatprep.subr.bf16.mxu0 0
    %2644 = vmatpush2.bf16.msra.mxu0 0
    %2645 = vmatprep.subr.bf16.mxu0 0
    %2646 = vmatpush2.bf16.msra.mxu0 0
    %2647 = vmatprep.subr.bf16.mxu0 0
    %2648 = vmatpush2.bf16.msra.mxu0 0
    %2649 = vmatprep.mubr.bf16.mxu0 0
    %2650 = vmatmul.mubr.bf16.gmra.mxu0 %v2612
    %v2651 = vpop.f32.mrf.mxu0
    %v2652 = vadd.f32 0.0, %v2651
    %v2653 = vpop.f32.mrf.mxu0
    %v2654 = vpop.f32.mrf.mxu0
    %v2655 = vadd.f32 0.0, %v2654
    %v2656 = vpop.f32.mrf.mxu0
    %2657 = vdwg.mxu0
    %2659 = vrot.lane.b32.xlu0 %v2210, 96
    %v2660 = vpop.permute.xlu0 %2659
    %v2662 = vsel %vm147, %v2506, 0
    %v2665 = vsel %vm2513, %v2660, 0
    %2667 = vmatprep.subr.bf16.mxu0 0
    %2668 = vmatpush1.bf16.msra.mxu0 0
    %2669 = vmatprep.subr.bf16.mxu0 0
    %2670 = vmatpush1.bf16.msra.mxu0 0
    %2671 = vmatprep.subr.bf16.mxu0 0
    %2672 = vmatpush1.bf16.msra.mxu0 0
    %2673 = vmatprep.subr.bf16.mxu0 0
    %2674 = vmatpush1.bf16.msra.mxu0 0
    %2675 = vmatprep.subr.bf16.mxu0 0
    %2676 = vmatpush1.bf16.msra.mxu0 0
    %2677 = vmatprep.subr.bf16.mxu0 0
    %2678 = vmatpush1.bf16.msra.mxu0 0
    %2679 = vmatprep.subr.bf16.mxu0 0
    %2680 = vmatpush1.bf16.msra.mxu0 0
    %2681 = vmatprep.subr.bf16.mxu0 0
    %2682 = vmatpush1.bf16.msra.mxu0 %v2665
    %2683 = vmatprep.subr.bf16.mxu0 0
    %2684 = vmatpush2.bf16.msra.mxu0 0
    %2685 = vmatprep.subr.bf16.mxu0 0
    %2686 = vmatpush2.bf16.msra.mxu0 0
    %2687 = vmatprep.subr.bf16.mxu0 0
    %2688 = vmatpush2.bf16.msra.mxu0 0
    %2689 = vmatprep.subr.bf16.mxu0 0
    %2690 = vmatpush2.bf16.msra.mxu0 0
    %2691 = vmatprep.subr.bf16.mxu0 0
    %2692 = vmatpush2.bf16.msra.mxu0 0
    %2693 = vmatprep.subr.bf16.mxu0 0
    %2694 = vmatpush2.bf16.msra.mxu0 0
    %2695 = vmatprep.subr.bf16.mxu0 0
    %2696 = vmatpush2.bf16.msra.mxu0 0
    %2697 = vmatprep.subr.bf16.mxu0 0
    %2698 = vmatpush2.bf16.msra.mxu0 0
    %2699 = vmatprep.mubr.bf16.mxu0 0
    %2700 = vmatmul.mubr.bf16.gmra.mxu0 %v2662
    %v2701 = vpop.f32.mrf.mxu0
    %v2702 = vadd.f32 0.0, %v2701
    %v2703 = vpop.f32.mrf.mxu0
    %v2704 = vpop.f32.mrf.mxu0
    %v2705 = vadd.f32 0.0, %v2704
    %v2706 = vpop.f32.mrf.mxu0
    %2707 = vdwg.mxu0
    %2716 = vrot.lane.b32.xlu0 %v2552, 64
    %v2717 = vpop.permute.xlu0 %2716
    %2718 = vrot.lane.b32.xlu0 %v2555, 64
    %v2719 = vpop.permute.xlu0 %2718
    %2720 = vrot.lane.b32.xlu0 %v2602, 64
    %v2721 = vpop.permute.xlu0 %2720
    %2722 = vrot.lane.b32.xlu0 %v2605, 64
    %v2723 = vpop.permute.xlu0 %2722
    %2724 = vrot.lane.b32.xlu0 %v2652, 64
    %v2725 = vpop.permute.xlu0 %2724
    %2726 = vrot.lane.b32.xlu0 %v2655, 64
    %v2727 = vpop.permute.xlu0 %2726
    %2728 = vrot.lane.b32.xlu0 %v2702, 64
    %v2729 = vpop.permute.xlu0 %2728
    %2730 = vrot.lane.b32.xlu0 %v2705, 64
    %v2731 = vpop.permute.xlu0 %2730
    %v2740 = vadd.f32 %v111, %v2717
    %v2741 = vadd.f32 %v114, %v2719
    %v2742 = vadd.f32 %v119, %v2721
    %v2743 = vadd.f32 %v122, %v2723
    %v2744 = vadd.f32 %v127, %v2725
    %v2745 = vadd.f32 %v130, %v2727
    %v2746 = vadd.f32 %v135, %v2729
    %v2747 = vadd.f32 %v138, %v2731
    %2748 = vrot.lane.b32.xlu0 %v143, 56
    %v2749 = vpop.permute.xlu0 %2748
    %2750 = vrot.lane.b32.xlu0 %v2207, 120
    %v2751 = vpop.permute.xlu0 %2750
    %v2753 = vsel %vm147, %v2749, 0
    %v2756 = vsel %vm147, %v2751, 0
    %2758 = vmatprep.subr.bf16.mxu0 0
    %2759 = vmatpush1.bf16.xpose.msra.mxu0 0
    %2760 = vmatprep.subr.bf16.mxu0 0
    %2761 = vmatpush1.bf16.xpose.msra.mxu0 0
    %2762 = vmatprep.subr.bf16.mxu0 0
    %2763 = vmatpush1.bf16.xpose.msra.mxu0 0
    %2764 = vmatprep.subr.bf16.mxu0 0
    %2765 = vmatpush1.bf16.xpose.msra.mxu0 0
    %2766 = vmatprep.subr.bf16.mxu0 0
    %2767 = vmatpush1.bf16.xpose.msra.mxu0 0
    %2768 = vmatprep.subr.bf16.mxu0 0
    %2769 = vmatpush1.bf16.xpose.msra.mxu0 0
    %2770 = vmatprep.subr.bf16.mxu0 0
    %2771 = vmatpush1.bf16.xpose.msra.mxu0 0
    %2772 = vmatprep.subr.bf16.mxu0 0
    %2773 = vmatpush1.bf16.xpose.msra.mxu0 %v2756
    %2774 = vmatprep.subr.bf16.mxu0 0
    %2775 = vmatpush2.bf16.xpose.msra.mxu0 0
    %2776 = vmatprep.subr.bf16.mxu0 0
    %2777 = vmatpush2.bf16.xpose.msra.mxu0 0
    %2778 = vmatprep.subr.bf16.mxu0 0
    %2779 = vmatpush2.bf16.xpose.msra.mxu0 0
    %2780 = vmatprep.subr.bf16.mxu0 0
    %2781 = vmatpush2.bf16.xpose.msra.mxu0 0
    %2782 = vmatprep.subr.bf16.mxu0 0
    %2783 = vmatpush2.bf16.xpose.msra.mxu0 0
    %2784 = vmatprep.subr.bf16.mxu0 0
    %2785 = vmatpush2.bf16.xpose.msra.mxu0 0
    %2786 = vmatprep.subr.bf16.mxu0 0
    %2787 = vmatpush2.bf16.xpose.msra.mxu0 0
    %2788 = vmatprep.subr.bf16.mxu0 0
    %2789 = vmatpush2.bf16.xpose.msra.mxu0 0
    %2790 = vmatprep.mubr.bf16.mxu0 0
    %2791 = vmatmul.mubr.bf16.gmra.mxu0 %v2753
    %v2792 = vpop.f32.mrf.mxu0
    %v2793 = vadd.f32 0.0, %v2792
    %v2794 = vpop.f32.mrf.mxu0
    %v2795 = vpop.f32.mrf.mxu0
    %v2796 = vadd.f32 0.0, %v2795
    %v2797 = vpop.f32.mrf.mxu0
    %2798 = vdwg.mxu0
    %2799 = vrot.lane.b32.xlu0 %v144, 56
    %v2800 = vpop.permute.xlu0 %2799
    %2801 = vrot.lane.b32.xlu0 %v2208, 120
    %v2802 = vpop.permute.xlu0 %2801
    %v2804 = vsel %vm147, %v2800, 0
    %v2807 = vsel %vm147, %v2802, 0
    %2809 = vmatprep.subr.bf16.mxu0 0
    %2810 = vmatpush1.bf16.xpose.msra.mxu0 0
    %2811 = vmatprep.subr.bf16.mxu0 0
    %2812 = vmatpush1.bf16.xpose.msra.mxu0 0
    %2813 = vmatprep.subr.bf16.mxu0 0
    %2814 = vmatpush1.bf16.xpose.msra.mxu0 0
    %2815 = vmatprep.subr.bf16.mxu0 0
    %2816 = vmatpush1.bf16.xpose.msra.mxu0 0
    %2817 = vmatprep.subr.bf16.mxu0 0
    %2818 = vmatpush1.bf16.xpose.msra.mxu0 0
    %2819 = vmatprep.subr.bf16.mxu0 0
    %2820 = vmatpush1.bf16.xpose.msra.mxu0 0
    %2821 = vmatprep.subr.bf16.mxu0 0
    %2822 = vmatpush1.bf16.xpose.msra.mxu0 0
    %2823 = vmatprep.subr.bf16.mxu0 0
    %2824 = vmatpush1.bf16.xpose.msra.mxu0 %v2807
    %2825 = vmatprep.subr.bf16.mxu0 0
    %2826 = vmatpush2.bf16.xpose.msra.mxu0 0
    %2827 = vmatprep.subr.bf16.mxu0 0
    %2828 = vmatpush2.bf16.xpose.msra.mxu0 0
    %2829 = vmatprep.subr.bf16.mxu0 0
    %2830 = vmatpush2.bf16.xpose.msra.mxu0 0
    %2831 = vmatprep.subr.bf16.mxu0 0
    %2832 = vmatpush2.bf16.xpose.msra.mxu0 0
    %2833 = vmatprep.subr.bf16.mxu0 0
    %2834 = vmatpush2.bf16.xpose.msra.mxu0 0
    %2835 = vmatprep.subr.bf16.mxu0 0
    %2836 = vmatpush2.bf16.xpose.msra.mxu0 0
    %2837 = vmatprep.subr.bf16.mxu0 0
    %2838 = vmatpush2.bf16.xpose.msra.mxu0 0
    %2839 = vmatprep.subr.bf16.mxu0 0
    %2840 = vmatpush2.bf16.xpose.msra.mxu0 0
    %2841 = vmatprep.mubr.bf16.mxu0 0
    %2842 = vmatmul.mubr.bf16.gmra.mxu0 %v2804
    %v2843 = vpop.f32.mrf.mxu0
    %v2844 = vadd.f32 0.0, %v2843
    %v2845 = vpop.f32.mrf.mxu0
    %v2846 = vpop.f32.mrf.mxu0
    %v2847 = vadd.f32 0.0, %v2846
    %v2848 = vpop.f32.mrf.mxu0
    %2849 = vdwg.mxu0
    %2850 = vrot.lane.b32.xlu0 %v145, 56
    %v2851 = vpop.permute.xlu0 %2850
    %2852 = vrot.lane.b32.xlu0 %v2209, 120
    %v2853 = vpop.permute.xlu0 %2852
    %v2855 = vsel %vm147, %v2851, 0
    %v2858 = vsel %vm147, %v2853, 0
    %2860 = vmatprep.subr.bf16.mxu0 0
    %2861 = vmatpush1.bf16.xpose.msra.mxu0 0
    %2862 = vmatprep.subr.bf16.mxu0 0
    %2863 = vmatpush1.bf16.xpose.msra.mxu0 0
    %2864 = vmatprep.subr.bf16.mxu0 0
    %2865 = vmatpush1.bf16.xpose.msra.mxu0 0
    %2866 = vmatprep.subr.bf16.mxu0 0
    %2867 = vmatpush1.bf16.xpose.msra.mxu0 0
    %2868 = vmatprep.subr.bf16.mxu0 0
    %2869 = vmatpush1.bf16.xpose.msra.mxu0 0
    %2870 = vmatprep.subr.bf16.mxu0 0
    %2871 = vmatpush1.bf16.xpose.msra.mxu0 0
    %2872 = vmatprep.subr.bf16.mxu0 0
    %2873 = vmatpush1.bf16.xpose.msra.mxu0 0
    %2874 = vmatprep.subr.bf16.mxu0 0
    %2875 = vmatpush1.bf16.xpose.msra.mxu0 %v2858
    %2876 = vmatprep.subr.bf16.mxu0 0
    %2877 = vmatpush2.bf16.xpose.msra.mxu0 0
    %2878 = vmatprep.subr.bf16.mxu0 0
    %2879 = vmatpush2.bf16.xpose.msra.mxu0 0
    %2880 = vmatprep.subr.bf16.mxu0 0
    %2881 = vmatpush2.bf16.xpose.msra.mxu0 0
    %2882 = vmatprep.subr.bf16.mxu0 0
    %2883 = vmatpush2.bf16.xpose.msra.mxu0 0
    %2884 = vmatprep.subr.bf16.mxu0 0
    %2885 = vmatpush2.bf16.xpose.msra.mxu0 0
    %2886 = vmatprep.subr.bf16.mxu0 0
    %2887 = vmatpush2.bf16.xpose.msra.mxu0 0
    %2888 = vmatprep.subr.bf16.mxu0 0
    %2889 = vmatpush2.bf16.xpose.msra.mxu0 0
    %2890 = vmatprep.subr.bf16.mxu0 0
    %2891 = vmatpush2.bf16.xpose.msra.mxu0 0
    %2892 = vmatprep.mubr.bf16.mxu0 0
    %2893 = vmatmul.mubr.bf16.gmra.mxu0 %v2855
    %v2894 = vpop.f32.mrf.mxu0
    %v2895 = vadd.f32 0.0, %v2894
    %v2896 = vpop.f32.mrf.mxu0
    %v2897 = vpop.f32.mrf.mxu0
    %v2898 = vadd.f32 0.0, %v2897
    %v2899 = vpop.f32.mrf.mxu0
    %2900 = vdwg.mxu0
    %2901 = vrot.lane.b32.xlu0 %v146, 56
    %v2902 = vpop.permute.xlu0 %2901
    %2903 = vrot.lane.b32.xlu0 %v2210, 120
    %v2904 = vpop.permute.xlu0 %2903
    %v2906 = vsel %vm147, %v2902, 0
    %v2909 = vsel %vm147, %v2904, 0
    %2911 = vmatprep.subr.bf16.mxu0 0
    %2912 = vmatpush1.bf16.xpose.msra.mxu0 0
    %2913 = vmatprep.subr.bf16.mxu0 0
    %2914 = vmatpush1.bf16.xpose.msra.mxu0 0
    %2915 = vmatprep.subr.bf16.mxu0 0
    %2916 = vmatpush1.bf16.xpose.msra.mxu0 0
    %2917 = vmatprep.subr.bf16.mxu0 0
    %2918 = vmatpush1.bf16.xpose.msra.mxu0 0
    %2919 = vmatprep.subr.bf16.mxu0 0
    %2920 = vmatpush1.bf16.xpose.msra.mxu0 0
    %2921 = vmatprep.subr.bf16.mxu0 0
    %2922 = vmatpush1.bf16.xpose.msra.mxu0 0
    %2923 = vmatprep.subr.bf16.mxu0 0
    %2924 = vmatpush1.bf16.xpose.msra.mxu0 0
    %2925 = vmatprep.subr.bf16.mxu0 0
    %2926 = vmatpush1.bf16.xpose.msra.mxu0 %v2909
    %2927 = vmatprep.subr.bf16.mxu0 0
    %2928 = vmatpush2.bf16.xpose.msra.mxu0 0
    %2929 = vmatprep.subr.bf16.mxu0 0
    %2930 = vmatpush2.bf16.xpose.msra.mxu0 0
    %2931 = vmatprep.subr.bf16.mxu0 0
    %2932 = vmatpush2.bf16.xpose.msra.mxu0 0
    %2933 = vmatprep.subr.bf16.mxu0 0
    %2934 = vmatpush2.bf16.xpose.msra.mxu0 0
    %2935 = vmatprep.subr.bf16.mxu0 0
    %2936 = vmatpush2.bf16.xpose.msra.mxu0 0
    %2937 = vmatprep.subr.bf16.mxu0 0
    %2938 = vmatpush2.bf16.xpose.msra.mxu0 0
    %2939 = vmatprep.subr.bf16.mxu0 0
    %2940 = vmatpush2.bf16.xpose.msra.mxu0 0
    %2941 = vmatprep.subr.bf16.mxu0 0
    %2942 = vmatpush2.bf16.xpose.msra.mxu0 0
    %2943 = vmatprep.mubr.bf16.mxu0 0
    %2944 = vmatmul.mubr.bf16.gmra.mxu0 %v2906
    %v2945 = vpop.f32.mrf.mxu0
    %v2946 = vadd.f32 0.0, %v2945
    %v2947 = vpop.f32.mrf.mxu0
    %v2948 = vpop.f32.mrf.mxu0
    %v2949 = vadd.f32 0.0, %v2948
    %v2950 = vpop.f32.mrf.mxu0
    %2951 = vdwg.mxu0
    %v2952 = vmul.f32 %v2793, 0.17677669
    %v2953 = vmul.f32 %v2796, 0.17677669
    %v2954 = vmul.f32 %v2844, 0.17677669
    %v2955 = vmul.f32 %v2847, 0.17677669
    %v2956 = vmul.f32 %v2895, 0.17677669
    %v2957 = vmul.f32 %v2898, 0.17677669
    %v2958 = vmul.f32 %v2946, 0.17677669
    %v2959 = vmul.f32 %v2949, 0.17677669
    %v2960 = vsel %vm147, %v2952, -inf
    %2961 = vmax.xlane.f32.xlu0 %v2960
    %v2962 = vpop.xlane.xlu0 %2961
    %v2963 = vsel %vm147, %v2953, -inf
    %2964 = vmax.xlane.f32.xlu0 %v2963
    %v2965 = vpop.xlane.xlu0 %2964
    %v2966 = vsel %vm147, %v2954, -inf
    %2967 = vmax.xlane.f32.xlu0 %v2966
    %v2968 = vpop.xlane.xlu0 %2967
    %v2969 = vsel %vm147, %v2955, -inf
    %2970 = vmax.xlane.f32.xlu0 %v2969
    %v2971 = vpop.xlane.xlu0 %2970
    %v2972 = vsel %vm147, %v2956, -inf
    %2973 = vmax.xlane.f32.xlu0 %v2972
    %v2974 = vpop.xlane.xlu0 %2973
    %v2975 = vsel %vm147, %v2957, -inf
    %2976 = vmax.xlane.f32.xlu0 %v2975
    %v2977 = vpop.xlane.xlu0 %2976
    %v2978 = vsel %vm147, %v2958, -inf
    %2979 = vmax.xlane.f32.xlu0 %v2978
    %v2980 = vpop.xlane.xlu0 %2979
    %v2981 = vsel %vm147, %v2959, -inf
    %2982 = vmax.xlane.f32.xlu0 %v2981
    %v2983 = vpop.xlane.xlu0 %2982
    %v2984 = vsub.f32 %v2952, %v2962
    %v2985 = vsub.f32 %v2953, %v2965
    %v2986 = vsub.f32 %v2954, %v2968
    %v2987 = vsub.f32 %v2955, %v2971
    %v2988 = vsub.f32 %v2956, %v2974
    %v2989 = vsub.f32 %v2957, %v2977
    %v2990 = vsub.f32 %v2958, %v2980
    %v2991 = vsub.f32 %v2959, %v2983
    %v2992 = vmul.f32 %v2984, 1.442695
    %v2993 = vpow.pop %v2992
    %v2994 = vmul.f32 %v2985, 1.442695
    %v2995 = vpow.pop %v2994
    %v2996 = vmul.f32 %v2986, 1.442695
    %v2997 = vpow.pop %v2996
    %v2998 = vmul.f32 %v2987, 1.442695
    %v2999 = vpow.pop %v2998
    %v3000 = vmul.f32 %v2988, 1.442695
    %v3001 = vpow.pop %v3000
    %v3002 = vmul.f32 %v2989, 1.442695
    %v3003 = vpow.pop %v3002
    %v3004 = vmul.f32 %v2990, 1.442695
    %v3005 = vpow.pop %v3004
    %v3006 = vmul.f32 %v2991, 1.442695
    %v3007 = vpow.pop %v3006
    %v3008 = vsel %vm147, %v2993, 0.0
    %3009 = vadd.xlane.f32.xlu0 %v3008
    %v3010 = vpop.xlane.xlu0 %3009
    %v3011 = vsel %vm147, %v2995, 0.0
    %3012 = vadd.xlane.f32.xlu0 %v3011
    %v3013 = vpop.xlane.xlu0 %3012
    %v3014 = vsel %vm147, %v2997, 0.0
    %3015 = vadd.xlane.f32.xlu0 %v3014
    %v3016 = vpop.xlane.xlu0 %3015
    %v3017 = vsel %vm147, %v2999, 0.0
    %3018 = vadd.xlane.f32.xlu0 %v3017
    %v3019 = vpop.xlane.xlu0 %3018
    %v3020 = vsel %vm147, %v3001, 0.0
    %3021 = vadd.xlane.f32.xlu0 %v3020
    %v3022 = vpop.xlane.xlu0 %3021
    %v3023 = vsel %vm147, %v3003, 0.0
    %3024 = vadd.xlane.f32.xlu0 %v3023
    %v3025 = vpop.xlane.xlu0 %3024
    %v3026 = vsel %vm147, %v3005, 0.0
    %3027 = vadd.xlane.f32.xlu0 %v3026
    %v3028 = vpop.xlane.xlu0 %3027
    %v3029 = vsel %vm147, %v3007, 0.0
    %3030 = vadd.xlane.f32.xlu0 %v3029
    %v3031 = vpop.xlane.xlu0 %3030
    %v3032 = vrcp.pop %v3010
    %v3033 = vrcp.pop %v3013
    %v3034 = vrcp.pop %v3016
    %v3035 = vrcp.pop %v3019
    %v3036 = vrcp.pop %v3022
    %v3037 = vrcp.pop %v3025
    %v3038 = vrcp.pop %v3028
    %v3039 = vrcp.pop %v3031
    %v3040 = vmul.f32 %v2993, %v3032
    %v3041 = vmul.f32 %v2995, %v3033
    %v3042 = vmul.f32 %v2997, %v3034
    %v3043 = vmul.f32 %v2999, %v3035
    %v3044 = vmul.f32 %v3001, %v3036
    %v3045 = vmul.f32 %v3003, %v3037
    %v3046 = vmul.f32 %v3005, %v3038
    %v3047 = vmul.f32 %v3007, %v3039
    %v3048 = vpack.c.bf16 %v3041, %v3040
    %v3049 = vpack.c.bf16 %v3043, %v3042
    %v3050 = vpack.c.bf16 %v3045, %v3044
    %v3051 = vpack.c.bf16 %v3047, %v3046
    %3052 = vrot.lane.b32.xlu0 %v2207, 88
    %v3053 = vpop.permute.xlu0 %3052
    %v3055 = vsel %vm147, %v3048, 0
    %v3058 = vsel %vm2513, %v3053, 0
    %3060 = vmatprep.subr.bf16.mxu0 0
    %3061 = vmatpush1.bf16.msra.mxu0 0
    %3062 = vmatprep.subr.bf16.mxu0 0
    %3063 = vmatpush1.bf16.msra.mxu0 0
    %3064 = vmatprep.subr.bf16.mxu0 0
    %3065 = vmatpush1.bf16.msra.mxu0 0
    %3066 = vmatprep.subr.bf16.mxu0 0
    %3067 = vmatpush1.bf16.msra.mxu0 0
    %3068 = vmatprep.subr.bf16.mxu0 0
    %3069 = vmatpush1.bf16.msra.mxu0 0
    %3070 = vmatprep.subr.bf16.mxu0 0
    %3071 = vmatpush1.bf16.msra.mxu0 0
    %3072 = vmatprep.subr.bf16.mxu0 0
    %3073 = vmatpush1.bf16.msra.mxu0 0
    %3074 = vmatprep.subr.bf16.mxu0 0
    %3075 = vmatpush1.bf16.msra.mxu0 %v3058
    %3076 = vmatprep.subr.bf16.mxu0 0
    %3077 = vmatpush2.bf16.msra.mxu0 0
    %3078 = vmatprep.subr.bf16.mxu0 0
    %3079 = vmatpush2.bf16.msra.mxu0 0
    %3080 = vmatprep.subr.bf16.mxu0 0
    %3081 = vmatpush2.bf16.msra.mxu0 0
    %3082 = vmatprep.subr.bf16.mxu0 0
    %3083 = vmatpush2.bf16.msra.mxu0 0
    %3084 = vmatprep.subr.bf16.mxu0 0
    %3085 = vmatpush2.bf16.msra.mxu0 0
    %3086 = vmatprep.subr.bf16.mxu0 0
    %3087 = vmatpush2.bf16.msra.mxu0 0
    %3088 = vmatprep.subr.bf16.mxu0 0
    %3089 = vmatpush2.bf16.msra.mxu0 0
    %3090 = vmatprep.subr.bf16.mxu0 0
    %3091 = vmatpush2.bf16.msra.mxu0 0
    %3092 = vmatprep.mubr.bf16.mxu0 0
    %3093 = vmatmul.mubr.bf16.gmra.mxu0 %v3055
    %v3094 = vpop.f32.mrf.mxu0
    %v3095 = vadd.f32 0.0, %v3094
    %v3096 = vpop.f32.mrf.mxu0
    %v3097 = vpop.f32.mrf.mxu0
    %v3098 = vadd.f32 0.0, %v3097
    %v3099 = vpop.f32.mrf.mxu0
    %3100 = vdwg.mxu0
    %3101 = vrot.lane.b32.xlu0 %v2208, 88
    %v3102 = vpop.permute.xlu0 %3101
    %v3104 = vsel %vm147, %v3049, 0
    %v3107 = vsel %vm2513, %v3102, 0
    %3109 = vmatprep.subr.bf16.mxu0 0
    %3110 = vmatpush1.bf16.msra.mxu0 0
    %3111 = vmatprep.subr.bf16.mxu0 0
    %3112 = vmatpush1.bf16.msra.mxu0 0
    %3113 = vmatprep.subr.bf16.mxu0 0
    %3114 = vmatpush1.bf16.msra.mxu0 0
    %3115 = vmatprep.subr.bf16.mxu0 0
    %3116 = vmatpush1.bf16.msra.mxu0 0
    %3117 = vmatprep.subr.bf16.mxu0 0
    %3118 = vmatpush1.bf16.msra.mxu0 0
    %3119 = vmatprep.subr.bf16.mxu0 0
    %3120 = vmatpush1.bf16.msra.mxu0 0
    %3121 = vmatprep.subr.bf16.mxu0 0
    %3122 = vmatpush1.bf16.msra.mxu0 0
    %3123 = vmatprep.subr.bf16.mxu0 0
    %3124 = vmatpush1.bf16.msra.mxu0 %v3107
    %3125 = vmatprep.subr.bf16.mxu0 0
    %3126 = vmatpush2.bf16.msra.mxu0 0
    %3127 = vmatprep.subr.bf16.mxu0 0
    %3128 = vmatpush2.bf16.msra.mxu0 0
    %3129 = vmatprep.subr.bf16.mxu0 0
    %3130 = vmatpush2.bf16.msra.mxu0 0
    %3131 = vmatprep.subr.bf16.mxu0 0
    %3132 = vmatpush2.bf16.msra.mxu0 0
    %3133 = vmatprep.subr.bf16.mxu0 0
    %3134 = vmatpush2.bf16.msra.mxu0 0
    %3135 = vmatprep.subr.bf16.mxu0 0
    %3136 = vmatpush2.bf16.msra.mxu0 0
    %3137 = vmatprep.subr.bf16.mxu0 0
    %3138 = vmatpush2.bf16.msra.mxu0 0
    %3139 = vmatprep.subr.bf16.mxu0 0
    %3140 = vmatpush2.bf16.msra.mxu0 0
    %3141 = vmatprep.mubr.bf16.mxu0 0
    %3142 = vmatmul.mubr.bf16.gmra.mxu0 %v3104
    %v3143 = vpop.f32.mrf.mxu0
    %v3144 = vadd.f32 0.0, %v3143
    %v3145 = vpop.f32.mrf.mxu0
    %v3146 = vpop.f32.mrf.mxu0
    %v3147 = vadd.f32 0.0, %v3146
    %v3148 = vpop.f32.mrf.mxu0
    %3149 = vdwg.mxu0
    %3150 = vrot.lane.b32.xlu0 %v2209, 88
    %v3151 = vpop.permute.xlu0 %3150
    %v3153 = vsel %vm147, %v3050, 0
    %v3156 = vsel %vm2513, %v3151, 0
    %3158 = vmatprep.subr.bf16.mxu0 0
    %3159 = vmatpush1.bf16.msra.mxu0 0
    %3160 = vmatprep.subr.bf16.mxu0 0
    %3161 = vmatpush1.bf16.msra.mxu0 0
    %3162 = vmatprep.subr.bf16.mxu0 0
    %3163 = vmatpush1.bf16.msra.mxu0 0
    %3164 = vmatprep.subr.bf16.mxu0 0
    %3165 = vmatpush1.bf16.msra.mxu0 0
    %3166 = vmatprep.subr.bf16.mxu0 0
    %3167 = vmatpush1.bf16.msra.mxu0 0
    %3168 = vmatprep.subr.bf16.mxu0 0
    %3169 = vmatpush1.bf16.msra.mxu0 0
    %3170 = vmatprep.subr.bf16.mxu0 0
    %3171 = vmatpush1.bf16.msra.mxu0 0
    %3172 = vmatprep.subr.bf16.mxu0 0
    %3173 = vmatpush1.bf16.msra.mxu0 %v3156
    %3174 = vmatprep.subr.bf16.mxu0 0
    %3175 = vmatpush2.bf16.msra.mxu0 0
    %3176 = vmatprep.subr.bf16.mxu0 0
    %3177 = vmatpush2.bf16.msra.mxu0 0
    %3178 = vmatprep.subr.bf16.mxu0 0
    %3179 = vmatpush2.bf16.msra.mxu0 0
    %3180 = vmatprep.subr.bf16.mxu0 0
    %3181 = vmatpush2.bf16.msra.mxu0 0
    %3182 = vmatprep.subr.bf16.mxu0 0
    %3183 = vmatpush2.bf16.msra.mxu0 0
    %3184 = vmatprep.subr.bf16.mxu0 0
    %3185 = vmatpush2.bf16.msra.mxu0 0
    %3186 = vmatprep.subr.bf16.mxu0 0
    %3187 = vmatpush2.bf16.msra.mxu0 0
    %3188 = vmatprep.subr.bf16.mxu0 0
    %3189 = vmatpush2.bf16.msra.mxu0 0
    %3190 = vmatprep.mubr.bf16.mxu0 0
    %3191 = vmatmul.mubr.bf16.gmra.mxu0 %v3153
    %v3192 = vpop.f32.mrf.mxu0
    %v3193 = vadd.f32 0.0, %v3192
    %v3194 = vpop.f32.mrf.mxu0
    %v3195 = vpop.f32.mrf.mxu0
    %v3196 = vadd.f32 0.0, %v3195
    %v3197 = vpop.f32.mrf.mxu0
    %3198 = vdwg.mxu0
    %3199 = vrot.lane.b32.xlu0 %v2210, 88
    %v3200 = vpop.permute.xlu0 %3199
    %v3202 = vsel %vm147, %v3051, 0
    %v3205 = vsel %vm2513, %v3200, 0
    %3207 = vmatprep.subr.bf16.mxu0 0
    %3208 = vmatpush1.bf16.msra.mxu0 0
    %3209 = vmatprep.subr.bf16.mxu0 0
    %3210 = vmatpush1.bf16.msra.mxu0 0
    %3211 = vmatprep.subr.bf16.mxu0 0
    %3212 = vmatpush1.bf16.msra.mxu0 0
    %3213 = vmatprep.subr.bf16.mxu0 0
    %3214 = vmatpush1.bf16.msra.mxu0 0
    %3215 = vmatprep.subr.bf16.mxu0 0
    %3216 = vmatpush1.bf16.msra.mxu0 0
    %3217 = vmatprep.subr.bf16.mxu0 0
    %3218 = vmatpush1.bf16.msra.mxu0 0
    %3219 = vmatprep.subr.bf16.mxu0 0
    %3220 = vmatpush1.bf16.msra.mxu0 0
    %3221 = vmatprep.subr.bf16.mxu0 0
    %3222 = vmatpush1.bf16.msra.mxu0 %v3205
    %3223 = vmatprep.subr.bf16.mxu0 0
    %3224 = vmatpush2.bf16.msra.mxu0 0
    %3225 = vmatprep.subr.bf16.mxu0 0
    %3226 = vmatpush2.bf16.msra.mxu0 0
    %3227 = vmatprep.subr.bf16.mxu0 0
    %3228 = vmatpush2.bf16.msra.mxu0 0
    %3229 = vmatprep.subr.bf16.mxu0 0
    %3230 = vmatpush2.bf16.msra.mxu0 0
    %3231 = vmatprep.subr.bf16.mxu0 0
    %3232 = vmatpush2.bf16.msra.mxu0 0
    %3233 = vmatprep.subr.bf16.mxu0 0
    %3234 = vmatpush2.bf16.msra.mxu0 0
    %3235 = vmatprep.subr.bf16.mxu0 0
    %3236 = vmatpush2.bf16.msra.mxu0 0
    %3237 = vmatprep.subr.bf16.mxu0 0
    %3238 = vmatpush2.bf16.msra.mxu0 0
    %3239 = vmatprep.mubr.bf16.mxu0 0
    %3240 = vmatmul.mubr.bf16.gmra.mxu0 %v3202
    %v3241 = vpop.f32.mrf.mxu0
    %v3242 = vadd.f32 0.0, %v3241
    %v3243 = vpop.f32.mrf.mxu0
    %v3244 = vpop.f32.mrf.mxu0
    %v3245 = vadd.f32 0.0, %v3244
    %v3246 = vpop.f32.mrf.mxu0
    %3247 = vdwg.mxu0
    %3256 = vrot.lane.b32.xlu0 %v3095, 72
    %v3257 = vpop.permute.xlu0 %3256
    %3258 = vrot.lane.b32.xlu0 %v3098, 72
    %v3259 = vpop.permute.xlu0 %3258
    %3260 = vrot.lane.b32.xlu0 %v3144, 72
    %v3261 = vpop.permute.xlu0 %3260
    %3262 = vrot.lane.b32.xlu0 %v3147, 72
    %v3263 = vpop.permute.xlu0 %3262
    %3264 = vrot.lane.b32.xlu0 %v3193, 72
    %v3265 = vpop.permute.xlu0 %3264
    %3266 = vrot.lane.b32.xlu0 %v3196, 72
    %v3267 = vpop.permute.xlu0 %3266
    %3268 = vrot.lane.b32.xlu0 %v3242, 72
    %v3269 = vpop.permute.xlu0 %3268
    %3270 = vrot.lane.b32.xlu0 %v3245, 72
    %v3271 = vpop.permute.xlu0 %3270
    %v3280 = vadd.f32 %v111, %v3257
    %v3281 = vadd.f32 %v114, %v3259
    %v3282 = vadd.f32 %v119, %v3261
    %v3283 = vadd.f32 %v122, %v3263
    %v3284 = vadd.f32 %v127, %v3265
    %v3285 = vadd.f32 %v130, %v3267
    %v3286 = vadd.f32 %v135, %v3269
    %v3287 = vadd.f32 %v138, %v3271
    %3288 = vrot.lane.b32.xlu0 %v143, 48
    %v3289 = vpop.permute.xlu0 %3288
    %3290 = vrot.lane.b32.xlu0 %v2207, 112
    %v3291 = vpop.permute.xlu0 %3290
    %v3293 = vsel %vm147, %v3289, 0
    %v3296 = vsel %vm147, %v3291, 0
    %3298 = vmatprep.subr.bf16.mxu0 0
    %3299 = vmatpush1.bf16.xpose.msra.mxu0 0
    %3300 = vmatprep.subr.bf16.mxu0 0
    %3301 = vmatpush1.bf16.xpose.msra.mxu0 0
    %3302 = vmatprep.subr.bf16.mxu0 0
    %3303 = vmatpush1.bf16.xpose.msra.mxu0 0
    %3304 = vmatprep.subr.bf16.mxu0 0
    %3305 = vmatpush1.bf16.xpose.msra.mxu0 0
    %3306 = vmatprep.subr.bf16.mxu0 0
    %3307 = vmatpush1.bf16.xpose.msra.mxu0 0
    %3308 = vmatprep.subr.bf16.mxu0 0
    %3309 = vmatpush1.bf16.xpose.msra.mxu0 0
    %3310 = vmatprep.subr.bf16.mxu0 0
    %3311 = vmatpush1.bf16.xpose.msra.mxu0 0
    %3312 = vmatprep.subr.bf16.mxu0 0
    %3313 = vmatpush1.bf16.xpose.msra.mxu0 %v3296
    %3314 = vmatprep.subr.bf16.mxu0 0
    %3315 = vmatpush2.bf16.xpose.msra.mxu0 0
    %3316 = vmatprep.subr.bf16.mxu0 0
    %3317 = vmatpush2.bf16.xpose.msra.mxu0 0
    %3318 = vmatprep.subr.bf16.mxu0 0
    %3319 = vmatpush2.bf16.xpose.msra.mxu0 0
    %3320 = vmatprep.subr.bf16.mxu0 0
    %3321 = vmatpush2.bf16.xpose.msra.mxu0 0
    %3322 = vmatprep.subr.bf16.mxu0 0
    %3323 = vmatpush2.bf16.xpose.msra.mxu0 0
    %3324 = vmatprep.subr.bf16.mxu0 0
    %3325 = vmatpush2.bf16.xpose.msra.mxu0 0
    %3326 = vmatprep.subr.bf16.mxu0 0
    %3327 = vmatpush2.bf16.xpose.msra.mxu0 0
    %3328 = vmatprep.subr.bf16.mxu0 0
    %3329 = vmatpush2.bf16.xpose.msra.mxu0 0
    %3330 = vmatprep.mubr.bf16.mxu0 0
    %3331 = vmatmul.mubr.bf16.gmra.mxu0 %v3293
    %v3332 = vpop.f32.mrf.mxu0
    %v3333 = vadd.f32 0.0, %v3332
    %v3334 = vpop.f32.mrf.mxu0
    %v3335 = vpop.f32.mrf.mxu0
    %v3336 = vadd.f32 0.0, %v3335
    %v3337 = vpop.f32.mrf.mxu0
    %3338 = vdwg.mxu0
    %3339 = vrot.lane.b32.xlu0 %v144, 48
    %v3340 = vpop.permute.xlu0 %3339
    %3341 = vrot.lane.b32.xlu0 %v2208, 112
    %v3342 = vpop.permute.xlu0 %3341
    %v3344 = vsel %vm147, %v3340, 0
    %v3347 = vsel %vm147, %v3342, 0
    %3349 = vmatprep.subr.bf16.mxu0 0
    %3350 = vmatpush1.bf16.xpose.msra.mxu0 0
    %3351 = vmatprep.subr.bf16.mxu0 0
    %3352 = vmatpush1.bf16.xpose.msra.mxu0 0
    %3353 = vmatprep.subr.bf16.mxu0 0
    %3354 = vmatpush1.bf16.xpose.msra.mxu0 0
    %3355 = vmatprep.subr.bf16.mxu0 0
    %3356 = vmatpush1.bf16.xpose.msra.mxu0 0
    %3357 = vmatprep.subr.bf16.mxu0 0
    %3358 = vmatpush1.bf16.xpose.msra.mxu0 0
    %3359 = vmatprep.subr.bf16.mxu0 0
    %3360 = vmatpush1.bf16.xpose.msra.mxu0 0
    %3361 = vmatprep.subr.bf16.mxu0 0
    %3362 = vmatpush1.bf16.xpose.msra.mxu0 0
    %3363 = vmatprep.subr.bf16.mxu0 0
    %3364 = vmatpush1.bf16.xpose.msra.mxu0 %v3347
    %3365 = vmatprep.subr.bf16.mxu0 0
    %3366 = vmatpush2.bf16.xpose.msra.mxu0 0
    %3367 = vmatprep.subr.bf16.mxu0 0
    %3368 = vmatpush2.bf16.xpose.msra.mxu0 0
    %3369 = vmatprep.subr.bf16.mxu0 0
    %3370 = vmatpush2.bf16.xpose.msra.mxu0 0
    %3371 = vmatprep.subr.bf16.mxu0 0
    %3372 = vmatpush2.bf16.xpose.msra.mxu0 0
    %3373 = vmatprep.subr.bf16.mxu0 0
    %3374 = vmatpush2.bf16.xpose.msra.mxu0 0
    %3375 = vmatprep.subr.bf16.mxu0 0
    %3376 = vmatpush2.bf16.xpose.msra.mxu0 0
    %3377 = vmatprep.subr.bf16.mxu0 0
    %3378 = vmatpush2.bf16.xpose.msra.mxu0 0
    %3379 = vmatprep.subr.bf16.mxu0 0
    %3380 = vmatpush2.bf16.xpose.msra.mxu0 0
    %3381 = vmatprep.mubr.bf16.mxu0 0
    %3382 = vmatmul.mubr.bf16.gmra.mxu0 %v3344
    %v3383 = vpop.f32.mrf.mxu0
    %v3384 = vadd.f32 0.0, %v3383
    %v3385 = vpop.f32.mrf.mxu0
    %v3386 = vpop.f32.mrf.mxu0
    %v3387 = vadd.f32 0.0, %v3386
    %v3388 = vpop.f32.mrf.mxu0
    %3389 = vdwg.mxu0
    %3390 = vrot.lane.b32.xlu0 %v145, 48
    %v3391 = vpop.permute.xlu0 %3390
    %3392 = vrot.lane.b32.xlu0 %v2209, 112
    %v3393 = vpop.permute.xlu0 %3392
    %v3395 = vsel %vm147, %v3391, 0
    %v3398 = vsel %vm147, %v3393, 0
    %3400 = vmatprep.subr.bf16.mxu0 0
    %3401 = vmatpush1.bf16.xpose.msra.mxu0 0
    %3402 = vmatprep.subr.bf16.mxu0 0
    %3403 = vmatpush1.bf16.xpose.msra.mxu0 0
    %3404 = vmatprep.subr.bf16.mxu0 0
    %3405 = vmatpush1.bf16.xpose.msra.mxu0 0
    %3406 = vmatprep.subr.bf16.mxu0 0
    %3407 = vmatpush1.bf16.xpose.msra.mxu0 0
    %3408 = vmatprep.subr.bf16.mxu0 0
    %3409 = vmatpush1.bf16.xpose.msra.mxu0 0
    %3410 = vmatprep.subr.bf16.mxu0 0
    %3411 = vmatpush1.bf16.xpose.msra.mxu0 0
    %3412 = vmatprep.subr.bf16.mxu0 0
    %3413 = vmatpush1.bf16.xpose.msra.mxu0 0
    %3414 = vmatprep.subr.bf16.mxu0 0
    %3415 = vmatpush1.bf16.xpose.msra.mxu0 %v3398
    %3416 = vmatprep.subr.bf16.mxu0 0
    %3417 = vmatpush2.bf16.xpose.msra.mxu0 0
    %3418 = vmatprep.subr.bf16.mxu0 0
    %3419 = vmatpush2.bf16.xpose.msra.mxu0 0
    %3420 = vmatprep.subr.bf16.mxu0 0
    %3421 = vmatpush2.bf16.xpose.msra.mxu0 0
    %3422 = vmatprep.subr.bf16.mxu0 0
    %3423 = vmatpush2.bf16.xpose.msra.mxu0 0
    %3424 = vmatprep.subr.bf16.mxu0 0
    %3425 = vmatpush2.bf16.xpose.msra.mxu0 0
    %3426 = vmatprep.subr.bf16.mxu0 0
    %3427 = vmatpush2.bf16.xpose.msra.mxu0 0
    %3428 = vmatprep.subr.bf16.mxu0 0
    %3429 = vmatpush2.bf16.xpose.msra.mxu0 0
    %3430 = vmatprep.subr.bf16.mxu0 0
    %3431 = vmatpush2.bf16.xpose.msra.mxu0 0
    %3432 = vmatprep.mubr.bf16.mxu0 0
    %3433 = vmatmul.mubr.bf16.gmra.mxu0 %v3395
    %v3434 = vpop.f32.mrf.mxu0
    %v3435 = vadd.f32 0.0, %v3434
    %v3436 = vpop.f32.mrf.mxu0
    %v3437 = vpop.f32.mrf.mxu0
    %v3438 = vadd.f32 0.0, %v3437
    %v3439 = vpop.f32.mrf.mxu0
    %3440 = vdwg.mxu0
    %3441 = vrot.lane.b32.xlu0 %v146, 48
    %v3442 = vpop.permute.xlu0 %3441
    %3443 = vrot.lane.b32.xlu0 %v2210, 112
    %v3444 = vpop.permute.xlu0 %3443
    %v3446 = vsel %vm147, %v3442, 0
    %v3449 = vsel %vm147, %v3444, 0
    %3451 = vmatprep.subr.bf16.mxu0 0
    %3452 = vmatpush1.bf16.xpose.msra.mxu0 0
    %3453 = vmatprep.subr.bf16.mxu0 0
    %3454 = vmatpush1.bf16.xpose.msra.mxu0 0
    %3455 = vmatprep.subr.bf16.mxu0 0
    %3456 = vmatpush1.bf16.xpose.msra.mxu0 0
    %3457 = vmatprep.subr.bf16.mxu0 0
    %3458 = vmatpush1.bf16.xpose.msra.mxu0 0
    %3459 = vmatprep.subr.bf16.mxu0 0
    %3460 = vmatpush1.bf16.xpose.msra.mxu0 0
    %3461 = vmatprep.subr.bf16.mxu0 0
    %3462 = vmatpush1.bf16.xpose.msra.mxu0 0
    %3463 = vmatprep.subr.bf16.mxu0 0
    %3464 = vmatpush1.bf16.xpose.msra.mxu0 0
    %3465 = vmatprep.subr.bf16.mxu0 0
    %3466 = vmatpush1.bf16.xpose.msra.mxu0 %v3449
    %3467 = vmatprep.subr.bf16.mxu0 0
    %3468 = vmatpush2.bf16.xpose.msra.mxu0 0
    %3469 = vmatprep.subr.bf16.mxu0 0
    %3470 = vmatpush2.bf16.xpose.msra.mxu0 0
    %3471 = vmatprep.subr.bf16.mxu0 0
    %3472 = vmatpush2.bf16.xpose.msra.mxu0 0
    %3473 = vmatprep.subr.bf16.mxu0 0
    %3474 = vmatpush2.bf16.xpose.msra.mxu0 0
    %3475 = vmatprep.subr.bf16.mxu0 0
    %3476 = vmatpush2.bf16.xpose.msra.mxu0 0
    %3477 = vmatprep.subr.bf16.mxu0 0
    %3478 = vmatpush2.bf16.xpose.msra.mxu0 0
    %3479 = vmatprep.subr.bf16.mxu0 0
    %3480 = vmatpush2.bf16.xpose.msra.mxu0 0
    %3481 = vmatprep.subr.bf16.mxu0 0
    %3482 = vmatpush2.bf16.xpose.msra.mxu0 0
    %3483 = vmatprep.mubr.bf16.mxu0 0
    %3484 = vmatmul.mubr.bf16.gmra.mxu0 %v3446
    %v3485 = vpop.f32.mrf.mxu0
    %v3486 = vadd.f32 0.0, %v3485
    %v3487 = vpop.f32.mrf.mxu0
    %v3488 = vpop.f32.mrf.mxu0
    %v3489 = vadd.f32 0.0, %v3488
    %v3490 = vpop.f32.mrf.mxu0
    %3491 = vdwg.mxu0
    %v3492 = vmul.f32 %v3333, 0.17677669
    %v3493 = vmul.f32 %v3336, 0.17677669
    %v3494 = vmul.f32 %v3384, 0.17677669
    %v3495 = vmul.f32 %v3387, 0.17677669
    %v3496 = vmul.f32 %v3435, 0.17677669
    %v3497 = vmul.f32 %v3438, 0.17677669
    %v3498 = vmul.f32 %v3486, 0.17677669
    %v3499 = vmul.f32 %v3489, 0.17677669
    %v3500 = vsel %vm147, %v3492, -inf
    %3501 = vmax.xlane.f32.xlu0 %v3500
    %v3502 = vpop.xlane.xlu0 %3501
    %v3503 = vsel %vm147, %v3493, -inf
    %3504 = vmax.xlane.f32.xlu0 %v3503
    %v3505 = vpop.xlane.xlu0 %3504
    %v3506 = vsel %vm147, %v3494, -inf
    %3507 = vmax.xlane.f32.xlu0 %v3506
    %v3508 = vpop.xlane.xlu0 %3507
    %v3509 = vsel %vm147, %v3495, -inf
    %3510 = vmax.xlane.f32.xlu0 %v3509
    %v3511 = vpop.xlane.xlu0 %3510
    %v3512 = vsel %vm147, %v3496, -inf
    %3513 = vmax.xlane.f32.xlu0 %v3512
    %v3514 = vpop.xlane.xlu0 %3513
    %v3515 = vsel %vm147, %v3497, -inf
    %3516 = vmax.xlane.f32.xlu0 %v3515
    %v3517 = vpop.xlane.xlu0 %3516
    %v3518 = vsel %vm147, %v3498, -inf
    %3519 = vmax.xlane.f32.xlu0 %v3518
    %v3520 = vpop.xlane.xlu0 %3519
    %v3521 = vsel %vm147, %v3499, -inf
    %3522 = vmax.xlane.f32.xlu0 %v3521
    %v3523 = vpop.xlane.xlu0 %3522
    %v3524 = vsub.f32 %v3492, %v3502
    %v3525 = vsub.f32 %v3493, %v3505
    %v3526 = vsub.f32 %v3494, %v3508
    %v3527 = vsub.f32 %v3495, %v3511
    %v3528 = vsub.f32 %v3496, %v3514
    %v3529 = vsub.f32 %v3497, %v3517
    %v3530 = vsub.f32 %v3498, %v3520
    %v3531 = vsub.f32 %v3499, %v3523
    %v3532 = vmul.f32 %v3524, 1.442695
    %v3533 = vpow.pop %v3532
    %v3534 = vmul.f32 %v3525, 1.442695
    %v3535 = vpow.pop %v3534
    %v3536 = vmul.f32 %v3526, 1.442695
    %v3537 = vpow.pop %v3536
    %v3538 = vmul.f32 %v3527, 1.442695
    %v3539 = vpow.pop %v3538
    %v3540 = vmul.f32 %v3528, 1.442695
    %v3541 = vpow.pop %v3540
    %v3542 = vmul.f32 %v3529, 1.442695
    %v3543 = vpow.pop %v3542
    %v3544 = vmul.f32 %v3530, 1.442695
    %v3545 = vpow.pop %v3544
    %v3546 = vmul.f32 %v3531, 1.442695
    %v3547 = vpow.pop %v3546
    %v3548 = vsel %vm147, %v3533, 0.0
    %3549 = vadd.xlane.f32.xlu0 %v3548
    %v3550 = vpop.xlane.xlu0 %3549
    %v3551 = vsel %vm147, %v3535, 0.0
    %3552 = vadd.xlane.f32.xlu0 %v3551
    %v3553 = vpop.xlane.xlu0 %3552
    %v3554 = vsel %vm147, %v3537, 0.0
    %3555 = vadd.xlane.f32.xlu0 %v3554
    %v3556 = vpop.xlane.xlu0 %3555
    %v3557 = vsel %vm147, %v3539, 0.0
    %3558 = vadd.xlane.f32.xlu0 %v3557
    %v3559 = vpop.xlane.xlu0 %3558
    %v3560 = vsel %vm147, %v3541, 0.0
    %3561 = vadd.xlane.f32.xlu0 %v3560
    %v3562 = vpop.xlane.xlu0 %3561
    %v3563 = vsel %vm147, %v3543, 0.0
    %3564 = vadd.xlane.f32.xlu0 %v3563
    %v3565 = vpop.xlane.xlu0 %3564
    %v3566 = vsel %vm147, %v3545, 0.0
    %3567 = vadd.xlane.f32.xlu0 %v3566
    %v3568 = vpop.xlane.xlu0 %3567
    %v3569 = vsel %vm147, %v3547, 0.0
    %3570 = vadd.xlane.f32.xlu0 %v3569
    %v3571 = vpop.xlane.xlu0 %3570
    %v3572 = vrcp.pop %v3550
    %v3573 = vrcp.pop %v3553
    %v3574 = vrcp.pop %v3556
    %v3575 = vrcp.pop %v3559
    %v3576 = vrcp.pop %v3562
    %v3577 = vrcp.pop %v3565
    %v3578 = vrcp.pop %v3568
    %v3579 = vrcp.pop %v3571
    %v3580 = vmul.f32 %v3533, %v3572
    %v3581 = vmul.f32 %v3535, %v3573
    %v3582 = vmul.f32 %v3537, %v3574
    %v3583 = vmul.f32 %v3539, %v3575
    %v3584 = vmul.f32 %v3541, %v3576
    %v3585 = vmul.f32 %v3543, %v3577
    %v3586 = vmul.f32 %v3545, %v3578
    %v3587 = vmul.f32 %v3547, %v3579
    %v3588 = vpack.c.bf16 %v3581, %v3580
    %v3589 = vpack.c.bf16 %v3583, %v3582
    %v3590 = vpack.c.bf16 %v3585, %v3584
    %v3591 = vpack.c.bf16 %v3587, %v3586
    %3592 = vrot.lane.b32.xlu0 %v2207, 80
    %v3593 = vpop.permute.xlu0 %3592
    %v3595 = vsel %vm147, %v3588, 0
    %v3598 = vsel %vm2513, %v3593, 0
    %3600 = vmatprep.subr.bf16.mxu0 0
    %3601 = vmatpush1.bf16.msra.mxu0 0
    %3602 = vmatprep.subr.bf16.mxu0 0
    %3603 = vmatpush1.bf16.msra.mxu0 0
    %3604 = vmatprep.subr.bf16.mxu0 0
    %3605 = vmatpush1.bf16.msra.mxu0 0
    %3606 = vmatprep.subr.bf16.mxu0 0
    %3607 = vmatpush1.bf16.msra.mxu0 0
    %3608 = vmatprep.subr.bf16.mxu0 0
    %3609 = vmatpush1.bf16.msra.mxu0 0
    %3610 = vmatprep.subr.bf16.mxu0 0
    %3611 = vmatpush1.bf16.msra.mxu0 0
    %3612 = vmatprep.subr.bf16.mxu0 0
    %3613 = vmatpush1.bf16.msra.mxu0 0
    %3614 = vmatprep.subr.bf16.mxu0 0
    %3615 = vmatpush1.bf16.msra.mxu0 %v3598
    %3616 = vmatprep.subr.bf16.mxu0 0
    %3617 = vmatpush2.bf16.msra.mxu0 0
    %3618 = vmatprep.subr.bf16.mxu0 0
    %3619 = vmatpush2.bf16.msra.mxu0 0
    %3620 = vmatprep.subr.bf16.mxu0 0
    %3621 = vmatpush2.bf16.msra.mxu0 0
    %3622 = vmatprep.subr.bf16.mxu0 0
    %3623 = vmatpush2.bf16.msra.mxu0 0
    %3624 = vmatprep.subr.bf16.mxu0 0
    %3625 = vmatpush2.bf16.msra.mxu0 0
    %3626 = vmatprep.subr.bf16.mxu0 0
    %3627 = vmatpush2.bf16.msra.mxu0 0
    %3628 = vmatprep.subr.bf16.mxu0 0
    %3629 = vmatpush2.bf16.msra.mxu0 0
    %3630 = vmatprep.subr.bf16.mxu0 0
    %3631 = vmatpush2.bf16.msra.mxu0 0
    %3632 = vmatprep.mubr.bf16.mxu0 0
    %3633 = vmatmul.mubr.bf16.gmra.mxu0 %v3595
    %v3634 = vpop.f32.mrf.mxu0
    %v3635 = vadd.f32 0.0, %v3634
    %v3636 = vpop.f32.mrf.mxu0
    %v3637 = vpop.f32.mrf.mxu0
    %v3638 = vadd.f32 0.0, %v3637
    %v3639 = vpop.f32.mrf.mxu0
    %3640 = vdwg.mxu0
    %3641 = vrot.lane.b32.xlu0 %v2208, 80
    %v3642 = vpop.permute.xlu0 %3641
    %v3644 = vsel %vm147, %v3589, 0
    %v3647 = vsel %vm2513, %v3642, 0
    %3649 = vmatprep.subr.bf16.mxu0 0
    %3650 = vmatpush1.bf16.msra.mxu0 0
    %3651 = vmatprep.subr.bf16.mxu0 0
    %3652 = vmatpush1.bf16.msra.mxu0 0
    %3653 = vmatprep.subr.bf16.mxu0 0
    %3654 = vmatpush1.bf16.msra.mxu0 0
    %3655 = vmatprep.subr.bf16.mxu0 0
    %3656 = vmatpush1.bf16.msra.mxu0 0
    %3657 = vmatprep.subr.bf16.mxu0 0
    %3658 = vmatpush1.bf16.msra.mxu0 0
    %3659 = vmatprep.subr.bf16.mxu0 0
    %3660 = vmatpush1.bf16.msra.mxu0 0
    %3661 = vmatprep.subr.bf16.mxu0 0
    %3662 = vmatpush1.bf16.msra.mxu0 0
    %3663 = vmatprep.subr.bf16.mxu0 0
    %3664 = vmatpush1.bf16.msra.mxu0 %v3647
    %3665 = vmatprep.subr.bf16.mxu0 0
    %3666 = vmatpush2.bf16.msra.mxu0 0
    %3667 = vmatprep.subr.bf16.mxu0 0
    %3668 = vmatpush2.bf16.msra.mxu0 0
    %3669 = vmatprep.subr.bf16.mxu0 0
    %3670 = vmatpush2.bf16.msra.mxu0 0
    %3671 = vmatprep.subr.bf16.mxu0 0
    %3672 = vmatpush2.bf16.msra.mxu0 0
    %3673 = vmatprep.subr.bf16.mxu0 0
    %3674 = vmatpush2.bf16.msra.mxu0 0
    %3675 = vmatprep.subr.bf16.mxu0 0
    %3676 = vmatpush2.bf16.msra.mxu0 0
    %3677 = vmatprep.subr.bf16.mxu0 0
    %3678 = vmatpush2.bf16.msra.mxu0 0
    %3679 = vmatprep.subr.bf16.mxu0 0
    %3680 = vmatpush2.bf16.msra.mxu0 0
    %3681 = vmatprep.mubr.bf16.mxu0 0
    %3682 = vmatmul.mubr.bf16.gmra.mxu0 %v3644
    %v3683 = vpop.f32.mrf.mxu0
    %v3684 = vadd.f32 0.0, %v3683
    %v3685 = vpop.f32.mrf.mxu0
    %v3686 = vpop.f32.mrf.mxu0
    %v3687 = vadd.f32 0.0, %v3686
    %v3688 = vpop.f32.mrf.mxu0
    %3689 = vdwg.mxu0
    %3690 = vrot.lane.b32.xlu0 %v2209, 80
    %v3691 = vpop.permute.xlu0 %3690
    %v3693 = vsel %vm147, %v3590, 0
    %v3696 = vsel %vm2513, %v3691, 0
    %3698 = vmatprep.subr.bf16.mxu0 0
    %3699 = vmatpush1.bf16.msra.mxu0 0
    %3700 = vmatprep.subr.bf16.mxu0 0
    %3701 = vmatpush1.bf16.msra.mxu0 0
    %3702 = vmatprep.subr.bf16.mxu0 0
    %3703 = vmatpush1.bf16.msra.mxu0 0
    %3704 = vmatprep.subr.bf16.mxu0 0
    %3705 = vmatpush1.bf16.msra.mxu0 0
    %3706 = vmatprep.subr.bf16.mxu0 0
    %3707 = vmatpush1.bf16.msra.mxu0 0
    %3708 = vmatprep.subr.bf16.mxu0 0
    %3709 = vmatpush1.bf16.msra.mxu0 0
    %3710 = vmatprep.subr.bf16.mxu0 0
    %3711 = vmatpush1.bf16.msra.mxu0 0
    %3712 = vmatprep.subr.bf16.mxu0 0
    %3713 = vmatpush1.bf16.msra.mxu0 %v3696
    %3714 = vmatprep.subr.bf16.mxu0 0
    %3715 = vmatpush2.bf16.msra.mxu0 0
    %3716 = vmatprep.subr.bf16.mxu0 0
    %3717 = vmatpush2.bf16.msra.mxu0 0
    %3718 = vmatprep.subr.bf16.mxu0 0
    %3719 = vmatpush2.bf16.msra.mxu0 0
    %3720 = vmatprep.subr.bf16.mxu0 0
    %3721 = vmatpush2.bf16.msra.mxu0 0
    %3722 = vmatprep.subr.bf16.mxu0 0
    %3723 = vmatpush2.bf16.msra.mxu0 0
    %3724 = vmatprep.subr.bf16.mxu0 0
    %3725 = vmatpush2.bf16.msra.mxu0 0
    %3726 = vmatprep.subr.bf16.mxu0 0
    %3727 = vmatpush2.bf16.msra.mxu0 0
    %3728 = vmatprep.subr.bf16.mxu0 0
    %3729 = vmatpush2.bf16.msra.mxu0 0
    %3730 = vmatprep.mubr.bf16.mxu0 0
    %3731 = vmatmul.mubr.bf16.gmra.mxu0 %v3693
    %v3732 = vpop.f32.mrf.mxu0
    %v3733 = vadd.f32 0.0, %v3732
    %v3734 = vpop.f32.mrf.mxu0
    %v3735 = vpop.f32.mrf.mxu0
    %v3736 = vadd.f32 0.0, %v3735
    %v3737 = vpop.f32.mrf.mxu0
    %3738 = vdwg.mxu0
    %3739 = vrot.lane.b32.xlu0 %v2210, 80
    %v3740 = vpop.permute.xlu0 %3739
    %v3742 = vsel %vm147, %v3591, 0
    %v3745 = vsel %vm2513, %v3740, 0
    %3747 = vmatprep.subr.bf16.mxu0 0
    %3748 = vmatpush1.bf16.msra.mxu0 0
    %3749 = vmatprep.subr.bf16.mxu0 0
    %3750 = vmatpush1.bf16.msra.mxu0 0
    %3751 = vmatprep.subr.bf16.mxu0 0
    %3752 = vmatpush1.bf16.msra.mxu0 0
    %3753 = vmatprep.subr.bf16.mxu0 0
    %3754 = vmatpush1.bf16.msra.mxu0 0
    %3755 = vmatprep.subr.bf16.mxu0 0
    %3756 = vmatpush1.bf16.msra.mxu0 0
    %3757 = vmatprep.subr.bf16.mxu0 0
    %3758 = vmatpush1.bf16.msra.mxu0 0
    %3759 = vmatprep.subr.bf16.mxu0 0
    %3760 = vmatpush1.bf16.msra.mxu0 0
    %3761 = vmatprep.subr.bf16.mxu0 0
    %3762 = vmatpush1.bf16.msra.mxu0 %v3745
    %3763 = vmatprep.subr.bf16.mxu0 0
    %3764 = vmatpush2.bf16.msra.mxu0 0
    %3765 = vmatprep.subr.bf16.mxu0 0
    %3766 = vmatpush2.bf16.msra.mxu0 0
    %3767 = vmatprep.subr.bf16.mxu0 0
    %3768 = vmatpush2.bf16.msra.mxu0 0
    %3769 = vmatprep.subr.bf16.mxu0 0
    %3770 = vmatpush2.bf16.msra.mxu0 0
    %3771 = vmatprep.subr.bf16.mxu0 0
    %3772 = vmatpush2.bf16.msra.mxu0 0
    %3773 = vmatprep.subr.bf16.mxu0 0
    %3774 = vmatpush2.bf16.msra.mxu0 0
    %3775 = vmatprep.subr.bf16.mxu0 0
    %3776 = vmatpush2.bf16.msra.mxu0 0
    %3777 = vmatprep.subr.bf16.mxu0 0
    %3778 = vmatpush2.bf16.msra.mxu0 0
    %3779 = vmatprep.mubr.bf16.mxu0 0
    %3780 = vmatmul.mubr.bf16.gmra.mxu0 %v3742
    %v3781 = vpop.f32.mrf.mxu0
    %v3782 = vadd.f32 0.0, %v3781
    %v3783 = vpop.f32.mrf.mxu0
    %v3784 = vpop.f32.mrf.mxu0
    %v3785 = vadd.f32 0.0, %v3784
    %v3786 = vpop.f32.mrf.mxu0
    %3787 = vdwg.mxu0
    %3796 = vrot.lane.b32.xlu0 %v3635, 80
    %v3797 = vpop.permute.xlu0 %3796
    %3798 = vrot.lane.b32.xlu0 %v3638, 80
    %v3799 = vpop.permute.xlu0 %3798
    %3800 = vrot.lane.b32.xlu0 %v3684, 80
    %v3801 = vpop.permute.xlu0 %3800
    %3802 = vrot.lane.b32.xlu0 %v3687, 80
    %v3803 = vpop.permute.xlu0 %3802
    %3804 = vrot.lane.b32.xlu0 %v3733, 80
    %v3805 = vpop.permute.xlu0 %3804
    %3806 = vrot.lane.b32.xlu0 %v3736, 80
    %v3807 = vpop.permute.xlu0 %3806
    %3808 = vrot.lane.b32.xlu0 %v3782, 80
    %v3809 = vpop.permute.xlu0 %3808
    %3810 = vrot.lane.b32.xlu0 %v3785, 80
    %v3811 = vpop.permute.xlu0 %3810
    %v3820 = vadd.f32 %v111, %v3797
    %v3821 = vadd.f32 %v114, %v3799
    %v3822 = vadd.f32 %v119, %v3801
    %v3823 = vadd.f32 %v122, %v3803
    %v3824 = vadd.f32 %v127, %v3805
    %v3825 = vadd.f32 %v130, %v3807
    %v3826 = vadd.f32 %v135, %v3809
    %v3827 = vadd.f32 %v138, %v3811
    %3828 = vrot.lane.b32.xlu0 %v143, 40
    %v3829 = vpop.permute.xlu0 %3828
    %3830 = vrot.lane.b32.xlu0 %v2207, 104
    %v3831 = vpop.permute.xlu0 %3830
    %v3833 = vsel %vm147, %v3829, 0
    %v3836 = vsel %vm147, %v3831, 0
    %3838 = vmatprep.subr.bf16.mxu0 0
    %3839 = vmatpush1.bf16.xpose.msra.mxu0 0
    %3840 = vmatprep.subr.bf16.mxu0 0
    %3841 = vmatpush1.bf16.xpose.msra.mxu0 0
    %3842 = vmatprep.subr.bf16.mxu0 0
    %3843 = vmatpush1.bf16.xpose.msra.mxu0 0
    %3844 = vmatprep.subr.bf16.mxu0 0
    %3845 = vmatpush1.bf16.xpose.msra.mxu0 0
    %3846 = vmatprep.subr.bf16.mxu0 0
    %3847 = vmatpush1.bf16.xpose.msra.mxu0 0
    %3848 = vmatprep.subr.bf16.mxu0 0
    %3849 = vmatpush1.bf16.xpose.msra.mxu0 0
    %3850 = vmatprep.subr.bf16.mxu0 0
    %3851 = vmatpush1.bf16.xpose.msra.mxu0 0
    %3852 = vmatprep.subr.bf16.mxu0 0
    %3853 = vmatpush1.bf16.xpose.msra.mxu0 %v3836
    %3854 = vmatprep.subr.bf16.mxu0 0
    %3855 = vmatpush2.bf16.xpose.msra.mxu0 0
    %3856 = vmatprep.subr.bf16.mxu0 0
    %3857 = vmatpush2.bf16.xpose.msra.mxu0 0
    %3858 = vmatprep.subr.bf16.mxu0 0
    %3859 = vmatpush2.bf16.xpose.msra.mxu0 0
    %3860 = vmatprep.subr.bf16.mxu0 0
    %3861 = vmatpush2.bf16.xpose.msra.mxu0 0
    %3862 = vmatprep.subr.bf16.mxu0 0
    %3863 = vmatpush2.bf16.xpose.msra.mxu0 0
    %3864 = vmatprep.subr.bf16.mxu0 0
    %3865 = vmatpush2.bf16.xpose.msra.mxu0 0
    %3866 = vmatprep.subr.bf16.mxu0 0
    %3867 = vmatpush2.bf16.xpose.msra.mxu0 0
    %3868 = vmatprep.subr.bf16.mxu0 0
    %3869 = vmatpush2.bf16.xpose.msra.mxu0 0
    %3870 = vmatprep.mubr.bf16.mxu0 0
    %3871 = vmatmul.mubr.bf16.gmra.mxu0 %v3833
    %v3872 = vpop.f32.mrf.mxu0
    %v3873 = vadd.f32 0.0, %v3872
    %v3874 = vpop.f32.mrf.mxu0
    %v3875 = vpop.f32.mrf.mxu0
    %v3876 = vadd.f32 0.0, %v3875
    %v3877 = vpop.f32.mrf.mxu0
    %3878 = vdwg.mxu0
    %3879 = vrot.lane.b32.xlu0 %v144, 40
    %v3880 = vpop.permute.xlu0 %3879
    %3881 = vrot.lane.b32.xlu0 %v2208, 104
    %v3882 = vpop.permute.xlu0 %3881
    %v3884 = vsel %vm147, %v3880, 0
    %v3887 = vsel %vm147, %v3882, 0
    %3889 = vmatprep.subr.bf16.mxu0 0
    %3890 = vmatpush1.bf16.xpose.msra.mxu0 0
    %3891 = vmatprep.subr.bf16.mxu0 0
    %3892 = vmatpush1.bf16.xpose.msra.mxu0 0
    %3893 = vmatprep.subr.bf16.mxu0 0
    %3894 = vmatpush1.bf16.xpose.msra.mxu0 0
    %3895 = vmatprep.subr.bf16.mxu0 0
    %3896 = vmatpush1.bf16.xpose.msra.mxu0 0
    %3897 = vmatprep.subr.bf16.mxu0 0
    %3898 = vmatpush1.bf16.xpose.msra.mxu0 0
    %3899 = vmatprep.subr.bf16.mxu0 0
    %3900 = vmatpush1.bf16.xpose.msra.mxu0 0
    %3901 = vmatprep.subr.bf16.mxu0 0
    %3902 = vmatpush1.bf16.xpose.msra.mxu0 0
    %3903 = vmatprep.subr.bf16.mxu0 0
    %3904 = vmatpush1.bf16.xpose.msra.mxu0 %v3887
    %3905 = vmatprep.subr.bf16.mxu0 0
    %3906 = vmatpush2.bf16.xpose.msra.mxu0 0
    %3907 = vmatprep.subr.bf16.mxu0 0
    %3908 = vmatpush2.bf16.xpose.msra.mxu0 0
    %3909 = vmatprep.subr.bf16.mxu0 0
    %3910 = vmatpush2.bf16.xpose.msra.mxu0 0
    %3911 = vmatprep.subr.bf16.mxu0 0
    %3912 = vmatpush2.bf16.xpose.msra.mxu0 0
    %3913 = vmatprep.subr.bf16.mxu0 0
    %3914 = vmatpush2.bf16.xpose.msra.mxu0 0
    %3915 = vmatprep.subr.bf16.mxu0 0
    %3916 = vmatpush2.bf16.xpose.msra.mxu0 0
    %3917 = vmatprep.subr.bf16.mxu0 0
    %3918 = vmatpush2.bf16.xpose.msra.mxu0 0
    %3919 = vmatprep.subr.bf16.mxu0 0
    %3920 = vmatpush2.bf16.xpose.msra.mxu0 0
    %3921 = vmatprep.mubr.bf16.mxu0 0
    %3922 = vmatmul.mubr.bf16.gmra.mxu0 %v3884
    %v3923 = vpop.f32.mrf.mxu0
    %v3924 = vadd.f32 0.0, %v3923
    %v3925 = vpop.f32.mrf.mxu0
    %v3926 = vpop.f32.mrf.mxu0
    %v3927 = vadd.f32 0.0, %v3926
    %v3928 = vpop.f32.mrf.mxu0
    %3929 = vdwg.mxu0
    %3930 = vrot.lane.b32.xlu0 %v145, 40
    %v3931 = vpop.permute.xlu0 %3930
    %3932 = vrot.lane.b32.xlu0 %v2209, 104
    %v3933 = vpop.permute.xlu0 %3932
    %v3935 = vsel %vm147, %v3931, 0
    %v3938 = vsel %vm147, %v3933, 0
    %3940 = vmatprep.subr.bf16.mxu0 0
    %3941 = vmatpush1.bf16.xpose.msra.mxu0 0
    %3942 = vmatprep.subr.bf16.mxu0 0
    %3943 = vmatpush1.bf16.xpose.msra.mxu0 0
    %3944 = vmatprep.subr.bf16.mxu0 0
    %3945 = vmatpush1.bf16.xpose.msra.mxu0 0
    %3946 = vmatprep.subr.bf16.mxu0 0
    %3947 = vmatpush1.bf16.xpose.msra.mxu0 0
    %3948 = vmatprep.subr.bf16.mxu0 0
    %3949 = vmatpush1.bf16.xpose.msra.mxu0 0
    %3950 = vmatprep.subr.bf16.mxu0 0
    %3951 = vmatpush1.bf16.xpose.msra.mxu0 0
    %3952 = vmatprep.subr.bf16.mxu0 0
    %3953 = vmatpush1.bf16.xpose.msra.mxu0 0
    %3954 = vmatprep.subr.bf16.mxu0 0
    %3955 = vmatpush1.bf16.xpose.msra.mxu0 %v3938
    %3956 = vmatprep.subr.bf16.mxu0 0
    %3957 = vmatpush2.bf16.xpose.msra.mxu0 0
    %3958 = vmatprep.subr.bf16.mxu0 0
    %3959 = vmatpush2.bf16.xpose.msra.mxu0 0
    %3960 = vmatprep.subr.bf16.mxu0 0
    %3961 = vmatpush2.bf16.xpose.msra.mxu0 0
    %3962 = vmatprep.subr.bf16.mxu0 0
    %3963 = vmatpush2.bf16.xpose.msra.mxu0 0
    %3964 = vmatprep.subr.bf16.mxu0 0
    %3965 = vmatpush2.bf16.xpose.msra.mxu0 0
    %3966 = vmatprep.subr.bf16.mxu0 0
    %3967 = vmatpush2.bf16.xpose.msra.mxu0 0
    %3968 = vmatprep.subr.bf16.mxu0 0
    %3969 = vmatpush2.bf16.xpose.msra.mxu0 0
    %3970 = vmatprep.subr.bf16.mxu0 0
    %3971 = vmatpush2.bf16.xpose.msra.mxu0 0
    %3972 = vmatprep.mubr.bf16.mxu0 0
    %3973 = vmatmul.mubr.bf16.gmra.mxu0 %v3935
    %v3974 = vpop.f32.mrf.mxu0
    %v3975 = vadd.f32 0.0, %v3974
    %v3976 = vpop.f32.mrf.mxu0
    %v3977 = vpop.f32.mrf.mxu0
    %v3978 = vadd.f32 0.0, %v3977
    %v3979 = vpop.f32.mrf.mxu0
    %3980 = vdwg.mxu0
    %3981 = vrot.lane.b32.xlu0 %v146, 40
    %v3982 = vpop.permute.xlu0 %3981
    %3983 = vrot.lane.b32.xlu0 %v2210, 104
    %v3984 = vpop.permute.xlu0 %3983
    %v3986 = vsel %vm147, %v3982, 0
    %v3989 = vsel %vm147, %v3984, 0
    %3991 = vmatprep.subr.bf16.mxu0 0
    %3992 = vmatpush1.bf16.xpose.msra.mxu0 0
    %3993 = vmatprep.subr.bf16.mxu0 0
    %3994 = vmatpush1.bf16.xpose.msra.mxu0 0
    %3995 = vmatprep.subr.bf16.mxu0 0
    %3996 = vmatpush1.bf16.xpose.msra.mxu0 0
    %3997 = vmatprep.subr.bf16.mxu0 0
    %3998 = vmatpush1.bf16.xpose.msra.mxu0 0
    %3999 = vmatprep.subr.bf16.mxu0 0
    %4000 = vmatpush1.bf16.xpose.msra.mxu0 0
    %4001 = vmatprep.subr.bf16.mxu0 0
    %4002 = vmatpush1.bf16.xpose.msra.mxu0 0
    %4003 = vmatprep.subr.bf16.mxu0 0
    %4004 = vmatpush1.bf16.xpose.msra.mxu0 0
    %4005 = vmatprep.subr.bf16.mxu0 0
    %4006 = vmatpush1.bf16.xpose.msra.mxu0 %v3989
    %4007 = vmatprep.subr.bf16.mxu0 0
    %4008 = vmatpush2.bf16.xpose.msra.mxu0 0
    %4009 = vmatprep.subr.bf16.mxu0 0
    %4010 = vmatpush2.bf16.xpose.msra.mxu0 0
    %4011 = vmatprep.subr.bf16.mxu0 0
    %4012 = vmatpush2.bf16.xpose.msra.mxu0 0
    %4013 = vmatprep.subr.bf16.mxu0 0
    %4014 = vmatpush2.bf16.xpose.msra.mxu0 0
    %4015 = vmatprep.subr.bf16.mxu0 0
    %4016 = vmatpush2.bf16.xpose.msra.mxu0 0
    %4017 = vmatprep.subr.bf16.mxu0 0
    %4018 = vmatpush2.bf16.xpose.msra.mxu0 0
    %4019 = vmatprep.subr.bf16.mxu0 0
    %4020 = vmatpush2.bf16.xpose.msra.mxu0 0
    %4021 = vmatprep.subr.bf16.mxu0 0
    %4022 = vmatpush2.bf16.xpose.msra.mxu0 0
    %4023 = vmatprep.mubr.bf16.mxu0 0
    %4024 = vmatmul.mubr.bf16.gmra.mxu0 %v3986
    %v4025 = vpop.f32.mrf.mxu0
    %v4026 = vadd.f32 0.0, %v4025
    %v4027 = vpop.f32.mrf.mxu0
    %v4028 = vpop.f32.mrf.mxu0
    %v4029 = vadd.f32 0.0, %v4028
    %v4030 = vpop.f32.mrf.mxu0
    %4031 = vdwg.mxu0
    %v4032 = vmul.f32 %v3873, 0.17677669
    %v4033 = vmul.f32 %v3876, 0.17677669
    %v4034 = vmul.f32 %v3924, 0.17677669
    %v4035 = vmul.f32 %v3927, 0.17677669
    %v4036 = vmul.f32 %v3975, 0.17677669
    %v4037 = vmul.f32 %v3978, 0.17677669
    %v4038 = vmul.f32 %v4026, 0.17677669
    %v4039 = vmul.f32 %v4029, 0.17677669
    %v4040 = vsel %vm147, %v4032, -inf
    %4041 = vmax.xlane.f32.xlu0 %v4040
    %v4042 = vpop.xlane.xlu0 %4041
    %v4043 = vsel %vm147, %v4033, -inf
    %4044 = vmax.xlane.f32.xlu0 %v4043
    %v4045 = vpop.xlane.xlu0 %4044
    %v4046 = vsel %vm147, %v4034, -inf
    %4047 = vmax.xlane.f32.xlu0 %v4046
    %v4048 = vpop.xlane.xlu0 %4047
    %v4049 = vsel %vm147, %v4035, -inf
    %4050 = vmax.xlane.f32.xlu0 %v4049
    %v4051 = vpop.xlane.xlu0 %4050
    %v4052 = vsel %vm147, %v4036, -inf
    %4053 = vmax.xlane.f32.xlu0 %v4052
    %v4054 = vpop.xlane.xlu0 %4053
    %v4055 = vsel %vm147, %v4037, -inf
    %4056 = vmax.xlane.f32.xlu0 %v4055
    %v4057 = vpop.xlane.xlu0 %4056
    %v4058 = vsel %vm147, %v4038, -inf
    %4059 = vmax.xlane.f32.xlu0 %v4058
    %v4060 = vpop.xlane.xlu0 %4059
    %v4061 = vsel %vm147, %v4039, -inf
    %4062 = vmax.xlane.f32.xlu0 %v4061
    %v4063 = vpop.xlane.xlu0 %4062
    %v4064 = vsub.f32 %v4032, %v4042
    %v4065 = vsub.f32 %v4033, %v4045
    %v4066 = vsub.f32 %v4034, %v4048
    %v4067 = vsub.f32 %v4035, %v4051
    %v4068 = vsub.f32 %v4036, %v4054
    %v4069 = vsub.f32 %v4037, %v4057
    %v4070 = vsub.f32 %v4038, %v4060
    %v4071 = vsub.f32 %v4039, %v4063
    %v4072 = vmul.f32 %v4064, 1.442695
    %v4073 = vpow.pop %v4072
    %v4074 = vmul.f32 %v4065, 1.442695
    %v4075 = vpow.pop %v4074
    %v4076 = vmul.f32 %v4066, 1.442695
    %v4077 = vpow.pop %v4076
    %v4078 = vmul.f32 %v4067, 1.442695
    %v4079 = vpow.pop %v4078
    %v4080 = vmul.f32 %v4068, 1.442695
    %v4081 = vpow.pop %v4080
    %v4082 = vmul.f32 %v4069, 1.442695
    %v4083 = vpow.pop %v4082
    %v4084 = vmul.f32 %v4070, 1.442695
    %v4085 = vpow.pop %v4084
    %v4086 = vmul.f32 %v4071, 1.442695
    %v4087 = vpow.pop %v4086
    %v4088 = vsel %vm147, %v4073, 0.0
    %4089 = vadd.xlane.f32.xlu0 %v4088
    %v4090 = vpop.xlane.xlu0 %4089
    %v4091 = vsel %vm147, %v4075, 0.0
    %4092 = vadd.xlane.f32.xlu0 %v4091
    %v4093 = vpop.xlane.xlu0 %4092
    %v4094 = vsel %vm147, %v4077, 0.0
    %4095 = vadd.xlane.f32.xlu0 %v4094
    %v4096 = vpop.xlane.xlu0 %4095
    %v4097 = vsel %vm147, %v4079, 0.0
    %4098 = vadd.xlane.f32.xlu0 %v4097
    %v4099 = vpop.xlane.xlu0 %4098
    %v4100 = vsel %vm147, %v4081, 0.0
    %4101 = vadd.xlane.f32.xlu0 %v4100
    %v4102 = vpop.xlane.xlu0 %4101
    %v4103 = vsel %vm147, %v4083, 0.0
    %4104 = vadd.xlane.f32.xlu0 %v4103
    %v4105 = vpop.xlane.xlu0 %4104
    %v4106 = vsel %vm147, %v4085, 0.0
    %4107 = vadd.xlane.f32.xlu0 %v4106
    %v4108 = vpop.xlane.xlu0 %4107
    %v4109 = vsel %vm147, %v4087, 0.0
    %4110 = vadd.xlane.f32.xlu0 %v4109
    %v4111 = vpop.xlane.xlu0 %4110
    %v4112 = vrcp.pop %v4090
    %v4113 = vrcp.pop %v4093
    %v4114 = vrcp.pop %v4096
    %v4115 = vrcp.pop %v4099
    %v4116 = vrcp.pop %v4102
    %v4117 = vrcp.pop %v4105
    %v4118 = vrcp.pop %v4108
    %v4119 = vrcp.pop %v4111
    %v4120 = vmul.f32 %v4073, %v4112
    %v4121 = vmul.f32 %v4075, %v4113
    %v4122 = vmul.f32 %v4077, %v4114
    %v4123 = vmul.f32 %v4079, %v4115
    %v4124 = vmul.f32 %v4081, %v4116
    %v4125 = vmul.f32 %v4083, %v4117
    %v4126 = vmul.f32 %v4085, %v4118
    %v4127 = vmul.f32 %v4087, %v4119
    %v4128 = vpack.c.bf16 %v4121, %v4120
    %v4129 = vpack.c.bf16 %v4123, %v4122
    %v4130 = vpack.c.bf16 %v4125, %v4124
    %v4131 = vpack.c.bf16 %v4127, %v4126
    %4132 = vrot.lane.b32.xlu0 %v2207, 72
    %v4133 = vpop.permute.xlu0 %4132
    %v4135 = vsel %vm147, %v4128, 0
    %v4138 = vsel %vm2513, %v4133, 0
    %4140 = vmatprep.subr.bf16.mxu0 0
    %4141 = vmatpush1.bf16.msra.mxu0 0
    %4142 = vmatprep.subr.bf16.mxu0 0
    %4143 = vmatpush1.bf16.msra.mxu0 0
    %4144 = vmatprep.subr.bf16.mxu0 0
    %4145 = vmatpush1.bf16.msra.mxu0 0
    %4146 = vmatprep.subr.bf16.mxu0 0
    %4147 = vmatpush1.bf16.msra.mxu0 0
    %4148 = vmatprep.subr.bf16.mxu0 0
    %4149 = vmatpush1.bf16.msra.mxu0 0
    %4150 = vmatprep.subr.bf16.mxu0 0
    %4151 = vmatpush1.bf16.msra.mxu0 0
    %4152 = vmatprep.subr.bf16.mxu0 0
    %4153 = vmatpush1.bf16.msra.mxu0 0
    %4154 = vmatprep.subr.bf16.mxu0 0
    %4155 = vmatpush1.bf16.msra.mxu0 %v4138
    %4156 = vmatprep.subr.bf16.mxu0 0
    %4157 = vmatpush2.bf16.msra.mxu0 0
    %4158 = vmatprep.subr.bf16.mxu0 0
    %4159 = vmatpush2.bf16.msra.mxu0 0
    %4160 = vmatprep.subr.bf16.mxu0 0
    %4161 = vmatpush2.bf16.msra.mxu0 0
    %4162 = vmatprep.subr.bf16.mxu0 0
    %4163 = vmatpush2.bf16.msra.mxu0 0
    %4164 = vmatprep.subr.bf16.mxu0 0
    %4165 = vmatpush2.bf16.msra.mxu0 0
    %4166 = vmatprep.subr.bf16.mxu0 0
    %4167 = vmatpush2.bf16.msra.mxu0 0
    %4168 = vmatprep.subr.bf16.mxu0 0
    %4169 = vmatpush2.bf16.msra.mxu0 0
    %4170 = vmatprep.subr.bf16.mxu0 0
    %4171 = vmatpush2.bf16.msra.mxu0 0
    %4172 = vmatprep.mubr.bf16.mxu0 0
    %4173 = vmatmul.mubr.bf16.gmra.mxu0 %v4135
    %v4174 = vpop.f32.mrf.mxu0
    %v4175 = vadd.f32 0.0, %v4174
    %v4176 = vpop.f32.mrf.mxu0
    %v4177 = vpop.f32.mrf.mxu0
    %v4178 = vadd.f32 0.0, %v4177
    %v4179 = vpop.f32.mrf.mxu0
    %4180 = vdwg.mxu0
    %4181 = vrot.lane.b32.xlu0 %v2208, 72
    %v4182 = vpop.permute.xlu0 %4181
    %v4184 = vsel %vm147, %v4129, 0
    %v4187 = vsel %vm2513, %v4182, 0
    %4189 = vmatprep.subr.bf16.mxu0 0
    %4190 = vmatpush1.bf16.msra.mxu0 0
    %4191 = vmatprep.subr.bf16.mxu0 0
    %4192 = vmatpush1.bf16.msra.mxu0 0
    %4193 = vmatprep.subr.bf16.mxu0 0
    %4194 = vmatpush1.bf16.msra.mxu0 0
    %4195 = vmatprep.subr.bf16.mxu0 0
    %4196 = vmatpush1.bf16.msra.mxu0 0
    %4197 = vmatprep.subr.bf16.mxu0 0
    %4198 = vmatpush1.bf16.msra.mxu0 0
    %4199 = vmatprep.subr.bf16.mxu0 0
    %4200 = vmatpush1.bf16.msra.mxu0 0
    %4201 = vmatprep.subr.bf16.mxu0 0
    %4202 = vmatpush1.bf16.msra.mxu0 0
    %4203 = vmatprep.subr.bf16.mxu0 0
    %4204 = vmatpush1.bf16.msra.mxu0 %v4187
    %4205 = vmatprep.subr.bf16.mxu0 0
    %4206 = vmatpush2.bf16.msra.mxu0 0
    %4207 = vmatprep.subr.bf16.mxu0 0
    %4208 = vmatpush2.bf16.msra.mxu0 0
    %4209 = vmatprep.subr.bf16.mxu0 0
    %4210 = vmatpush2.bf16.msra.mxu0 0
    %4211 = vmatprep.subr.bf16.mxu0 0
    %4212 = vmatpush2.bf16.msra.mxu0 0
    %4213 = vmatprep.subr.bf16.mxu0 0
    %4214 = vmatpush2.bf16.msra.mxu0 0
    %4215 = vmatprep.subr.bf16.mxu0 0
    %4216 = vmatpush2.bf16.msra.mxu0 0
    %4217 = vmatprep.subr.bf16.mxu0 0
    %4218 = vmatpush2.bf16.msra.mxu0 0
    %4219 = vmatprep.subr.bf16.mxu0 0
    %4220 = vmatpush2.bf16.msra.mxu0 0
    %4221 = vmatprep.mubr.bf16.mxu0 0
    %4222 = vmatmul.mubr.bf16.gmra.mxu0 %v4184
    %v4223 = vpop.f32.mrf.mxu0
    %v4224 = vadd.f32 0.0, %v4223
    %v4225 = vpop.f32.mrf.mxu0
    %v4226 = vpop.f32.mrf.mxu0
    %v4227 = vadd.f32 0.0, %v4226
    %v4228 = vpop.f32.mrf.mxu0
    %4229 = vdwg.mxu0
    %4230 = vrot.lane.b32.xlu0 %v2209, 72
    %v4231 = vpop.permute.xlu0 %4230
    %v4233 = vsel %vm147, %v4130, 0
    %v4236 = vsel %vm2513, %v4231, 0
    %4238 = vmatprep.subr.bf16.mxu0 0
    %4239 = vmatpush1.bf16.msra.mxu0 0
    %4240 = vmatprep.subr.bf16.mxu0 0
    %4241 = vmatpush1.bf16.msra.mxu0 0
    %4242 = vmatprep.subr.bf16.mxu0 0
    %4243 = vmatpush1.bf16.msra.mxu0 0
    %4244 = vmatprep.subr.bf16.mxu0 0
    %4245 = vmatpush1.bf16.msra.mxu0 0
    %4246 = vmatprep.subr.bf16.mxu0 0
    %4247 = vmatpush1.bf16.msra.mxu0 0
    %4248 = vmatprep.subr.bf16.mxu0 0
    %4249 = vmatpush1.bf16.msra.mxu0 0
    %4250 = vmatprep.subr.bf16.mxu0 0
    %4251 = vmatpush1.bf16.msra.mxu0 0
    %4252 = vmatprep.subr.bf16.mxu0 0
    %4253 = vmatpush1.bf16.msra.mxu0 %v4236
    %4254 = vmatprep.subr.bf16.mxu0 0
    %4255 = vmatpush2.bf16.msra.mxu0 0
    %4256 = vmatprep.subr.bf16.mxu0 0
    %4257 = vmatpush2.bf16.msra.mxu0 0
    %4258 = vmatprep.subr.bf16.mxu0 0
    %4259 = vmatpush2.bf16.msra.mxu0 0
    %4260 = vmatprep.subr.bf16.mxu0 0
    %4261 = vmatpush2.bf16.msra.mxu0 0
    %4262 = vmatprep.subr.bf16.mxu0 0
    %4263 = vmatpush2.bf16.msra.mxu0 0
    %4264 = vmatprep.subr.bf16.mxu0 0
    %4265 = vmatpush2.bf16.msra.mxu0 0
    %4266 = vmatprep.subr.bf16.mxu0 0
    %4267 = vmatpush2.bf16.msra.mxu0 0
    %4268 = vmatprep.subr.bf16.mxu0 0
    %4269 = vmatpush2.bf16.msra.mxu0 0
    %4270 = vmatprep.mubr.bf16.mxu0 0
    %4271 = vmatmul.mubr.bf16.gmra.mxu0 %v4233
    %v4272 = vpop.f32.mrf.mxu0
    %v4273 = vadd.f32 0.0, %v4272
    %v4274 = vpop.f32.mrf.mxu0
    %v4275 = vpop.f32.mrf.mxu0
    %v4276 = vadd.f32 0.0, %v4275
    %v4277 = vpop.f32.mrf.mxu0
    %4278 = vdwg.mxu0
    %4279 = vrot.lane.b32.xlu0 %v2210, 72
    %v4280 = vpop.permute.xlu0 %4279
    %v4282 = vsel %vm147, %v4131, 0
    %v4285 = vsel %vm2513, %v4280, 0
    %4287 = vmatprep.subr.bf16.mxu0 0
    %4288 = vmatpush1.bf16.msra.mxu0 0
    %4289 = vmatprep.subr.bf16.mxu0 0
    %4290 = vmatpush1.bf16.msra.mxu0 0
    %4291 = vmatprep.subr.bf16.mxu0 0
    %4292 = vmatpush1.bf16.msra.mxu0 0
    %4293 = vmatprep.subr.bf16.mxu0 0
    %4294 = vmatpush1.bf16.msra.mxu0 0
    %4295 = vmatprep.subr.bf16.mxu0 0
    %4296 = vmatpush1.bf16.msra.mxu0 0
    %4297 = vmatprep.subr.bf16.mxu0 0
    %4298 = vmatpush1.bf16.msra.mxu0 0
    %4299 = vmatprep.subr.bf16.mxu0 0
    %4300 = vmatpush1.bf16.msra.mxu0 0
    %4301 = vmatprep.subr.bf16.mxu0 0
    %4302 = vmatpush1.bf16.msra.mxu0 %v4285
    %4303 = vmatprep.subr.bf16.mxu0 0
    %4304 = vmatpush2.bf16.msra.mxu0 0
    %4305 = vmatprep.subr.bf16.mxu0 0
    %4306 = vmatpush2.bf16.msra.mxu0 0
    %4307 = vmatprep.subr.bf16.mxu0 0
    %4308 = vmatpush2.bf16.msra.mxu0 0
    %4309 = vmatprep.subr.bf16.mxu0 0
    %4310 = vmatpush2.bf16.msra.mxu0 0
    %4311 = vmatprep.subr.bf16.mxu0 0
    %4312 = vmatpush2.bf16.msra.mxu0 0
    %4313 = vmatprep.subr.bf16.mxu0 0
    %4314 = vmatpush2.bf16.msra.mxu0 0
    %4315 = vmatprep.subr.bf16.mxu0 0
    %4316 = vmatpush2.bf16.msra.mxu0 0
    %4317 = vmatprep.subr.bf16.mxu0 0
    %4318 = vmatpush2.bf16.msra.mxu0 0
    %4319 = vmatprep.mubr.bf16.mxu0 0
    %4320 = vmatmul.mubr.bf16.gmra.mxu0 %v4282
    %v4321 = vpop.f32.mrf.mxu0
    %v4322 = vadd.f32 0.0, %v4321
    %v4323 = vpop.f32.mrf.mxu0
    %v4324 = vpop.f32.mrf.mxu0
    %v4325 = vadd.f32 0.0, %v4324
    %v4326 = vpop.f32.mrf.mxu0
    %4327 = vdwg.mxu0
    %4336 = vrot.lane.b32.xlu0 %v4175, 88
    %v4337 = vpop.permute.xlu0 %4336
    %4338 = vrot.lane.b32.xlu0 %v4178, 88
    %v4339 = vpop.permute.xlu0 %4338
    %4340 = vrot.lane.b32.xlu0 %v4224, 88
    %v4341 = vpop.permute.xlu0 %4340
    %4342 = vrot.lane.b32.xlu0 %v4227, 88
    %v4343 = vpop.permute.xlu0 %4342
    %4344 = vrot.lane.b32.xlu0 %v4273, 88
    %v4345 = vpop.permute.xlu0 %4344
    %4346 = vrot.lane.b32.xlu0 %v4276, 88
    %v4347 = vpop.permute.xlu0 %4346
    %4348 = vrot.lane.b32.xlu0 %v4322, 88
    %v4349 = vpop.permute.xlu0 %4348
    %4350 = vrot.lane.b32.xlu0 %v4325, 88
    %v4351 = vpop.permute.xlu0 %4350
    %v4360 = vadd.f32 %v111, %v4337
    %v4361 = vadd.f32 %v114, %v4339
    %v4362 = vadd.f32 %v119, %v4341
    %v4363 = vadd.f32 %v122, %v4343
    %v4364 = vadd.f32 %v127, %v4345
    %v4365 = vadd.f32 %v130, %v4347
    %v4366 = vadd.f32 %v135, %v4349
    %v4367 = vadd.f32 %v138, %v4351
    %4376 = vrot.lane.b32.xlu0 %v2740, 64
    %v4377 = vpop.permute.xlu0 %4376
    %4378 = vrot.lane.b32.xlu0 %v2741, 64
    %v4379 = vpop.permute.xlu0 %4378
    %4380 = vrot.lane.b32.xlu0 %v2742, 64
    %v4381 = vpop.permute.xlu0 %4380
    %4382 = vrot.lane.b32.xlu0 %v2743, 64
    %v4383 = vpop.permute.xlu0 %4382
    %4384 = vrot.lane.b32.xlu0 %v2744, 64
    %v4385 = vpop.permute.xlu0 %4384
    %4386 = vrot.lane.b32.xlu0 %v2745, 64
    %v4387 = vpop.permute.xlu0 %4386
    %4388 = vrot.lane.b32.xlu0 %v2746, 64
    %v4389 = vpop.permute.xlu0 %4388
    %4390 = vrot.lane.b32.xlu0 %v2747, 64
    %v4391 = vpop.permute.xlu0 %4390
    %4408 = vrot.lane.b32.xlu0 %v3280, 64
    %v4409 = vpop.permute.xlu0 %4408
    %4410 = vrot.lane.b32.xlu0 %v3281, 64
    %v4411 = vpop.permute.xlu0 %4410
    %4412 = vrot.lane.b32.xlu0 %v3282, 64
    %v4413 = vpop.permute.xlu0 %4412
    %4414 = vrot.lane.b32.xlu0 %v3283, 64
    %v4415 = vpop.permute.xlu0 %4414
    %4416 = vrot.lane.b32.xlu0 %v3284, 64
    %v4417 = vpop.permute.xlu0 %4416
    %4418 = vrot.lane.b32.xlu0 %v3285, 64
    %v4419 = vpop.permute.xlu0 %4418
    %4420 = vrot.lane.b32.xlu0 %v3286, 64
    %v4421 = vpop.permute.xlu0 %4420
    %4422 = vrot.lane.b32.xlu0 %v3287, 64
    %v4423 = vpop.permute.xlu0 %4422
    %4440 = vrot.lane.b32.xlu0 %v3820, 64
    %v4441 = vpop.permute.xlu0 %4440
    %4442 = vrot.lane.b32.xlu0 %v3821, 64
    %v4443 = vpop.permute.xlu0 %4442
    %4444 = vrot.lane.b32.xlu0 %v3822, 64
    %v4445 = vpop.permute.xlu0 %4444
    %4446 = vrot.lane.b32.xlu0 %v3823, 64
    %v4447 = vpop.permute.xlu0 %4446
    %4448 = vrot.lane.b32.xlu0 %v3824, 64
    %v4449 = vpop.permute.xlu0 %4448
    %4450 = vrot.lane.b32.xlu0 %v3825, 64
    %v4451 = vpop.permute.xlu0 %4450
    %4452 = vrot.lane.b32.xlu0 %v3826, 64
    %v4453 = vpop.permute.xlu0 %4452
    %4454 = vrot.lane.b32.xlu0 %v3827, 64
    %v4455 = vpop.permute.xlu0 %4454
    %4472 = vrot.lane.b32.xlu0 %v4360, 64
    %v4473 = vpop.permute.xlu0 %4472
    %4474 = vrot.lane.b32.xlu0 %v4361, 64
    %v4475 = vpop.permute.xlu0 %4474
    %4476 = vrot.lane.b32.xlu0 %v4362, 64
    %v4477 = vpop.permute.xlu0 %4476
    %4478 = vrot.lane.b32.xlu0 %v4363, 64
    %v4479 = vpop.permute.xlu0 %4478
    %4480 = vrot.lane.b32.xlu0 %v4364, 64
    %v4481 = vpop.permute.xlu0 %4480
    %4482 = vrot.lane.b32.xlu0 %v4365, 64
    %v4483 = vpop.permute.xlu0 %4482
    %4484 = vrot.lane.b32.xlu0 %v4366, 64
    %v4485 = vpop.permute.xlu0 %4484
    %4486 = vrot.lane.b32.xlu0 %v4367, 64
    %v4487 = vpop.permute.xlu0 %4486
    %v4496 = vsel %vm147, %v4377, %v4409
    %v4497 = vsel %vm147, %v4379, %v4411
    %v4498 = vsel %vm147, %v4381, %v4413
    %v4499 = vsel %vm147, %v4383, %v4415
    %v4500 = vsel %vm147, %v4385, %v4417
    %v4501 = vsel %vm147, %v4387, %v4419
    %v4502 = vsel %vm147, %v4389, %v4421
    %v4503 = vsel %vm147, %v4391, %v4423
    %v4504 = vsel %vm63, %v4496, %v4441
    %v4505 = vsel %vm63, %v4497, %v4443
    %v4506 = vsel %vm63, %v4498, %v4445
    %v4507 = vsel %vm63, %v4499, %v4447
    %v4508 = vsel %vm63, %v4500, %v4449
    %v4509 = vsel %vm63, %v4501, %v4451
    %v4510 = vsel %vm63, %v4502, %v4453
    %v4511 = vsel %vm63, %v4503, %v4455
    %v4512 = vsel %vm1899, %v4504, %v4473
    %v4513 = vsel %vm1899, %v4505, %v4475
    %v4514 = vsel %vm1899, %v4506, %v4477
    %v4515 = vsel %vm1899, %v4507, %v4479
    %v4516 = vsel %vm1899, %v4508, %v4481
    %v4517 = vsel %vm1899, %v4509, %v4483
    %v4518 = vsel %vm1899, %v4510, %v4485
    %v4519 = vsel %vm1899, %v4511, %v4487
    %v4520 = vld [vmem:[%s7] sm:$0xf]
    %v4521 = vld [vmem:[%s7 + $0x4] sm:$0xf]
    %v4522 = vld [vmem:[%s7 + $0x8] sm:$0xf]
    %v4523 = vld [vmem:[%s7 + $0xc] sm:$0xf]
    %v4524 = vsel %vm1908, %v4512, 0.0
    %4525 = vadd.xlane.f32.xlu0 %v4524
    %v4526 = vpop.xlane.xlu0 %4525
    %v4527 = vsel %vm1908, %v4513, 0.0
    %4528 = vadd.xlane.f32.xlu0 %v4527
    %v4529 = vpop.xlane.xlu0 %4528
    %v4530 = vsel %vm1908, %v4514, 0.0
    %4531 = vadd.xlane.f32.xlu0 %v4530
    %v4532 = vpop.xlane.xlu0 %4531
    %v4533 = vsel %vm1908, %v4515, 0.0
    %4534 = vadd.xlane.f32.xlu0 %v4533
    %v4535 = vpop.xlane.xlu0 %4534
    %v4536 = vsel %vm1908, %v4516, 0.0
    %4537 = vadd.xlane.f32.xlu0 %v4536
    %v4538 = vpop.xlane.xlu0 %4537
    %v4539 = vsel %vm1908, %v4517, 0.0
    %4540 = vadd.xlane.f32.xlu0 %v4539
    %v4541 = vpop.xlane.xlu0 %4540
    %v4542 = vsel %vm1908, %v4518, 0.0
    %4543 = vadd.xlane.f32.xlu0 %v4542
    %v4544 = vpop.xlane.xlu0 %4543
    %v4545 = vsel %vm1908, %v4519, 0.0
    %4546 = vadd.xlane.f32.xlu0 %v4545
    %v4547 = vpop.xlane.xlu0 %4546
    %v4548 = vmul.f32 %v4526, %v1921
    %v4549 = vmul.f32 %v4529, %v1921
    %v4550 = vmul.f32 %v4532, %v1921
    %v4551 = vmul.f32 %v4535, %v1921
    %v4552 = vmul.f32 %v4538, %v1921
    %v4553 = vmul.f32 %v4541, %v1921
    %v4554 = vmul.f32 %v4544, %v1921
    %v4555 = vmul.f32 %v4547, %v1921
    %v4556 = vsub.f32 %v4512, %v4548
    %v4557 = vsub.f32 %v4513, %v4549
    %v4558 = vsub.f32 %v4514, %v4550
    %v4559 = vsub.f32 %v4515, %v4551
    %v4560 = vsub.f32 %v4516, %v4552
    %v4561 = vsub.f32 %v4517, %v4553
    %v4562 = vsub.f32 %v4518, %v4554
    %v4563 = vsub.f32 %v4519, %v4555
    %v4564 = vmul.f32 %v4556, %v4556
    %v4565 = vmul.f32 %v4557, %v4557
    %v4566 = vmul.f32 %v4558, %v4558
    %v4567 = vmul.f32 %v4559, %v4559
    %v4568 = vmul.f32 %v4560, %v4560
    %v4569 = vmul.f32 %v4561, %v4561
    %v4570 = vmul.f32 %v4562, %v4562
    %v4571 = vmul.f32 %v4563, %v4563
    %v4572 = vsel %vm1908, %v4564, 0.0
    %4573 = vadd.xlane.f32.xlu0 %v4572
    %v4574 = vpop.xlane.xlu0 %4573
    %v4575 = vsel %vm1908, %v4565, 0.0
    %4576 = vadd.xlane.f32.xlu0 %v4575
    %v4577 = vpop.xlane.xlu0 %4576
    %v4578 = vsel %vm1908, %v4566, 0.0
    %4579 = vadd.xlane.f32.xlu0 %v4578
    %v4580 = vpop.xlane.xlu0 %4579
    %v4581 = vsel %vm1908, %v4567, 0.0
    %4582 = vadd.xlane.f32.xlu0 %v4581
    %v4583 = vpop.xlane.xlu0 %4582
    %v4584 = vsel %vm1908, %v4568, 0.0
    %4585 = vadd.xlane.f32.xlu0 %v4584
    %v4586 = vpop.xlane.xlu0 %4585
    %v4587 = vsel %vm1908, %v4569, 0.0
    %4588 = vadd.xlane.f32.xlu0 %v4587
    %v4589 = vpop.xlane.xlu0 %4588
    %v4590 = vsel %vm1908, %v4570, 0.0
    %4591 = vadd.xlane.f32.xlu0 %v4590
    %v4592 = vpop.xlane.xlu0 %4591
    %v4593 = vsel %vm1908, %v4571, 0.0
    %4594 = vadd.xlane.f32.xlu0 %v4593
    %v4595 = vpop.xlane.xlu0 %4594
    %v4596 = vmul.f32 %v4574, %v1921
    %v4597 = vmul.f32 %v4577, %v1921
    %v4598 = vmul.f32 %v4580, %v1921
    %v4599 = vmul.f32 %v4583, %v1921
    %v4600 = vmul.f32 %v4586, %v1921
    %v4601 = vmul.f32 %v4589, %v1921
    %v4602 = vmul.f32 %v4592, %v1921
    %v4603 = vmul.f32 %v4595, %v1921
    %v4604 = vadd.f32 %v4596, 1e-05
    %v4605 = vadd.f32 %v4597, 1e-05
    %v4606 = vadd.f32 %v4598, 1e-05
    %v4607 = vadd.f32 %v4599, 1e-05
    %v4608 = vadd.f32 %v4600, 1e-05
    %v4609 = vadd.f32 %v4601, 1e-05
    %v4610 = vadd.f32 %v4602, 1e-05
    %v4611 = vadd.f32 %v4603, 1e-05
    %v4612 = vrsqrt.pop %v4604
    %v4613 = vrsqrt.pop %v4605
    %v4614 = vrsqrt.pop %v4606
    %v4615 = vrsqrt.pop %v4607
    %v4616 = vrsqrt.pop %v4608
    %v4617 = vrsqrt.pop %v4609
    %v4618 = vrsqrt.pop %v4610
    %v4619 = vrsqrt.pop %v4611
    %v4620 = vmul.f32 %v4556, %v4612
    %v4621 = vmul.f32 %v4557, %v4613
    %v4622 = vmul.f32 %v4558, %v4614
    %v4623 = vmul.f32 %v4559, %v4615
    %v4624 = vmul.f32 %v4560, %v4616
    %v4625 = vmul.f32 %v4561, %v4617
    %v4626 = vmul.f32 %v4562, %v4618
    %v4627 = vmul.f32 %v4563, %v4619
    %v4628 = vlaneseq
    %v4629 = vshrl.u32 %v4628, 7
    %v4630 = vsub.s32 6, %v4629
    %v4631 = vrot.slane %v46, %v4630
    %v4632 = vmul.f32 %v4620, %v4631
    %v4633 = vmul.f32 %v4621, %v4631
    %v4634 = vmul.f32 %v4622, %v4631
    %v4635 = vmul.f32 %v4623, %v4631
    %v4636 = vmul.f32 %v4624, %v4631
    %v4637 = vmul.f32 %v4625, %v4631
    %v4638 = vmul.f32 %v4626, %v4631
    %v4639 = vmul.f32 %v4627, %v4631
    %v4640 = vlaneseq
    %v4641 = vshrl.u32 %v4640, 7
    %v4642 = vsub.s32 7, %v4641
    %v4643 = vrot.slane %v46, %v4642
    %v4644 = vadd.f32 %v4632, %v4643
    %v4645 = vadd.f32 %v4633, %v4643
    %v4646 = vadd.f32 %v4634, %v4643
    %v4647 = vadd.f32 %v4635, %v4643
    %v4648 = vadd.f32 %v4636, %v4643
    %v4649 = vadd.f32 %v4637, %v4643
    %v4650 = vadd.f32 %v4638, %v4643
    %v4651 = vadd.f32 %v4639, %v4643
    %v4652 = vpack.c.bf16 %v4645, %v4644
    %v4653 = vpack.c.bf16 %v4647, %v4646
    %v4654 = vpack.c.bf16 %v4649, %v4648
    %v4655 = vpack.c.bf16 %v4651, %v4650
    %v4656 = vlaneseq
    %v4657 = vshrl.u32 %v4656, 7
    %v4658 = vsub.s32 5, %v4657
    %v4659 = vrot.slane %v46, %v4658
    %v4664 = vunpack.c.l.b16 %v4520
    %v4665 = vunpack.c.l.b16 %v4521
    %v4666 = vunpack.c.l.b16 %v4522
    %v4667 = vunpack.c.l.b16 %v4523
    %v4668 = vpack.c.b16 %v4665, %v4664
    %v4669 = vpack.c.b16 %v4667, %v4666
    %v4673 = vsel %vm1908, %v4652, 0
    %v4676 = vsel %vm1908, %v4653, 0
    %v4679 = vsel %vm1908, %v4654, 0
    %v4682 = vsel %vm1908, %v4655, 0
    %4684 = vmatprep.subr.bf16.mxu0 0
    %4685 = vmatpush1.bf16.msra.mxu0 0
    %4686 = vmatprep.subr.bf16.mxu0 0
    %4687 = vmatpush1.bf16.msra.mxu0 0
    %4688 = vmatprep.subr.bf16.mxu0 0
    %4689 = vmatpush1.bf16.msra.mxu0 0
    %4690 = vmatprep.subr.bf16.mxu0 0
    %4691 = vmatpush1.bf16.msra.mxu0 0
    %4692 = vmatprep.subr.bf16.mxu0 0
    %4693 = vmatpush1.bf16.msra.mxu0 0
    %4694 = vmatprep.subr.bf16.mxu0 0
    %4695 = vmatpush1.bf16.msra.mxu0 0
    %4696 = vmatprep.subr.bf16.mxu0 0
    %4697 = vmatpush1.bf16.msra.mxu0 %v4669
    %4698 = vmatprep.subr.bf16.mxu0 0
    %4699 = vmatpush1.bf16.msra.mxu0 %v4668
    %4700 = vmatprep.subr.bf16.mxu0 0
    %4701 = vmatpush2.bf16.msra.mxu0 0
    %4702 = vmatprep.subr.bf16.mxu0 0
    %4703 = vmatpush2.bf16.msra.mxu0 0
    %4704 = vmatprep.subr.bf16.mxu0 0
    %4705 = vmatpush2.bf16.msra.mxu0 0
    %4706 = vmatprep.subr.bf16.mxu0 0
    %4707 = vmatpush2.bf16.msra.mxu0 0
    %4708 = vmatprep.subr.bf16.mxu0 0
    %4709 = vmatpush2.bf16.msra.mxu0 0
    %4710 = vmatprep.subr.bf16.mxu0 0
    %4711 = vmatpush2.bf16.msra.mxu0 0
    %4712 = vmatprep.subr.bf16.mxu0 0
    %4713 = vmatpush2.bf16.msra.mxu0 0
    %4714 = vmatprep.subr.bf16.mxu0 0
    %4715 = vmatpush2.bf16.msra.mxu0 0
    %4716 = vmatprep.mubr.bf16.mxu0 0
    %4717 = vmatmul.mubr.bf16.gmra.mxu0 %v4673
    %v4718 = vpop.f32.mrf.mxu0
    %v4719 = vadd.f32 %v4659, %v4718
    %v4720 = vpop.f32.mrf.mxu0
    %v4721 = vpop.f32.mrf.mxu0
    %v4722 = vadd.f32 %v4659, %v4721
    %v4723 = vpop.f32.mrf.mxu0
    %4724 = vmatprep.mubr.bf16.mxu0 0
    %4725 = vmatmul.mubr.bf16.gmra.mxu0 %v4676
    %v4726 = vpop.f32.mrf.mxu0
    %v4727 = vadd.f32 %v4659, %v4726
    %v4728 = vpop.f32.mrf.mxu0
    %v4729 = vpop.f32.mrf.mxu0
    %v4730 = vadd.f32 %v4659, %v4729
    %v4731 = vpop.f32.mrf.mxu0
    %4732 = vmatprep.mubr.bf16.mxu0 0
    %4733 = vmatmul.mubr.bf16.gmra.mxu0 %v4679
    %v4734 = vpop.f32.mrf.mxu0
    %v4735 = vadd.f32 %v4659, %v4734
    %v4736 = vpop.f32.mrf.mxu0
    %v4737 = vpop.f32.mrf.mxu0
    %v4738 = vadd.f32 %v4659, %v4737
    %v4739 = vpop.f32.mrf.mxu0
    %4740 = vmatprep.mubr.bf16.mxu0 0
    %4741 = vmatmul.mubr.bf16.gmra.mxu0 %v4682
    %v4742 = vpop.f32.mrf.mxu0
    %v4743 = vadd.f32 %v4659, %v4742
    %v4744 = vpop.f32.mrf.mxu0
    %v4745 = vpop.f32.mrf.mxu0
    %v4746 = vadd.f32 %v4659, %v4745
    %v4747 = vpop.f32.mrf.mxu0
    %4748 = vdwg.mxu0
    %v4749 = vmax.f32 %v4719, 0.0
    %v4750 = vmax.f32 %v4722, 0.0
    %v4751 = vmax.f32 %v4727, 0.0
    %v4752 = vmax.f32 %v4730, 0.0
    %v4753 = vmax.f32 %v4735, 0.0
    %v4754 = vmax.f32 %v4738, 0.0
    %v4755 = vmax.f32 %v4743, 0.0
    %v4756 = vmax.f32 %v4746, 0.0
    %v4757 = vadd.f32 %v4644, %v4749
    %v4758 = vadd.f32 %v4645, %v4750
    %v4759 = vadd.f32 %v4646, %v4751
    %v4760 = vadd.f32 %v4647, %v4752
    %v4761 = vadd.f32 %v4648, %v4753
    %v4762 = vadd.f32 %v4649, %v4754
    %v4763 = vadd.f32 %v4650, %v4755
    %v4764 = vadd.f32 %v4651, %v4756
    %v4765 = vsel %vm1908, %v4757, 0.0
    %4766 = vadd.xlane.f32.xlu0 %v4765
    %v4767 = vpop.xlane.xlu0 %4766
    %v4768 = vsel %vm1908, %v4758, 0.0
    %4769 = vadd.xlane.f32.xlu0 %v4768
    %v4770 = vpop.xlane.xlu0 %4769
    %v4771 = vsel %vm1908, %v4759, 0.0
    %4772 = vadd.xlane.f32.xlu0 %v4771
    %v4773 = vpop.xlane.xlu0 %4772
    %v4774 = vsel %vm1908, %v4760, 0.0
    %4775 = vadd.xlane.f32.xlu0 %v4774
    %v4776 = vpop.xlane.xlu0 %4775
    %v4777 = vsel %vm1908, %v4761, 0.0
    %4778 = vadd.xlane.f32.xlu0 %v4777
    %v4779 = vpop.xlane.xlu0 %4778
    %v4780 = vsel %vm1908, %v4762, 0.0
    %4781 = vadd.xlane.f32.xlu0 %v4780
    %v4782 = vpop.xlane.xlu0 %4781
    %v4783 = vsel %vm1908, %v4763, 0.0
    %4784 = vadd.xlane.f32.xlu0 %v4783
    %v4785 = vpop.xlane.xlu0 %4784
    %v4786 = vsel %vm1908, %v4764, 0.0
    %4787 = vadd.xlane.f32.xlu0 %v4786
    %v4788 = vpop.xlane.xlu0 %4787
    %v4789 = vmul.f32 %v4767, %v1921
    %v4790 = vmul.f32 %v4770, %v1921
    %v4791 = vmul.f32 %v4773, %v1921
    %v4792 = vmul.f32 %v4776, %v1921
    %v4793 = vmul.f32 %v4779, %v1921
    %v4794 = vmul.f32 %v4782, %v1921
    %v4795 = vmul.f32 %v4785, %v1921
    %v4796 = vmul.f32 %v4788, %v1921
    %v4797 = vsub.f32 %v4757, %v4789
    %v4798 = vsub.f32 %v4758, %v4790
    %v4799 = vsub.f32 %v4759, %v4791
    %v4800 = vsub.f32 %v4760, %v4792
    %v4801 = vsub.f32 %v4761, %v4793
    %v4802 = vsub.f32 %v4762, %v4794
    %v4803 = vsub.f32 %v4763, %v4795
    %v4804 = vsub.f32 %v4764, %v4796
    %v4805 = vmul.f32 %v4797, %v4797
    %v4806 = vmul.f32 %v4798, %v4798
    %v4807 = vmul.f32 %v4799, %v4799
    %v4808 = vmul.f32 %v4800, %v4800
    %v4809 = vmul.f32 %v4801, %v4801
    %v4810 = vmul.f32 %v4802, %v4802
    %v4811 = vmul.f32 %v4803, %v4803
    %v4812 = vmul.f32 %v4804, %v4804
    %v4813 = vsel %vm1908, %v4805, 0.0
    %4814 = vadd.xlane.f32.xlu0 %v4813
    %v4815 = vpop.xlane.xlu0 %4814
    %v4816 = vsel %vm1908, %v4806, 0.0
    %4817 = vadd.xlane.f32.xlu0 %v4816
    %v4818 = vpop.xlane.xlu0 %4817
    %v4819 = vsel %vm1908, %v4807, 0.0
    %4820 = vadd.xlane.f32.xlu0 %v4819
    %v4821 = vpop.xlane.xlu0 %4820
    %v4822 = vsel %vm1908, %v4808, 0.0
    %4823 = vadd.xlane.f32.xlu0 %v4822
    %v4824 = vpop.xlane.xlu0 %4823
    %v4825 = vsel %vm1908, %v4809, 0.0
    %4826 = vadd.xlane.f32.xlu0 %v4825
    %v4827 = vpop.xlane.xlu0 %4826
    %v4828 = vsel %vm1908, %v4810, 0.0
    %4829 = vadd.xlane.f32.xlu0 %v4828
    %v4830 = vpop.xlane.xlu0 %4829
    %v4831 = vsel %vm1908, %v4811, 0.0
    %4832 = vadd.xlane.f32.xlu0 %v4831
    %v4833 = vpop.xlane.xlu0 %4832
    %v4834 = vsel %vm1908, %v4812, 0.0
    %4835 = vadd.xlane.f32.xlu0 %v4834
    %v4836 = vpop.xlane.xlu0 %4835
    %v4837 = vmul.f32 %v4815, %v1921
    %v4838 = vmul.f32 %v4818, %v1921
    %v4839 = vmul.f32 %v4821, %v1921
    %v4840 = vmul.f32 %v4824, %v1921
    %v4841 = vmul.f32 %v4827, %v1921
    %v4842 = vmul.f32 %v4830, %v1921
    %v4843 = vmul.f32 %v4833, %v1921
    %v4844 = vmul.f32 %v4836, %v1921
    %v4845 = vadd.f32 %v4837, 1e-05
    %v4846 = vadd.f32 %v4838, 1e-05
    %v4847 = vadd.f32 %v4839, 1e-05
    %v4848 = vadd.f32 %v4840, 1e-05
    %v4849 = vadd.f32 %v4841, 1e-05
    %v4850 = vadd.f32 %v4842, 1e-05
    %v4851 = vadd.f32 %v4843, 1e-05
    %v4852 = vadd.f32 %v4844, 1e-05
    %v4853 = vrsqrt.pop %v4845
    %v4854 = vrsqrt.pop %v4846
    %v4855 = vrsqrt.pop %v4847
    %v4856 = vrsqrt.pop %v4848
    %v4857 = vrsqrt.pop %v4849
    %v4858 = vrsqrt.pop %v4850
    %v4859 = vrsqrt.pop %v4851
    %v4860 = vrsqrt.pop %v4852
    %v4861 = vmul.f32 %v4797, %v4853
    %v4862 = vmul.f32 %v4798, %v4854
    %v4863 = vmul.f32 %v4799, %v4855
    %v4864 = vmul.f32 %v4800, %v4856
    %v4865 = vmul.f32 %v4801, %v4857
    %v4866 = vmul.f32 %v4802, %v4858
    %v4867 = vmul.f32 %v4803, %v4859
    %v4868 = vmul.f32 %v4804, %v4860
    %v4869 = vlaneseq
    %v4870 = vshrl.u32 %v4869, 7
    %v4871 = vsub.s32 0, %v4870
    %v4872 = vrot.slane %v47, %v4871
    %v4873 = vmul.f32 %v4861, %v4872
    %v4874 = vmul.f32 %v4862, %v4872
    %v4875 = vmul.f32 %v4863, %v4872
    %v4876 = vmul.f32 %v4864, %v4872
    %v4877 = vmul.f32 %v4865, %v4872
    %v4878 = vmul.f32 %v4866, %v4872
    %v4879 = vmul.f32 %v4867, %v4872
    %v4880 = vmul.f32 %v4868, %v4872
    %v4881 = vlaneseq
    %v4882 = vshrl.u32 %v4881, 7
    %v4883 = vsub.s32 1, %v4882
    %v4884 = vrot.slane %v47, %v4883
    %v4885 = vadd.f32 %v4873, %v4884
    %v4886 = vadd.f32 %v4874, %v4884
    %v4887 = vadd.f32 %v4875, %v4884
    %v4888 = vadd.f32 %v4876, %v4884
    %v4889 = vadd.f32 %v4877, %v4884
    %v4890 = vadd.f32 %v4878, %v4884
    %v4891 = vadd.f32 %v4879, %v4884
    %v4892 = vadd.f32 %v4880, %v4884
    %4893 = vst.msk [vmem:[#allocation2] sm:$0xff] %vm1908, %v4885
    %4894 = vst.msk [vmem:[#allocation2 + $0x8] sm:$0xff] %vm1908, %v4886
    %4895 = vst.msk [vmem:[#allocation2 + $0x10] sm:$0xff] %vm1908, %v4887
    %4896 = vst.msk [vmem:[#allocation2 + $0x18] sm:$0xff] %vm1908, %v4888
    %4897 = vst.msk [vmem:[#allocation2 + $0x20] sm:$0xff] %vm1908, %v4889
    %4898 = vst.msk [vmem:[#allocation2 + $0x28] sm:$0xff] %vm1908, %v4890
    %4899 = vst.msk [vmem:[#allocation2 + $0x30] sm:$0xff] %vm1908, %v4891
    %4900 = vst.msk [vmem:[#allocation2 + $0x38] sm:$0xff] %vm1908, %v4892
    // Predicated region
    $region38: #{isab_forward.1} parent=1 // pred_check
      _
    $region39: #{isab_forward.1} parent=1 // pred_check_branch
      %4902 = sbr.rel (0) target = $region41
    $region40: #{isab_forward.1} parent=1 // pred_region
      %s4904 = ssub.s32 1024, 1024
      %4905 = vsyncadd [#allocation3], %s4904
      %s4906 = sshll.u32 [#allocation2], 4
      %s4907 = int_to_ptr.vmem [resolvable:$true] %s4906
      %4912 = dma.vmem_to_hbm [thread:$0]  %s4907, 1024, %s9, [#allocation3], 128, 128, 8
    $region41: #{isab_forward.1} parent=1 // pred_fallthru
      _
    // Predicated region
    $region42: #{isab_forward.1} parent=1 // pred_check
      _
    $region43: #{isab_forward.1} parent=1 // pred_check_branch
      %4914 = sbr.rel (0) target = $region45
    $region44: #{isab_forward.1} parent=1 // pred_region
      %4915 = dma.done [#allocation3], 1024
    $region45: #{isab_forward.1} parent=1 // pred_fallthru
      _
    %4916 = vsyncpa [#allocation3], 1

</llo_original>
